<compile_context>
chip_gen: v7x
topology: tpu7x:2x2x1
jax: 0.10.0
libtpu: 0.0.40
codegen_flags: <defaults>
</compile_context>

<pallas_src>
import functools
import math

import jax
import jax.numpy as jnp
import numpy as np
from jax.experimental import pallas as pl
from jax.experimental.pallas import tpu as pltpu

_NEG_INF = -1e30  # large finite negative (avoids -inf -> NaN risk)


# ---------------------------------------------------------------------------
# Tiled linear (x @ W + b) kernel, bf16 operands, f32 accumulation.
# ---------------------------------------------------------------------------
def _linear_kernel(x_ref, w_ref, b_ref, o_ref):
    acc = jnp.dot(x_ref[...], w_ref[...], preferred_element_type=jnp.float32)
    o_ref[...] = (acc + b_ref[...]).astype(o_ref.dtype)


def _pick_block(total, preferred):
    b = min(preferred, total)
    while total % b:
        b //= 2
    return max(b, 1)


def _linear(x2d, w, b, out_dtype, *, block_m=256):
    """x2d: (M, K) bf16, w: (K, N) bf16, b: (1, N) f32 -> (M, N) out_dtype."""
    M, K = x2d.shape
    N = w.shape[1]
    bm = _pick_block(M, block_m)
    return pl.pallas_call(
        _linear_kernel,
        out_shape=jax.ShapeDtypeStruct((M, N), out_dtype),
        grid=(M // bm,),
        in_specs=[
            pl.BlockSpec((bm, K), lambda i: (i, 0)),   # activations, tiled on M
            pl.BlockSpec((K, N), lambda i: (0, 0)),    # full weight (constant index)
            pl.BlockSpec((1, N), lambda i: (0, 0)),    # bias
        ],
        out_specs=pl.BlockSpec((bm, N), lambda i: (i, 0)),
        compiler_params=pltpu.CompilerParams(
            dimension_semantics=("parallel",),
            vmem_limit_bytes=64 * 1024 * 1024,
        ),
    )(x2d, w, b)


# ---------------------------------------------------------------------------
# Flash-attention kernel (causal, online softmax, per-head grid axis).
# ---------------------------------------------------------------------------
def _flash_kernel(q_ref, k_ref, v_ref, o_ref, m_sc, l_sc, acc_sc, *, scale):
    qi = pl.program_id(2)   # query-tile index
    ki = pl.program_id(3)   # key/value-tile index (reduction axis, innermost)

    @pl.when(ki == 0)
    def _init():
        m_sc[...] = jnp.full(m_sc.shape, _NEG_INF, dtype=jnp.float32)
        l_sc[...] = jnp.zeros(l_sc.shape, dtype=jnp.float32)
        acc_sc[...] = jnp.zeros(acc_sc.shape, dtype=jnp.float32)

    def _process(on_diagonal):
        q = q_ref[0, 0]                                    # (bq, hd) bf16
        k = k_ref[0, 0]                                    # (bk, hd) bf16
        v = v_ref[0, 0]                                    # (bk, hd) bf16
        # QK^T contracting last dims of both operands -> no physical transpose.
        s = jax.lax.dot_general(
            q, k, (((1,), (1,)), ((), ())),
            preferred_element_type=jnp.float32) * scale    # (bq, bk) f32
        if on_diagonal:  # static flag: mask only built on diagonal tiles
            row = jax.lax.broadcasted_iota(jnp.int32, s.shape, 0)
            col = jax.lax.broadcasted_iota(jnp.int32, s.shape, 1)
            s = jnp.where(col <= row, s, _NEG_INF)
        m_prev = m_sc[...]
        m_new = jnp.maximum(m_prev, jnp.max(s, axis=-1, keepdims=True))
        alpha = jnp.exp(m_prev - m_new)
        p = jnp.exp(s - m_new)                             # f32 softmax math
        l_sc[...] = alpha * l_sc[...] + jnp.sum(p, axis=-1, keepdims=True)
        acc_sc[...] = alpha * acc_sc[...] + jnp.dot(
            p.astype(v.dtype), v, preferred_element_type=jnp.float32)
        m_sc[...] = m_new

    @pl.when(ki < qi)        # fully-unmasked tile below the diagonal: no mask
    def _below():
        _process(on_diagonal=False)

    @pl.when(ki == qi)       # diagonal tile: apply causal mask
    def _diag():
        _process(on_diagonal=True)
    # ki > qi: fully masked tile -> skipped entirely (~2x FLOP saving)

    @pl.when(ki == pl.num_programs(3) - 1)
    def _finalize():
        inv_l = pl.reciprocal(l_sc[...], approx=True)      # EUP slot divide
        o_ref[0, 0] = (acc_sc[...] * inv_l).astype(o_ref.dtype)


def _flash_attention(q, k, v, *, block_q=128, block_k=128):
    """q, k, v: (B, H, T, hd) bf16 -> (B, H, T, hd) bf16 (causal attention)."""
    B, H, T, hd = q.shape
    bq = _pick_block(T, block_q)
    bk = _pick_block(T, block_k)
    assert bq == bk, "causal block skipping assumes block_q == block_k"
    scale = 1.0 / math.sqrt(hd)
    kernel = functools.partial(_flash_kernel, scale=scale)
    return pl.pallas_call(
        kernel,
        out_shape=jax.ShapeDtypeStruct((B, H, T, hd), q.dtype),
        grid=(B, H, T // bq, T // bk),
        in_specs=[
            pl.BlockSpec((1, 1, bq, hd), lambda b, h, qi, ki: (b, h, qi, 0)),
            pl.BlockSpec((1, 1, bk, hd), lambda b, h, qi, ki: (b, h, ki, 0)),
            pl.BlockSpec((1, 1, bk, hd), lambda b, h, qi, ki: (b, h, ki, 0)),
        ],
        out_specs=pl.BlockSpec((1, 1, bq, hd), lambda b, h, qi, ki: (b, h, qi, 0)),
        scratch_shapes=[
            pltpu.VMEM((bq, 1), jnp.float32),    # running max
            pltpu.VMEM((bq, 1), jnp.float32),    # running sum
            pltpu.VMEM((bq, hd), jnp.float32),   # output accumulator
        ],
        compiler_params=pltpu.CompilerParams(
            dimension_semantics=("parallel", "parallel", "parallel", "arbitrary"),
            vmem_limit_bytes=64 * 1024 * 1024,
        ),
    )(q, k, v)


# ---------------------------------------------------------------------------
# Full module forward: fused QKV proj -> flash attention -> output proj.
# ---------------------------------------------------------------------------
def causal_self_attention(x, params, n_head, *, block_q=128, block_k=128,
                          block_m=256):
    """x: (B, T, C) f32. params: (wq,bq,wk,bk,wv,bv,wp,bp), weights (C,C) in
    x@W convention, biases (1,C). Returns (B, T, C) in x.dtype."""
    B, T, C = x.shape
    hd = C // n_head
    wq, bq_, wk, bk_, wv, bv_, wp, bp_ = params

    # Fuse QKV weights into a single (C, 3C) matmul; bf16 MXU operands.
    wqkv = jnp.concatenate([wq, wk, wv], axis=1).astype(jnp.bfloat16)
    bqkv = jnp.concatenate([bq_, bk_, bv_], axis=1)            # (1, 3C) f32
    x2d = x.reshape(B * T, C).astype(jnp.bfloat16)

    qkv = _linear(x2d, wqkv, bqkv, jnp.bfloat16, block_m=block_m)  # (B*T, 3C)
    q2d, k2d, v2d = qkv[:, :C], qkv[:, C:2 * C], qkv[:, 2 * C:]

    def to_heads(z):  # (B*T, C) -> (B, H, T, hd)
        return z.reshape(B, T, n_head, hd).transpose(0, 2, 1, 3)

    y = _flash_attention(to_heads(q2d), to_heads(k2d), to_heads(v2d),
                         block_q=block_q, block_k=block_k)      # (B,H,T,hd) bf16
    y2d = y.transpose(0, 2, 1, 3).reshape(B * T, C)             # merge heads

    out = _linear(y2d, wp.astype(jnp.bfloat16), bp_, x.dtype, block_m=block_m)
    return out.reshape(B, T, C)


# ---------------------------------------------------------------------------
# Pure-JAX reference mirroring the PyTorch forward (dropout = identity).
# ---------------------------------------------------------------------------
def _reference(x, params, n_head):
    wq, bq, wk, bk, wv, bv, wp, bp = params
    B, T, C = x.shape
    hd = C // n_head

    def split_heads(z):
        return z.reshape(B, T, n_head, hd).transpose(0, 2, 1, 3)

    q = split_heads(x @ wq + bq)
    k = split_heads(x @ wk + bk)
    v = split_heads(x @ wv + bv)
    att = (q @ jnp.swapaxes(k, -2, -1)) * (1.0 / math.sqrt(hd))
    mask = jnp.tril(jnp.ones((T, T), dtype=bool))
    att = jnp.where(mask[None, None], att, -jnp.inf)
    att = jax.nn.softmax(att, axis=-1)
    y = att @ v
    y = y.transpose(0, 2, 1, 3).reshape(B, T, C)
    return y @ wp + bp


if __name__ == "__main__":
    # Small but tiling-friendly config: n_embd % n_head == 0, head_dim = 128
    # (lane-dense), T a multiple of the 128-row attention tiles.
    B, T, C, n_head = 2, 256, 256, 2

    key = jax.random.PRNGKey(0)
    kx, *kp = jax.random.split(key, 10)
    x = jax.random.normal(kx, (B, T, C), dtype=jnp.float32)

    # Deterministic parameter init (PyTorch Linear-style uniform bound).
    bound = 1.0 / math.sqrt(C)

    def init_linear(kw, kb):
        w = jax.random.uniform(kw, (C, C), jnp.float32, -bound, bound)
        b = jax.random.uniform(kb, (1, C), jnp.float32, -bound, bound)
        return w, b

    wq, bq = init_linear(kp[0], kp[1])
    wk, bk = init_linear(kp[2], kp[3])
    wv, bv = init_linear(kp[4], kp[5])
    wp, bp = init_linear(kp[6], kp[7])
    params = (wq, bq, wk, bk, wv, bv, wp, bp)

    attn_fn = jax.jit(functools.partial(causal_self_attention, n_head=n_head))
    out = jax.block_until_ready(attn_fn(x, params))

    ref = jax.block_until_ready(_reference(x, params, n_head))
    # bf16 MXU operands vs f32 reference -> relaxed tolerance.
    np.testing.assert_allclose(np.asarray(out), np.asarray(ref),
                               rtol=2e-2, atol=2e-2)
    print("KERNEL_OK")
</pallas_src>

<mosaic_0001>
module attributes {stable_mosaic.version = 11 : i64} {
  func.func @_linear_kernel(%arg0: i32, %arg1: memref<256x256xbf16, #tpu.memory_space<vmem>>, %arg2: memref<256x768xbf16, #tpu.memory_space<vmem>>, %arg3: memref<1x768xf32, #tpu.memory_space<vmem>>, %arg4: memref<256x768xbf16, #tpu.memory_space<vmem>>) attributes {dimension_semantics = [#tpu.dimension_semantics<parallel>], iteration_bounds = array<i64: 2>, scalar_prefetch = 0 : i64, scratch_operands = 0 : i64, tpu.core_type = #tpu.core_type<tc>, window_params = [{transform_indices = @transform_0, window_bounds = array<i64: 256, 256>}, {pipeline_mode = #tpu.pipeline_mode<synchronous>, transform_indices = @transform_1, window_bounds = array<i64: 256, 768>}, {pipeline_mode = #tpu.pipeline_mode<synchronous>, transform_indices = @transform_2, window_bounds = array<i64: 1, 768>}, {transform_indices = @transform_3, window_bounds = array<i64: 256, 768>}]} {
    %c0 = arith.constant 0 : index
    %c0_0 = arith.constant 0 : index
    %0 = vector.load %arg1[%c0, %c0_0] : memref<256x256xbf16, #tpu.memory_space<vmem>>, vector<256x256xbf16>
    %c0_1 = arith.constant 0 : index
    %c0_2 = arith.constant 0 : index
    %1 = vector.load %arg2[%c0_1, %c0_2] : memref<256x768xbf16, #tpu.memory_space<vmem>>, vector<256x768xbf16>
    %cst = arith.constant dense<0.000000e+00> : vector<256x768xf32>
    %2 = tpu.matmul %0, %1, %cst {dimension_numbers = #tpu.dot_dimension_numbers<[1], [0], [0], [1], [0, 0, 1, 1], [], []>} : vector<256x256xbf16>, vector<256x768xbf16>, vector<256x768xf32> -> vector<256x768xf32>
    %c0_3 = arith.constant 0 : index
    %c0_4 = arith.constant 0 : index
    %3 = vector.load %arg3[%c0_3, %c0_4] : memref<1x768xf32, #tpu.memory_space<vmem>>, vector<1x768xf32>
    %4 = vector.broadcast %3 : vector<1x768xf32> to vector<256x768xf32>
    %5 = arith.addf %2, %4 : vector<256x768xf32>
    %6 = arith.truncf %5 : vector<256x768xf32> to vector<256x768xbf16>
    %c0_5 = arith.constant 0 : index
    %c0_6 = arith.constant 0 : index
    %7 = vector.load %arg4[%c0_5, %c0_6] : memref<256x768xbf16, #tpu.memory_space<vmem>>, vector<256x768xbf16>
    tpu.vector_store %arg4[%c0_5, %c0_6], %6 {strides = array<i32>} : memref<256x768xbf16, #tpu.memory_space<vmem>>, vector<256x768xbf16>,
    return
  }
  func.func @transform_0(%arg0: i32) -> (i32, i32) {
    %c0_i32 = arith.constant 0 : i32
    %c0_i32_0 = arith.constant 0 : i32
    return %arg0, %c0_i32 : i32, i32
  }
  func.func @transform_1(%arg0: i32) -> (i32, i32) {
    %c0_i32 = arith.constant 0 : i32
    %c0_i32_0 = arith.constant 0 : i32
    %c0_i32_1 = arith.constant 0 : i32
    return %c0_i32, %c0_i32_0 : i32, i32
  }
  func.func @transform_2(%arg0: i32) -> (i32, i32) {
    %c0_i32 = arith.constant 0 : i32
    %c0_i32_0 = arith.constant 0 : i32
    %c0_i32_1 = arith.constant 0 : i32
    return %c0_i32, %c0_i32_0 : i32, i32
  }
  func.func @transform_3(%arg0: i32) -> (i32, i32) {
    %c0_i32 = arith.constant 0 : i32
    %c0_i32_0 = arith.constant 0 : i32
    return %arg0, %c0_i32 : i32, i32
  }
}

module attributes {stable_mosaic.version = 11 : i64} {
  func.func @_flash_kernel(%arg0: i32, %arg1: i32, %arg2: i32, %arg3: i32, %arg4: memref<1x1x128x128xbf16, #tpu.memory_space<vmem>>, %arg5: memref<1x1x128x128xbf16, #tpu.memory_space<vmem>>, %arg6: memref<1x1x128x128xbf16, #tpu.memory_space<vmem>>, %arg7: memref<1x1x128x128xbf16, #tpu.memory_space<vmem>>, %arg8: memref<128x1xf32, #tpu.memory_space<vmem>>, %arg9: memref<128x1xf32, #tpu.memory_space<vmem>>, %arg10: memref<128x128xf32, #tpu.memory_space<vmem>>) attributes {dimension_semantics = [#tpu.dimension_semantics<parallel>, #tpu.dimension_semantics<parallel>, #tpu.dimension_semantics<parallel>, #tpu.dimension_semantics<arbitrary>], iteration_bounds = array<i64: 2, 2, 2, 2>, scalar_prefetch = 0 : i64, scratch_operands = 3 : i64, tpu.core_type = #tpu.core_type<tc>, window_params = [{transform_indices = @transform_0, window_bounds = array<i64: 1, 1, 128, 128>}, {transform_indices = @transform_1, window_bounds = array<i64: 1, 1, 128, 128>}, {transform_indices = @transform_2, window_bounds = array<i64: 1, 1, 128, 128>}, {transform_indices = @transform_3, window_bounds = array<i64: 1, 1, 128, 128>}]} {
    %c0_i32 = arith.constant 0 : i32
    %0 = arith.cmpi eq, %arg3, %c0_i32 : i32
    %1 = arith.extui %0 : i1 to i32
    %c0_i32_0 = arith.constant 0 : i32
    %2 = arith.cmpi ne, %1, %c0_i32_0 : i32
    scf.if %2 {
      %cst = arith.constant -1.000000e+30 : f32
      %12 = vector.broadcast %cst : f32 to vector<128x1xf32>
      %c0 = arith.constant 0 : index
      %c0_4 = arith.constant 0 : index
      %13 = vector.load %arg8[%c0, %c0_4] : memref<128x1xf32, #tpu.memory_space<vmem>>, vector<128x1xf32>
      tpu.vector_store %arg8[%c0, %c0_4], %12 {strides = array<i32>} : memref<128x1xf32, #tpu.memory_space<vmem>>, vector<128x1xf32>,
      %cst_5 = arith.constant 0.000000e+00 : f32
      %14 = vector.broadcast %cst_5 : f32 to vector<128x1xf32>
      %c0_6 = arith.constant 0 : index
      %c0_7 = arith.constant 0 : index
      %15 = vector.load %arg9[%c0_6, %c0_7] : memref<128x1xf32, #tpu.memory_space<vmem>>, vector<128x1xf32>
      tpu.vector_store %arg9[%c0_6, %c0_7], %14 {strides = array<i32>} : memref<128x1xf32, #tpu.memory_space<vmem>>, vector<128x1xf32>,
      %cst_8 = arith.constant 0.000000e+00 : f32
      %16 = vector.broadcast %cst_8 : f32 to vector<128x128xf32>
      %c0_9 = arith.constant 0 : index
      %c0_10 = arith.constant 0 : index
      %17 = vector.load %arg10[%c0_9, %c0_10] : memref<128x128xf32, #tpu.memory_space<vmem>>, vector<128x128xf32>
      tpu.vector_store %arg10[%c0_9, %c0_10], %16 {strides = array<i32>} : memref<128x128xf32, #tpu.memory_space<vmem>>, vector<128x128xf32>,
    } else {
    }
    %3 = arith.cmpi slt, %arg3, %arg2 : i32
    %4 = arith.extui %3 : i1 to i32
    %c0_i32_1 = arith.constant 0 : i32
    %5 = arith.cmpi ne, %4, %c0_i32_1 : i32
    scf.if %5 {
      %c0 = arith.constant 0 : index
      %c0_4 = arith.constant 0 : index
      %c0_5 = arith.constant 0 : index
      %c0_6 = arith.constant 0 : index
      %12 = vector.load %arg4[%c0, %c0_4, %c0_5, %c0_6] : memref<1x1x128x128xbf16, #tpu.memory_space<vmem>>, vector<1x1x128x128xbf16>
      %13 = vector.shape_cast %12 : vector<1x1x128x128xbf16> to vector<128x128xbf16>
      %c0_7 = arith.constant 0 : index
      %c0_8 = arith.constant 0 : index
      %c0_9 = arith.constant 0 : index
      %c0_10 = arith.constant 0 : index
      %14 = vector.load %arg5[%c0_7, %c0_8, %c0_9, %c0_10] : memref<1x1x128x128xbf16, #tpu.memory_space<vmem>>, vector<1x1x128x128xbf16>
      %15 = vector.shape_cast %14 : vector<1x1x128x128xbf16> to vector<128x128xbf16>
      %c0_11 = arith.constant 0 : index
      %c0_12 = arith.constant 0 : index
      %c0_13 = arith.constant 0 : index
      %c0_14 = arith.constant 0 : index
      %16 = vector.load %arg6[%c0_11, %c0_12, %c0_13, %c0_14] : memref<1x1x128x128xbf16, #tpu.memory_space<vmem>>, vector<1x1x128x128xbf16>
      %17 = vector.shape_cast %16 : vector<1x1x128x128xbf16> to vector<128x128xbf16>
      %cst = arith.constant dense<0.000000e+00> : vector<128x128xf32>
      %18 = tpu.matmul %13, %15, %cst {dimension_numbers = #tpu.dot_dimension_numbers<[1], [1], [0], [0], [0, 0, 1, 0], [], []>} : vector<128x128xbf16>, vector<128x128xbf16>, vector<128x128xf32> -> vector<128x128xf32>
      %cst_15 = arith.constant 0.0883883461 : f32
      %19 = vector.broadcast %cst_15 : f32 to vector<128x128xf32>
      %20 = arith.mulf %18, %19 : vector<128x128xf32>
      %c0_16 = arith.constant 0 : index
      %c0_17 = arith.constant 0 : index
      %21 = vector.load %arg8[%c0_16, %c0_17] : memref<128x1xf32, #tpu.memory_space<vmem>>, vector<128x1xf32>
      %cst_18 = arith.constant dense<0xFF800000> : vector<128xf32>
      %22 = vector.multi_reduction <maximumf>, %20, %cst_18 [1] : vector<128x128xf32> to vector<128xf32>
      %23 = vector.shape_cast %22 : vector<128xf32> to vector<128x1xf32>
      %24 = arith.maximumf %21, %23 : vector<128x1xf32>
      %25 = arith.subf %21, %24 : vector<128x1xf32>
      %26 = math.exp %25 : vector<128x1xf32>
      %27 = vector.broadcast %24 : vector<128x1xf32> to vector<128x128xf32>
      %28 = arith.subf %20, %27 : vector<128x128xf32>
      %29 = math.exp %28 : vector<128x128xf32>
      %c0_19 = arith.constant 0 : index
      %c0_20 = arith.constant 0 : index
      %30 = vector.load %arg9[%c0_19, %c0_20] : memref<128x1xf32, #tpu.memory_space<vmem>>, vector<128x1xf32>
      %31 = arith.mulf %26, %30 : vector<128x1xf32>
      %cst_21 = arith.constant dense<0.000000e+00> : vector<128xf32>
      %32 = vector.multi_reduction <add>, %29, %cst_21 [1] : vector<128x128xf32> to vector<128xf32>
      %33 = vector.shape_cast %32 : vector<128xf32> to vector<128x1xf32>
      %34 = arith.addf %31, %33 : vector<128x1xf32>
      %c0_22 = arith.constant 0 : index
      %c0_23 = arith.constant 0 : index
      %35 = vector.load %arg9[%c0_22, %c0_23] : memref<128x1xf32, #tpu.memory_space<vmem>>, vector<128x1xf32>
      tpu.vector_store %arg9[%c0_22, %c0_23], %34 {strides = array<i32>} : memref<128x1xf32, #tpu.memory_space<vmem>>, vector<128x1xf32>,
      %c0_24 = arith.constant 0 : index
      %c0_25 = arith.constant 0 : index
      %36 = vector.load %arg10[%c0_24, %c0_25] : memref<128x128xf32, #tpu.memory_space<vmem>>, vector<128x128xf32>
      %37 = vector.broadcast %26 : vector<128x1xf32> to vector<128x128xf32>
      %38 = arith.mulf %37, %36 : vector<128x128xf32>
      %39 = arith.truncf %29 : vector<128x128xf32> to vector<128x128xbf16>
      %cst_26 = arith.constant dense<0.000000e+00> : vector<128x128xf32>
      %40 = tpu.matmul %39, %17, %cst_26 {dimension_numbers = #tpu.dot_dimension_numbers<[1], [0], [0], [1], [0, 0, 1, 1], [], []>} : vector<128x128xbf16>, vector<128x128xbf16>, vector<128x128xf32> -> vector<128x128xf32>
      %41 = arith.addf %38, %40 : vector<128x128xf32>
      %c0_27 = arith.constant 0 : index
      %c0_28 = arith.constant 0 : index
      %42 = vector.load %arg10[%c0_27, %c0_28] : memref<128x128xf32, #tpu.memory_space<vmem>>, vector<128x128xf32>
      tpu.vector_store %arg10[%c0_27, %c0_28], %41 {strides = array<i32>} : memref<128x128xf32, #tpu.memory_space<vmem>>, vector<128x128xf32>,
      %c0_29 = arith.constant 0 : index
      %c0_30 = arith.constant 0 : index
      %43 = vector.load %arg8[%c0_29, %c0_30] : memref<128x1xf32, #tpu.memory_space<vmem>>, vector<128x1xf32>
      tpu.vector_store %arg8[%c0_29, %c0_30], %24 {strides = array<i32>} : memref<128x1xf32, #tpu.memory_space<vmem>>, vector<128x1xf32>,
    } else {
    }
    %6 = arith.cmpi eq, %arg3, %arg2 : i32
    %7 = arith.extui %6 : i1 to i32
    %c0_i32_2 = arith.constant 0 : i32
    %8 = arith.cmpi ne, %7, %c0_i32_2 : i32
    scf.if %8 {
      %c0 = arith.constant 0 : index
      %c0_4 = arith.constant 0 : index
      %c0_5 = arith.constant 0 : index
      %c0_6 = arith.constant 0 : index
      %12 = vector.load %arg4[%c0, %c0_4, %c0_5, %c0_6] : memref<1x1x128x128xbf16, #tpu.memory_space<vmem>>, vector<1x1x128x128xbf16>
      %13 = vector.shape_cast %12 : vector<1x1x128x128xbf16> to vector<128x128xbf16>
      %c0_7 = arith.constant 0 : index
      %c0_8 = arith.constant 0 : index
      %c0_9 = arith.constant 0 : index
      %c0_10 = arith.constant 0 : index
      %14 = vector.load %arg5[%c0_7, %c0_8, %c0_9, %c0_10] : memref<1x1x128x128xbf16, #tpu.memory_space<vmem>>, vector<1x1x128x128xbf16>
      %15 = vector.shape_cast %14 : vector<1x1x128x128xbf16> to vector<128x128xbf16>
      %c0_11 = arith.constant 0 : index
      %c0_12 = arith.constant 0 : index
      %c0_13 = arith.constant 0 : index
      %c0_14 = arith.constant 0 : index
      %16 = vector.load %arg6[%c0_11, %c0_12, %c0_13, %c0_14] : memref<1x1x128x128xbf16, #tpu.memory_space<vmem>>, vector<1x1x128x128xbf16>
      %17 = vector.shape_cast %16 : vector<1x1x128x128xbf16> to vector<128x128xbf16>
      %cst = arith.constant dense<0.000000e+00> : vector<128x128xf32>
      %18 = tpu.matmul %13, %15, %cst {dimension_numbers = #tpu.dot_dimension_numbers<[1], [1], [0], [0], [0, 0, 1, 0], [], []>} : vector<128x128xbf16>, vector<128x128xbf16>, vector<128x128xf32> -> vector<128x128xf32>
      %cst_15 = arith.constant 0.0883883461 : f32
      %19 = vector.broadcast %cst_15 : f32 to vector<128x128xf32>
      %20 = arith.mulf %18, %19 : vector<128x128xf32>
      %21 = tpu.iota {dimensions = array<i32: 0>} : vector<128x128xi32>
      %22 = tpu.iota {dimensions = array<i32: 1>} : vector<128x128xi32>
      %23 = arith.cmpi sle, %22, %21 : vector<128x128xi32>
      %cst_16 = arith.constant -1.000000e+30 : f32
      %24 = vector.broadcast %cst_16 : f32 to vector<128x128xf32>
      %25 = arith.select %23, %20, %24 : vector<128x128xi1>, vector<128x128xf32>
      %c0_17 = arith.constant 0 : index
      %c0_18 = arith.constant 0 : index
      %26 = vector.load %arg8[%c0_17, %c0_18] : memref<128x1xf32, #tpu.memory_space<vmem>>, vector<128x1xf32>
      %cst_19 = arith.constant dense<0xFF800000> : vector<128xf32>
      %27 = vector.multi_reduction <maximumf>, %25, %cst_19 [1] : vector<128x128xf32> to vector<128xf32>
      %28 = vector.shape_cast %27 : vector<128xf32> to vector<128x1xf32>
      %29 = arith.maximumf %26, %28 : vector<128x1xf32>
      %30 = arith.subf %26, %29 : vector<128x1xf32>
      %31 = math.exp %30 : vector<128x1xf32>
      %32 = vector.broadcast %29 : vector<128x1xf32> to vector<128x128xf32>
      %33 = arith.subf %25, %32 : vector<128x128xf32>
      %34 = math.exp %33 : vector<128x128xf32>
      %c0_20 = arith.constant 0 : index
      %c0_21 = arith.constant 0 : index
      %35 = vector.load %arg9[%c0_20, %c0_21] : memref<128x1xf32, #tpu.memory_space<vmem>>, vector<128x1xf32>
      %36 = arith.mulf %31, %35 : vector<128x1xf32>
      %cst_22 = arith.constant dense<0.000000e+00> : vector<128xf32>
      %37 = vector.multi_reduction <add>, %34, %cst_22 [1] : vector<128x128xf32> to vector<128xf32>
      %38 = vector.shape_cast %37 : vector<128xf32> to vector<128x1xf32>
      %39 = arith.addf %36, %38 : vector<128x1xf32>
      %c0_23 = arith.constant 0 : index
      %c0_24 = arith.constant 0 : index
      %40 = vector.load %arg9[%c0_23, %c0_24] : memref<128x1xf32, #tpu.memory_space<vmem>>, vector<128x1xf32>
      tpu.vector_store %arg9[%c0_23, %c0_24], %39 {strides = array<i32>} : memref<128x1xf32, #tpu.memory_space<vmem>>, vector<128x1xf32>,
      %c0_25 = arith.constant 0 : index
      %c0_26 = arith.constant 0 : index
      %41 = vector.load %arg10[%c0_25, %c0_26] : memref<128x128xf32, #tpu.memory_space<vmem>>, vector<128x128xf32>
      %42 = vector.broadcast %31 : vector<128x1xf32> to vector<128x128xf32>
      %43 = arith.mulf %42, %41 : vector<128x128xf32>
      %44 = arith.truncf %34 : vector<128x128xf32> to vector<128x128xbf16>
      %cst_27 = arith.constant dense<0.000000e+00> : vector<128x128xf32>
      %45 = tpu.matmul %44, %17, %cst_27 {dimension_numbers = #tpu.dot_dimension_numbers<[1], [0], [0], [1], [0, 0, 1, 1], [], []>} : vector<128x128xbf16>, vector<128x128xbf16>, vector<128x128xf32> -> vector<128x128xf32>
      %46 = arith.addf %43, %45 : vector<128x128xf32>
      %c0_28 = arith.constant 0 : index
      %c0_29 = arith.constant 0 : index
      %47 = vector.load %arg10[%c0_28, %c0_29] : memref<128x128xf32, #tpu.memory_space<vmem>>, vector<128x128xf32>
      tpu.vector_store %arg10[%c0_28, %c0_29], %46 {strides = array<i32>} : memref<128x128xf32, #tpu.memory_space<vmem>>, vector<128x128xf32>,
      %c0_30 = arith.constant 0 : index
      %c0_31 = arith.constant 0 : index
      %48 = vector.load %arg8[%c0_30, %c0_31] : memref<128x1xf32, #tpu.memory_space<vmem>>, vector<128x1xf32>
      tpu.vector_store %arg8[%c0_30, %c0_31], %29 {strides = array<i32>} : memref<128x1xf32, #tpu.memory_space<vmem>>, vector<128x1xf32>,
    } else {
    }
    %c1_i32 = arith.constant 1 : i32
    %9 = arith.cmpi eq, %arg3, %c1_i32 : i32
    %10 = arith.extui %9 : i1 to i32
    %c0_i32_3 = arith.constant 0 : i32
    %11 = arith.cmpi ne, %10, %c0_i32_3 : i32
    scf.if %11 {
      %c0 = arith.constant 0 : index
      %c0_4 = arith.constant 0 : index
      %12 = vector.load %arg9[%c0, %c0_4] : memref<128x1xf32, #tpu.memory_space<vmem>>, vector<128x1xf32>
      %13 = tpu.reciprocal %12 {approx = true} : vector<128x1xf32> -> vector<128x1xf32>
      %c0_5 = arith.constant 0 : index
      %c0_6 = arith.constant 0 : index
      %14 = vector.load %arg10[%c0_5, %c0_6] : memref<128x128xf32, #tpu.memory_space<vmem>>, vector<128x128xf32>
      %15 = vector.broadcast %13 : vector<128x1xf32> to vector<128x128xf32>
      %16 = arith.mulf %14, %15 : vector<128x128xf32>
      %17 = arith.truncf %16 : vector<128x128xf32> to vector<128x128xbf16>
      %c0_7 = arith.constant 0 : index
      %c0_8 = arith.constant 0 : index
      %c0_9 = arith.constant 0 : index
      %c0_10 = arith.constant 0 : index
      %18 = vector.load %arg7[%c0_7, %c0_8, %c0_9, %c0_10] : memref<1x1x128x128xbf16, #tpu.memory_space<vmem>>, vector<1x1x128x128xbf16>
      %19 = vector.shape_cast %18 : vector<1x1x128x128xbf16> to vector<128x128xbf16>
      %20 = vector.shape_cast %17 : vector<128x128xbf16> to vector<1x1x128x128xbf16>
      tpu.vector_store %arg7[%c0_7, %c0_8, %c0_9, %c0_10], %20 {strides = array<i32>} : memref<1x1x128x128xbf16, #tpu.memory_space<vmem>>, vector<1x1x128x128xbf16>,
    } else {
    }
    return
  }
  func.func @transform_0(%arg0: i32, %arg1: i32, %arg2: i32, %arg3: i32) -> (i32, i32, i32, i32) {
    %c0_i32 = arith.constant 0 : i32
    %c0_i32_0 = arith.constant 0 : i32
    return %arg0, %arg1, %arg2, %c0_i32 : i32, i32, i32, i32
  }
  func.func @transform_1(%arg0: i32, %arg1: i32, %arg2: i32, %arg3: i32) -> (i32, i32, i32, i32) {
    %c0_i32 = arith.constant 0 : i32
    %c0_i32_0 = arith.constant 0 : i32
    return %arg0, %arg1, %arg3, %c0_i32 : i32, i32, i32, i32
  }
  func.func @transform_2(%arg0: i32, %arg1: i32, %arg2: i32, %arg3: i32) -> (i32, i32, i32, i32) {
    %c0_i32 = arith.constant 0 : i32
    %c0_i32_0 = arith.constant 0 : i32
    return %arg0, %arg1, %arg3, %c0_i32 : i32, i32, i32, i32
  }
  func.func @transform_3(%arg0: i32, %arg1: i32, %arg2: i32, %arg3: i32) -> (i32, i32, i32, i32) {
    %c0_i32 = arith.constant 0 : i32
    %c0_i32_0 = arith.constant 0 : i32
    return %arg0, %arg1, %arg2, %c0_i32 : i32, i32, i32, i32
  }
}

module attributes {stable_mosaic.version = 11 : i64} {
  func.func @_linear_kernel(%arg0: i32, %arg1: memref<256x256xbf16, #tpu.memory_space<vmem>>, %arg2: memref<256x256xbf16, #tpu.memory_space<vmem>>, %arg3: memref<1x256xf32, #tpu.memory_space<vmem>>, %arg4: memref<256x256xf32, #tpu.memory_space<vmem>>) attributes {dimension_semantics = [#tpu.dimension_semantics<parallel>], iteration_bounds = array<i64: 2>, scalar_prefetch = 0 : i64, scratch_operands = 0 : i64, tpu.core_type = #tpu.core_type<tc>, window_params = [{transform_indices = @transform_0, window_bounds = array<i64: 256, 256>}, {pipeline_mode = #tpu.pipeline_mode<synchronous>, transform_indices = @transform_1, window_bounds = array<i64: 256, 256>}, {pipeline_mode = #tpu.pipeline_mode<synchronous>, transform_indices = @transform_2, window_bounds = array<i64: 1, 256>}, {transform_indices = @transform_3, window_bounds = array<i64: 256, 256>}]} {
    %c0 = arith.constant 0 : index
    %c0_0 = arith.constant 0 : index
    %0 = vector.load %arg1[%c0, %c0_0] : memref<256x256xbf16, #tpu.memory_space<vmem>>, vector<256x256xbf16>
    %c0_1 = arith.constant 0 : index
    %c0_2 = arith.constant 0 : index
    %1 = vector.load %arg2[%c0_1, %c0_2] : memref<256x256xbf16, #tpu.memory_space<vmem>>, vector<256x256xbf16>
    %cst = arith.constant dense<0.000000e+00> : vector<256x256xf32>
    %2 = tpu.matmul %0, %1, %cst {dimension_numbers = #tpu.dot_dimension_numbers<[1], [0], [0], [1], [0, 0, 1, 1], [], []>} : vector<256x256xbf16>, vector<256x256xbf16>, vector<256x256xf32> -> vector<256x256xf32>
    %c0_3 = arith.constant 0 : index
    %c0_4 = arith.constant 0 : index
    %3 = vector.load %arg3[%c0_3, %c0_4] : memref<1x256xf32, #tpu.memory_space<vmem>>, vector<1x256xf32>
    %4 = vector.broadcast %3 : vector<1x256xf32> to vector<256x256xf32>
    %5 = arith.addf %2, %4 : vector<256x256xf32>
    %c0_5 = arith.constant 0 : index
    %c0_6 = arith.constant 0 : index
    %6 = vector.load %arg4[%c0_5, %c0_6] : memref<256x256xf32, #tpu.memory_space<vmem>>, vector<256x256xf32>
    tpu.vector_store %arg4[%c0_5, %c0_6], %5 {strides = array<i32>} : memref<256x256xf32, #tpu.memory_space<vmem>>, vector<256x256xf32>,
    return
  }
  func.func @transform_0(%arg0: i32) -> (i32, i32) {
    %c0_i32 = arith.constant 0 : i32
    %c0_i32_0 = arith.constant 0 : i32
    return %arg0, %c0_i32 : i32, i32
  }
  func.func @transform_1(%arg0: i32) -> (i32, i32) {
    %c0_i32 = arith.constant 0 : i32
    %c0_i32_0 = arith.constant 0 : i32
    %c0_i32_1 = arith.constant 0 : i32
    return %c0_i32, %c0_i32_0 : i32, i32
  }
  func.func @transform_2(%arg0: i32) -> (i32, i32) {
    %c0_i32 = arith.constant 0 : i32
    %c0_i32_0 = arith.constant 0 : i32
    %c0_i32_1 = arith.constant 0 : i32
    return %c0_i32, %c0_i32_0 : i32, i32
  }
  func.func @transform_3(%arg0: i32) -> (i32, i32) {
    %c0_i32 = arith.constant 0 : i32
    %c0_i32_0 = arith.constant 0 : i32
    return %arg0, %c0_i32 : i32, i32
  }
}

</mosaic_0001>

<llo_original>
// kernel: causal_self_attention.3
$region0: #{causal_self_attention.3}
  #allocation0 [shape = 'u32[]', space=smem, size = 0x4, offset = 0x4, fixed_abs, tag = 'smem constant byte address 0x4 - core index']
  #allocation1 [shape = 'u32[144,128]{1,0:T(1,128)}', space=vmem, size = 0x12000, scoped, tag = 'internal scratch']
  %s0 = inlined_call_operand.hbm [shape: bf16[512,256], index: 0, kind: input, shape index: {}]
  %s1 = inlined_call_operand.hbm [shape: bf16[256,768], index: 1, kind: input, shape index: {}]
  %s2 = inlined_call_operand.hbm [shape: f32[1,768], index: 2, kind: input, shape index: {}]
  %s3 = inlined_call_operand.hbm [shape: bf16[512,768], index: 3, kind: output, shape index: {}]
  %s4 = sld [smem:[#allocation0]]
  $region57: #{causal_self_attention.3} parent=0
    _
  %s6 = ssub.s32 1, %s4
  %s7 = scalar_select 0, %s6, %s4
  $region1: #{causal_self_attention.3} parent=0
    #allocation2 [shape = 'u8[262144]{0}', space=vmem, size = 0x40000, scoped, tag = 'input window, operand 0']
    #allocation3 [shape = 's32[2]{0}', space=sflag, size = 0x8, scoped, tag = 'scoped memory for causal_self_attention.3']
    #allocation4 [shape = 's32[2]{0}', space=sflag, size = 0x8, scoped, tag = 'scoped memory for causal_self_attention.3']
    #allocation5 [shape = 'u8[393216]{0}', space=vmem, size = 0x60000, scoped, tag = 'input window, operand 1, single buffered']
    #allocation6 [shape = 's32[1]{0}', space=sflag, size = 0x4, scoped, tag = 'scoped memory for causal_self_attention.3']
    #allocation7 [shape = 'u8[3072]{0}', space=vmem, size = 0xc00, scoped, tag = 'input window, operand 2, single buffered']
    #allocation8 [shape = 'u8[786432]{0}', space=vmem, size = 0xc0000, scoped, tag = 'output window, operand 0']
    %8 = vsyncpa [#allocation3], 0
    %s9 = scalar_lea.sflag [#allocation3], 1
    %10 = vsyncpa %s9, 0
    %11 = vsyncpa [#allocation6], 0
    %12 = vsyncpa [#allocation4], 0
    %s13 = scalar_lea.sflag [#allocation4], 1
    %14 = vsyncpa %s13, 0
    loop: start=0, step=1, limit=4
    $region2: #{causal_self_attention.3} parent=1 // loop_pre_header
      _
    $region3: #{causal_self_attention.3} parent=1 // loop_header
      %s16 = sphi 0, %s20
      %p17 = scmp.ge.s32.totalorder %s16, 4
      %s26 = sphi 0, %s28
      %s29 = sphi 0, %s26
      %s30 = sphi 0, %s29
      %s46 = sphi 0, %s30
      %s50 = sphi 0, %s50
      %s52 = sphi 0, %s50
      %s53 = sphi 0, %s52
      %s67 = sphi 0, %s53
      %s71 = sphi 0, %s71
      %s73 = sphi 0, %s71
      %s74 = sphi 0, %s73
      %s88 = sphi 0, %s74
      %s94 = sphi 0, %s96
      %s97 = sphi 0, %s94
      %s98 = sphi 0, %s97
      %s114 = sphi 0, %s98
    $region4: #{causal_self_attention.3} parent=1 // loop_header_branch
      %19 = sbr.rel (%p17) target = $region8
    $region5: #{causal_self_attention.3} parent=1 // loop_body
      %s21 = ssub.s32 %s16, 1
      %s22 = ssub.s32 %s16, 2
      %s23 = sadd.s32 %s16, 1
      %s24 = ssub.s32 %s16, %s23
      %p25 = scmp.eq.s32.totalorder %s24, 0
      %s27 = sadd.s32 %s26, 1
      %s28 = scalar_select %p25, %s26, %s27
      %p31 = pneg %p25
      %p32 = scmp.eq.s32.totalorder %s16, 1
      %p33 = por %p31, %p32
      %p34 = scmp.ne.s32.totalorder %s26, %s29
      %p35 = scmp.eq.s32.totalorder %s16, 0
      %p36 = por %p34, %p35
      %p37 = scmp.ne.s32.totalorder %s26, %s29
      %p38 = scmp.eq.s32.totalorder %s21, 1
      %p39 = por %p37, %p38
      %p40 = scmp.ne.s32.totalorder %s29, %s30
      %p41 = scmp.eq.s32.totalorder %s21, 0
      %p42 = por %p40, %p41
      %p43 = scmp.ne.s32.totalorder %s29, %s30
      %p44 = scmp.eq.s32.totalorder %s22, 1
      %p45 = por %p43, %p44
      %p47 = scmp.ne.s32.totalorder %s30, %s46
      %p48 = scmp.eq.s32.totalorder %s22, 0
      %p49 = por %p47, %p48
      %s51 = sadd.s32 %s50, 1
      %p54 = scmp.eq.s32.totalorder %s16, 1
      %p55 = scmp.ne.s32.totalorder %s50, %s52
      %p56 = scmp.eq.s32.totalorder %s16, 0
      %p57 = por %p55, %p56
      %p58 = scmp.ne.s32.totalorder %s50, %s52
      %p59 = scmp.eq.s32.totalorder %s21, 1
      %p60 = por %p58, %p59
      %p61 = scmp.ne.s32.totalorder %s52, %s53
      %p62 = scmp.eq.s32.totalorder %s21, 0
      %p63 = por %p61, %p62
      %p64 = scmp.ne.s32.totalorder %s52, %s53
      %p65 = scmp.eq.s32.totalorder %s22, 1
      %p66 = por %p64, %p65
      %p68 = scmp.ne.s32.totalorder %s53, %s67
      %p69 = scmp.eq.s32.totalorder %s22, 0
      %p70 = por %p68, %p69
      %s72 = sadd.s32 %s71, 1
      %p75 = scmp.eq.s32.totalorder %s16, 1
      %p76 = scmp.ne.s32.totalorder %s71, %s73
      %p77 = scmp.eq.s32.totalorder %s16, 0
      %p78 = por %p76, %p77
      %p79 = scmp.ne.s32.totalorder %s71, %s73
      %p80 = scmp.eq.s32.totalorder %s21, 1
      %p81 = por %p79, %p80
      %p82 = scmp.ne.s32.totalorder %s73, %s74
      %p83 = scmp.eq.s32.totalorder %s21, 0
      %p84 = por %p82, %p83
      %p85 = scmp.ne.s32.totalorder %s73, %s74
      %p86 = scmp.eq.s32.totalorder %s22, 1
      %p87 = por %p85, %p86
      %p89 = scmp.ne.s32.totalorder %s74, %s88
      %p90 = scmp.eq.s32.totalorder %s22, 0
      %p91 = por %p89, %p90
      %s92 = ssub.s32 %s16, %s23
      %p93 = scmp.eq.s32.totalorder %s92, 0
      %s95 = sadd.s32 %s94, 1
      %s96 = scalar_select %p93, %s94, %s95
      %p99 = pneg %p93
      %p100 = scmp.eq.s32.totalorder %s16, 1
      %p101 = por %p99, %p100
      %p102 = scmp.ne.s32.totalorder %s94, %s97
      %p103 = scmp.eq.s32.totalorder %s16, 0
      %p104 = por %p102, %p103
      %p105 = scmp.ne.s32.totalorder %s94, %s97
      %p106 = scmp.eq.s32.totalorder %s21, 1
      %p107 = por %p105, %p106
      %p108 = scmp.ne.s32.totalorder %s97, %s98
      %p109 = scmp.eq.s32.totalorder %s21, 0
      %p110 = por %p108, %p109
      %p111 = scmp.ne.s32.totalorder %s97, %s98
      %p112 = scmp.eq.s32.totalorder %s22, 1
      %p113 = por %p111, %p112
      %p115 = scmp.ne.s32.totalorder %s98, %s114
      %p116 = scmp.eq.s32.totalorder %s22, 0
      %p117 = por %p115, %p116
      %p118 = scmp.le.s32.totalorder 1, %s16
      %p119 = scmp.lt.s32.totalorder %s16, 3
      %p120 = pnand %p118, %p119
      %p121 = pneg %p120
      // Predicated region
      $region9: #{causal_self_attention.3} parent=5 // pred_check
        _
      $region10: #{causal_self_attention.3} parent=5 // pred_check_branch
        %123 = sbr.rel (%p120) target = $region12
      $region11: #{causal_self_attention.3} parent=5 // pred_region
        %s124 = ssub.s32 %s16, 1
        // Predicated region
        $region13: #{causal_self_attention.3} parent=11 // pred_check
          %p125 = pneg %p63
        $region14: #{causal_self_attention.3} parent=11 // pred_check_branch
          %127 = sbr.rel (%p125) target = $region16
        $region15: #{causal_self_attention.3} parent=11 // pred_region
          %s129 = ssub.s32 12288, 12288
          %130 = vsyncadd [#allocation6], %s129
          %s131 = sshll.u32 [#allocation5], 4
          %s132 = int_to_ptr.vmem [resolvable:$true] %s131
          %137 = dma.hbm_to_vmem [thread:$0]  %s1, 12288, %s132, [#allocation6], 384, 384, 24
        $region16: #{causal_self_attention.3} parent=11 // pred_fallthru
          _
        // Predicated region
        $region17: #{causal_self_attention.3} parent=11 // pred_check
          %p138 = pneg %p84
        $region18: #{causal_self_attention.3} parent=11 // pred_check_branch
          %140 = sbr.rel (%p138) target = $region20
        $region19: #{causal_self_attention.3} parent=11 // pred_region
          %s142 = ssub.s32 96, 96
          %143 = vsyncadd [#allocation6], %s142
          %s145 = sshll.u32 [#allocation7], 4
          %s146 = int_to_ptr.vmem [resolvable:$true] %s145
          %148 = dma.hbm_to_vmem [thread:$0]  %s2, 96, %s146, [#allocation6]
        $region20: #{causal_self_attention.3} parent=11 // pred_fallthru
          _
      $region12: #{causal_self_attention.3} parent=5 // pred_fallthru
        _
      %p149 = scmp.lt.s32.totalorder %s16, 2
      // Predicated region
      $region21: #{causal_self_attention.3} parent=5 // pred_check
        %p150 = pneg %p149
      $region22: #{causal_self_attention.3} parent=5 // pred_check_branch
        %152 = sbr.rel (%p150) target = $region24
      $region23: #{causal_self_attention.3} parent=5 // pred_region
        // Predicated region
        $region25: #{causal_self_attention.3} parent=23 // pred_check
          %p153 = pneg %p36
        $region26: #{causal_self_attention.3} parent=23 // pred_check_branch
          %155 = sbr.rel (%p153) target = $region28
        $region27: #{causal_self_attention.3} parent=23 // pred_region
          %s156 = sand.u32 %s26, 1
          %s157 = scalar_lea.sflag [#allocation3], %s156
          %s158 = sand.u32 %s26, 1
          %s159 = smul.addr %s158, 256
          %s160 = scalar_lea.vmem [#allocation2], %s159
          %s161 = smul.u32 32, %s16
          %s163 = ssub.s32 4096, 4096
          %164 = vsyncadd %s157, %s163
          %s165 = smul.addr %s161, 2
          %s166 = smul.addr %s165, 64
          %s167 = scalar_lea.hbm %s0, %s166
          %s168 = sshll.u32 %s160, 4
          %s169 = int_to_ptr.vmem [resolvable:$true] %s168
          %174 = dma.hbm_to_vmem [thread:$0]  %s167, 4096, %s169, %s157, 128, 128, 8
        $region28: #{causal_self_attention.3} parent=23 // pred_fallthru
          _
      $region24: #{causal_self_attention.3} parent=5 // pred_fallthru
        _
      %p175 = scmp.le.s32.totalorder 1, %s16
      %p176 = scmp.lt.s32.totalorder %s16, 3
      %p177 = pnand %p175, %p176
      %p178 = pneg %p177
      // Predicated region
      $region29: #{causal_self_attention.3} parent=5 // pred_check
        _
      $region30: #{causal_self_attention.3} parent=5 // pred_check_branch
        %180 = sbr.rel (%p177) target = $region32
      $region31: #{causal_self_attention.3} parent=5 // pred_region
        %s181 = ssub.s32 %s16, 1
        %s182 = sand.u32 %s29, 1
        %s183 = scalar_lea.sflag [#allocation3], %s182
        %s184 = sand.u32 %s29, 1
        %s185 = smul.addr %s184, 256
        %s186 = scalar_lea.vmem [#allocation2], %s185
        // Predicated region
        $region33: #{causal_self_attention.3} parent=31 // pred_check
          %p187 = pneg %p42
        $region34: #{causal_self_attention.3} parent=31 // pred_check_branch
          %189 = sbr.rel (%p187) target = $region36
        $region35: #{causal_self_attention.3} parent=31 // pred_region
          %190 = dma.done %s183, 4096
        $region36: #{causal_self_attention.3} parent=31 // pred_fallthru
          _
        // Predicated region
        $region37: #{causal_self_attention.3} parent=31 // pred_check
          %p191 = pneg %p63
        $region38: #{causal_self_attention.3} parent=31 // pred_check_branch
          %193 = sbr.rel (%p191) target = $region40
        $region39: #{causal_self_attention.3} parent=31 // pred_region
          %194 = dma.done [#allocation6], 12288
        $region40: #{causal_self_attention.3} parent=31 // pred_fallthru
          _
        // Predicated region
        $region41: #{causal_self_attention.3} parent=31 // pred_check
          %p195 = pneg %p84
        $region42: #{causal_self_attention.3} parent=31 // pred_check_branch
          %197 = sbr.rel (%p195) target = $region44
        $region43: #{causal_self_attention.3} parent=31 // pred_region
          %198 = dma.done [#allocation6], 96
        $region44: #{causal_self_attention.3} parent=31 // pred_fallthru
          _
        %s199 = sand.u32 %s29, 1
        %s200 = scalar_lea.sflag [#allocation3], %s199
        %s201 = sand.u32 %s29, 1
        %s202 = smul.addr %s201, 256
        %s203 = scalar_lea.vmem [#allocation2], %s202
        %p204 = pneg %p42
        %p205 = pneg %p39
        %p206 = pneg %p63
        %p207 = pneg %p60
        %p208 = pneg %p84
        %p209 = pneg %p81
        %p210 = pneg %p110
        %p211 = pneg %p107
        %s212 = sand.u32 %s97, 1
        %s213 = scalar_lea.sflag [#allocation4], %s212
        %s214 = sand.u32 %s97, 1
        %s215 = smul.addr %s214, 768
        %s216 = scalar_lea.vmem [#allocation8], %s215
        %s217 = smul.u32 32, %s21
        %s218 = smul.u32 32, %s21
        %v219 = vld [vmem:[%s186] sm:$0xff]
        %v220 = vld [vmem:[%s186 + $0x8] sm:$0xff]
        %v221 = vld [vmem:[%s186 + $0x10] sm:$0xff]
        %v222 = vld [vmem:[%s186 + $0x18] sm:$0xff]
        %v223 = vld [vmem:[%s186 + $0x20] sm:$0xff]
        %v224 = vld [vmem:[%s186 + $0x28] sm:$0xff]
        %v225 = vld [vmem:[%s186 + $0x30] sm:$0xff]
        %v226 = vld [vmem:[%s186 + $0x38] sm:$0xff]
        %v227 = vld [vmem:[%s186 + $0x40] sm:$0xff]
        %v228 = vld [vmem:[%s186 + $0x48] sm:$0xff]
        %v229 = vld [vmem:[%s186 + $0x50] sm:$0xff]
        %v230 = vld [vmem:[%s186 + $0x58] sm:$0xff]
        %v231 = vld [vmem:[%s186 + $0x60] sm:$0xff]
        %v232 = vld [vmem:[%s186 + $0x68] sm:$0xff]
        %v233 = vld [vmem:[%s186 + $0x70] sm:$0xff]
        %v234 = vld [vmem:[%s186 + $0x78] sm:$0xff]
        %v235 = vld [vmem:[%s186 + $0x80] sm:$0xff]
        %v236 = vld [vmem:[%s186 + $0x88] sm:$0xff]
        %v237 = vld [vmem:[%s186 + $0x90] sm:$0xff]
        %v238 = vld [vmem:[%s186 + $0x98] sm:$0xff]
        %v239 = vld [vmem:[%s186 + $0xa0] sm:$0xff]
        %v240 = vld [vmem:[%s186 + $0xa8] sm:$0xff]
        %v241 = vld [vmem:[%s186 + $0xb0] sm:$0xff]
        %v242 = vld [vmem:[%s186 + $0xb8] sm:$0xff]
        %v243 = vld [vmem:[%s186 + $0xc0] sm:$0xff]
        %v244 = vld [vmem:[%s186 + $0xc8] sm:$0xff]
        %v245 = vld [vmem:[%s186 + $0xd0] sm:$0xff]
        %v246 = vld [vmem:[%s186 + $0xd8] sm:$0xff]
        %v247 = vld [vmem:[%s186 + $0xe0] sm:$0xff]
        %v248 = vld [vmem:[%s186 + $0xe8] sm:$0xff]
        %v249 = vld [vmem:[%s186 + $0xf0] sm:$0xff]
        %v250 = vld [vmem:[%s186 + $0xf8] sm:$0xff]
        %v251 = vld [vmem:[#allocation5] sm:$0xff]
        %v252 = vld [vmem:[#allocation5 + $0x8] sm:$0xff]
        %v253 = vld [vmem:[#allocation5 + $0x10] sm:$0xff]
        %v254 = vld [vmem:[#allocation5 + $0x18] sm:$0xff]
        %v255 = vld [vmem:[#allocation5 + $0x20] sm:$0xff]
        %v256 = vld [vmem:[#allocation5 + $0x28] sm:$0xff]
        %v257 = vld [vmem:[#allocation5 + $0x30] sm:$0xff]
        %v258 = vld [vmem:[#allocation5 + $0x38] sm:$0xff]
        %v259 = vld [vmem:[#allocation5 + $0x40] sm:$0xff]
        %v260 = vld [vmem:[#allocation5 + $0x48] sm:$0xff]
        %v261 = vld [vmem:[#allocation5 + $0x50] sm:$0xff]
        %v262 = vld [vmem:[#allocation5 + $0x58] sm:$0xff]
        %v263 = vld [vmem:[#allocation5 + $0x60] sm:$0xff]
        %v264 = vld [vmem:[#allocation5 + $0x68] sm:$0xff]
        %v265 = vld [vmem:[#allocation5 + $0x70] sm:$0xff]
        %v266 = vld [vmem:[#allocation5 + $0x78] sm:$0xff]
        %v267 = vld [vmem:[#allocation5 + $0x80] sm:$0xff]
        %v268 = vld [vmem:[#allocation5 + $0x88] sm:$0xff]
        %v269 = vld [vmem:[#allocation5 + $0x90] sm:$0xff]
        %v270 = vld [vmem:[#allocation5 + $0x98] sm:$0xff]
        %v271 = vld [vmem:[#allocation5 + $0xa0] sm:$0xff]
        %v272 = vld [vmem:[#allocation5 + $0xa8] sm:$0xff]
        %v273 = vld [vmem:[#allocation5 + $0xb0] sm:$0xff]
        %v274 = vld [vmem:[#allocation5 + $0xb8] sm:$0xff]
        %v275 = vld [vmem:[#allocation5 + $0xc0] sm:$0xff]
        %v276 = vld [vmem:[#allocation5 + $0xc8] sm:$0xff]
        %v277 = vld [vmem:[#allocation5 + $0xd0] sm:$0xff]
        %v278 = vld [vmem:[#allocation5 + $0xd8] sm:$0xff]
        %v279 = vld [vmem:[#allocation5 + $0xe0] sm:$0xff]
        %v280 = vld [vmem:[#allocation5 + $0xe8] sm:$0xff]
        %v281 = vld [vmem:[#allocation5 + $0xf0] sm:$0xff]
        %v282 = vld [vmem:[#allocation5 + $0xf8] sm:$0xff]
        %v283 = vld [vmem:[#allocation5 + $0x100] sm:$0xff]
        %v284 = vld [vmem:[#allocation5 + $0x108] sm:$0xff]
        %v285 = vld [vmem:[#allocation5 + $0x110] sm:$0xff]
        %v286 = vld [vmem:[#allocation5 + $0x118] sm:$0xff]
        %v287 = vld [vmem:[#allocation5 + $0x120] sm:$0xff]
        %v288 = vld [vmem:[#allocation5 + $0x128] sm:$0xff]
        %v289 = vld [vmem:[#allocation5 + $0x130] sm:$0xff]
        %v290 = vld [vmem:[#allocation5 + $0x138] sm:$0xff]
        %v291 = vld [vmem:[#allocation5 + $0x140] sm:$0xff]
        %v292 = vld [vmem:[#allocation5 + $0x148] sm:$0xff]
        %v293 = vld [vmem:[#allocation5 + $0x150] sm:$0xff]
        %v294 = vld [vmem:[#allocation5 + $0x158] sm:$0xff]
        %v295 = vld [vmem:[#allocation5 + $0x160] sm:$0xff]
        %v296 = vld [vmem:[#allocation5 + $0x168] sm:$0xff]
        %v297 = vld [vmem:[#allocation5 + $0x170] sm:$0xff]
        %v298 = vld [vmem:[#allocation5 + $0x178] sm:$0xff]
        %v299 = vld [vmem:[#allocation5 + $0x180] sm:$0xff]
        %v300 = vld [vmem:[#allocation5 + $0x188] sm:$0xff]
        %v301 = vld [vmem:[#allocation5 + $0x190] sm:$0xff]
        %v302 = vld [vmem:[#allocation5 + $0x198] sm:$0xff]
        %v303 = vld [vmem:[#allocation5 + $0x1a0] sm:$0xff]
        %v304 = vld [vmem:[#allocation5 + $0x1a8] sm:$0xff]
        %v305 = vld [vmem:[#allocation5 + $0x1b0] sm:$0xff]
        %v306 = vld [vmem:[#allocation5 + $0x1b8] sm:$0xff]
        %v307 = vld [vmem:[#allocation5 + $0x1c0] sm:$0xff]
        %v308 = vld [vmem:[#allocation5 + $0x1c8] sm:$0xff]
        %v309 = vld [vmem:[#allocation5 + $0x1d0] sm:$0xff]
        %v310 = vld [vmem:[#allocation5 + $0x1d8] sm:$0xff]
        %v311 = vld [vmem:[#allocation5 + $0x1e0] sm:$0xff]
        %v312 = vld [vmem:[#allocation5 + $0x1e8] sm:$0xff]
        %v313 = vld [vmem:[#allocation5 + $0x1f0] sm:$0xff]
        %v314 = vld [vmem:[#allocation5 + $0x1f8] sm:$0xff]
        %v315 = vld [vmem:[#allocation5 + $0x200] sm:$0xff]
        %v316 = vld [vmem:[#allocation5 + $0x208] sm:$0xff]
        %v317 = vld [vmem:[#allocation5 + $0x210] sm:$0xff]
        %v318 = vld [vmem:[#allocation5 + $0x218] sm:$0xff]
        %v319 = vld [vmem:[#allocation5 + $0x220] sm:$0xff]
        %v320 = vld [vmem:[#allocation5 + $0x228] sm:$0xff]
        %v321 = vld [vmem:[#allocation5 + $0x230] sm:$0xff]
        %v322 = vld [vmem:[#allocation5 + $0x238] sm:$0xff]
        %v323 = vld [vmem:[#allocation5 + $0x240] sm:$0xff]
        %v324 = vld [vmem:[#allocation5 + $0x248] sm:$0xff]
        %v325 = vld [vmem:[#allocation5 + $0x250] sm:$0xff]
        %v326 = vld [vmem:[#allocation5 + $0x258] sm:$0xff]
        %v327 = vld [vmem:[#allocation5 + $0x260] sm:$0xff]
        %v328 = vld [vmem:[#allocation5 + $0x268] sm:$0xff]
        %v329 = vld [vmem:[#allocation5 + $0x270] sm:$0xff]
        %v330 = vld [vmem:[#allocation5 + $0x278] sm:$0xff]
        %v331 = vld [vmem:[#allocation5 + $0x280] sm:$0xff]
        %v332 = vld [vmem:[#allocation5 + $0x288] sm:$0xff]
        %v333 = vld [vmem:[#allocation5 + $0x290] sm:$0xff]
        %v334 = vld [vmem:[#allocation5 + $0x298] sm:$0xff]
        %v335 = vld [vmem:[#allocation5 + $0x2a0] sm:$0xff]
        %v336 = vld [vmem:[#allocation5 + $0x2a8] sm:$0xff]
        %v337 = vld [vmem:[#allocation5 + $0x2b0] sm:$0xff]
        %v338 = vld [vmem:[#allocation5 + $0x2b8] sm:$0xff]
        %v339 = vld [vmem:[#allocation5 + $0x2c0] sm:$0xff]
        %v340 = vld [vmem:[#allocation5 + $0x2c8] sm:$0xff]
        %v341 = vld [vmem:[#allocation5 + $0x2d0] sm:$0xff]
        %v342 = vld [vmem:[#allocation5 + $0x2d8] sm:$0xff]
        %v343 = vld [vmem:[#allocation5 + $0x2e0] sm:$0xff]
        %v344 = vld [vmem:[#allocation5 + $0x2e8] sm:$0xff]
        %v345 = vld [vmem:[#allocation5 + $0x2f0] sm:$0xff]
        %v346 = vld [vmem:[#allocation5 + $0x2f8] sm:$0xff]
        %v347 = vld [vmem:[#allocation7] sm:$0x3f]
        %v349 = vlaneseq
        %v350 = vshrl.u32 %v349, 7
        %v351 = vsub.s32 0, %v350
        %v352 = vrot.slane %v347, %v351
        %v353 = vlaneseq
        %v354 = vshrl.u32 %v353, 7
        %v355 = vsub.s32 1, %v354
        %v356 = vrot.slane %v347, %v355
        %v357 = vlaneseq
        %v358 = vshrl.u32 %v357, 7
        %v359 = vsub.s32 2, %v358
        %v360 = vrot.slane %v347, %v359
        %v361 = vlaneseq
        %v362 = vshrl.u32 %v361, 7
        %v363 = vsub.s32 3, %v362
        %v364 = vrot.slane %v347, %v363
        %v365 = vlaneseq
        %v366 = vshrl.u32 %v365, 7
        %v367 = vsub.s32 4, %v366
        %v368 = vrot.slane %v347, %v367
        %v369 = vlaneseq
        %v370 = vshrl.u32 %v369, 7
        %v371 = vsub.s32 5, %v370
        %v372 = vrot.slane %v347, %v371
        %v411 = vunpack.c.l.b16 %v219
        %v412 = vunpack.c.h.b16 %v219
        %v413 = vunpack.c.l.b16 %v220
        %v414 = vunpack.c.h.b16 %v220
        %v415 = vunpack.c.l.b16 %v221
        %v416 = vunpack.c.h.b16 %v221
        %v417 = vunpack.c.l.b16 %v222
        %v418 = vunpack.c.h.b16 %v222
        %v419 = vunpack.c.l.b16 %v223
        %v420 = vunpack.c.h.b16 %v223
        %v421 = vunpack.c.l.b16 %v224
        %v422 = vunpack.c.h.b16 %v224
        %v423 = vunpack.c.l.b16 %v225
        %v424 = vunpack.c.h.b16 %v225
        %v425 = vunpack.c.l.b16 %v226
        %v426 = vunpack.c.h.b16 %v226
        %v427 = vunpack.c.l.b16 %v227
        %v428 = vunpack.c.h.b16 %v227
        %v429 = vunpack.c.l.b16 %v228
        %v430 = vunpack.c.h.b16 %v228
        %v431 = vunpack.c.l.b16 %v229
        %v432 = vunpack.c.h.b16 %v229
        %v433 = vunpack.c.l.b16 %v230
        %v434 = vunpack.c.h.b16 %v230
        %v435 = vunpack.c.l.b16 %v231
        %v436 = vunpack.c.h.b16 %v231
        %v437 = vunpack.c.l.b16 %v232
        %v438 = vunpack.c.h.b16 %v232
        %v439 = vunpack.c.l.b16 %v233
        %v440 = vunpack.c.h.b16 %v233
        %v441 = vunpack.c.l.b16 %v234
        %v442 = vunpack.c.h.b16 %v234
        %v443 = vunpack.c.l.b16 %v235
        %v444 = vunpack.c.h.b16 %v235
        %v445 = vunpack.c.l.b16 %v236
        %v446 = vunpack.c.h.b16 %v236
        %v447 = vunpack.c.l.b16 %v237
        %v448 = vunpack.c.h.b16 %v237
        %v449 = vunpack.c.l.b16 %v238
        %v450 = vunpack.c.h.b16 %v238
        %v451 = vunpack.c.l.b16 %v239
        %v452 = vunpack.c.h.b16 %v239
        %v453 = vunpack.c.l.b16 %v240
        %v454 = vunpack.c.h.b16 %v240
        %v455 = vunpack.c.l.b16 %v241
        %v456 = vunpack.c.h.b16 %v241
        %v457 = vunpack.c.l.b16 %v242
        %v458 = vunpack.c.h.b16 %v242
        %v459 = vunpack.c.l.b16 %v243
        %v460 = vunpack.c.h.b16 %v243
        %v461 = vunpack.c.l.b16 %v244
        %v462 = vunpack.c.h.b16 %v244
        %v463 = vunpack.c.l.b16 %v245
        %v464 = vunpack.c.h.b16 %v245
        %v465 = vunpack.c.l.b16 %v246
        %v466 = vunpack.c.h.b16 %v246
        %v467 = vunpack.c.l.b16 %v247
        %v468 = vunpack.c.h.b16 %v247
        %v469 = vunpack.c.l.b16 %v248
        %v470 = vunpack.c.h.b16 %v248
        %v471 = vunpack.c.l.b16 %v249
        %v472 = vunpack.c.h.b16 %v249
        %v473 = vunpack.c.l.b16 %v250
        %v474 = vunpack.c.h.b16 %v250
        %v475 = vpack.c.b16 %v413, %v411
        %v476 = vpack.c.b16 %v414, %v412
        %v477 = vpack.c.b16 %v417, %v415
        %v478 = vpack.c.b16 %v418, %v416
        %v479 = vpack.c.b16 %v421, %v419
        %v480 = vpack.c.b16 %v422, %v420
        %v481 = vpack.c.b16 %v425, %v423
        %v482 = vpack.c.b16 %v426, %v424
        %v483 = vpack.c.b16 %v429, %v427
        %v484 = vpack.c.b16 %v430, %v428
        %v485 = vpack.c.b16 %v433, %v431
        %v486 = vpack.c.b16 %v434, %v432
        %v487 = vpack.c.b16 %v437, %v435
        %v488 = vpack.c.b16 %v438, %v436
        %v489 = vpack.c.b16 %v441, %v439
        %v490 = vpack.c.b16 %v442, %v440
        %v491 = vpack.c.b16 %v445, %v443
        %v492 = vpack.c.b16 %v446, %v444
        %v493 = vpack.c.b16 %v449, %v447
        %v494 = vpack.c.b16 %v450, %v448
        %v495 = vpack.c.b16 %v453, %v451
        %v496 = vpack.c.b16 %v454, %v452
        %v497 = vpack.c.b16 %v457, %v455
        %v498 = vpack.c.b16 %v458, %v456
        %v499 = vpack.c.b16 %v461, %v459
        %v500 = vpack.c.b16 %v462, %v460
        %v501 = vpack.c.b16 %v465, %v463
        %v502 = vpack.c.b16 %v466, %v464
        %v503 = vpack.c.b16 %v469, %v467
        %v504 = vpack.c.b16 %v470, %v468
        %v505 = vpack.c.b16 %v473, %v471
        %v506 = vpack.c.b16 %v474, %v472
        %v635 = vunpack.c.l.b16 %v251
        %v636 = vunpack.c.h.b16 %v251
        %v637 = vunpack.c.l.b16 %v252
        %v638 = vunpack.c.h.b16 %v252
        %v639 = vunpack.c.l.b16 %v253
        %v640 = vunpack.c.h.b16 %v253
        %v641 = vunpack.c.l.b16 %v254
        %v642 = vunpack.c.h.b16 %v254
        %v643 = vunpack.c.l.b16 %v255
        %v644 = vunpack.c.h.b16 %v255
        %v645 = vunpack.c.l.b16 %v256
        %v646 = vunpack.c.h.b16 %v256
        %v647 = vunpack.c.l.b16 %v257
        %v648 = vunpack.c.h.b16 %v257
        %v649 = vunpack.c.l.b16 %v258
        %v650 = vunpack.c.h.b16 %v258
        %v651 = vunpack.c.l.b16 %v259
        %v652 = vunpack.c.h.b16 %v259
        %v653 = vunpack.c.l.b16 %v260
        %v654 = vunpack.c.h.b16 %v260
        %v655 = vunpack.c.l.b16 %v261
        %v656 = vunpack.c.h.b16 %v261
        %v657 = vunpack.c.l.b16 %v262
        %v658 = vunpack.c.h.b16 %v262
        %v659 = vunpack.c.l.b16 %v263
        %v660 = vunpack.c.h.b16 %v263
        %v661 = vunpack.c.l.b16 %v264
        %v662 = vunpack.c.h.b16 %v264
        %v663 = vunpack.c.l.b16 %v265
        %v664 = vunpack.c.h.b16 %v265
        %v665 = vunpack.c.l.b16 %v266
        %v666 = vunpack.c.h.b16 %v266
        %v667 = vunpack.c.l.b16 %v267
        %v668 = vunpack.c.h.b16 %v267
        %v669 = vunpack.c.l.b16 %v268
        %v670 = vunpack.c.h.b16 %v268
        %v671 = vunpack.c.l.b16 %v269
        %v672 = vunpack.c.h.b16 %v269
        %v673 = vunpack.c.l.b16 %v270
        %v674 = vunpack.c.h.b16 %v270
        %v675 = vunpack.c.l.b16 %v271
        %v676 = vunpack.c.h.b16 %v271
        %v677 = vunpack.c.l.b16 %v272
        %v678 = vunpack.c.h.b16 %v272
        %v679 = vunpack.c.l.b16 %v273
        %v680 = vunpack.c.h.b16 %v273
        %v681 = vunpack.c.l.b16 %v274
        %v682 = vunpack.c.h.b16 %v274
        %v683 = vunpack.c.l.b16 %v275
        %v684 = vunpack.c.h.b16 %v275
        %v685 = vunpack.c.l.b16 %v276
        %v686 = vunpack.c.h.b16 %v276
        %v687 = vunpack.c.l.b16 %v277
        %v688 = vunpack.c.h.b16 %v277
        %v689 = vunpack.c.l.b16 %v278
        %v690 = vunpack.c.h.b16 %v278
        %v691 = vunpack.c.l.b16 %v279
        %v692 = vunpack.c.h.b16 %v279
        %v693 = vunpack.c.l.b16 %v280
        %v694 = vunpack.c.h.b16 %v280
        %v695 = vunpack.c.l.b16 %v281
        %v696 = vunpack.c.h.b16 %v281
        %v697 = vunpack.c.l.b16 %v282
        %v698 = vunpack.c.h.b16 %v282
        %v699 = vunpack.c.l.b16 %v283
        %v700 = vunpack.c.h.b16 %v283
        %v701 = vunpack.c.l.b16 %v284
        %v702 = vunpack.c.h.b16 %v284
        %v703 = vunpack.c.l.b16 %v285
        %v704 = vunpack.c.h.b16 %v285
        %v705 = vunpack.c.l.b16 %v286
        %v706 = vunpack.c.h.b16 %v286
        %v707 = vunpack.c.l.b16 %v287
        %v708 = vunpack.c.h.b16 %v287
        %v709 = vunpack.c.l.b16 %v288
        %v710 = vunpack.c.h.b16 %v288
        %v711 = vunpack.c.l.b16 %v289
        %v712 = vunpack.c.h.b16 %v289
        %v713 = vunpack.c.l.b16 %v290
        %v714 = vunpack.c.h.b16 %v290
        %v715 = vunpack.c.l.b16 %v291
        %v716 = vunpack.c.h.b16 %v291
        %v717 = vunpack.c.l.b16 %v292
        %v718 = vunpack.c.h.b16 %v292
        %v719 = vunpack.c.l.b16 %v293
        %v720 = vunpack.c.h.b16 %v293
        %v721 = vunpack.c.l.b16 %v294
        %v722 = vunpack.c.h.b16 %v294
        %v723 = vunpack.c.l.b16 %v295
        %v724 = vunpack.c.h.b16 %v295
        %v725 = vunpack.c.l.b16 %v296
        %v726 = vunpack.c.h.b16 %v296
        %v727 = vunpack.c.l.b16 %v297
        %v728 = vunpack.c.h.b16 %v297
        %v729 = vunpack.c.l.b16 %v298
        %v730 = vunpack.c.h.b16 %v298
        %v731 = vunpack.c.l.b16 %v299
        %v732 = vunpack.c.h.b16 %v299
        %v733 = vunpack.c.l.b16 %v300
        %v734 = vunpack.c.h.b16 %v300
        %v735 = vunpack.c.l.b16 %v301
        %v736 = vunpack.c.h.b16 %v301
        %v737 = vunpack.c.l.b16 %v302
        %v738 = vunpack.c.h.b16 %v302
        %v739 = vunpack.c.l.b16 %v303
        %v740 = vunpack.c.h.b16 %v303
        %v741 = vunpack.c.l.b16 %v304
        %v742 = vunpack.c.h.b16 %v304
        %v743 = vunpack.c.l.b16 %v305
        %v744 = vunpack.c.h.b16 %v305
        %v745 = vunpack.c.l.b16 %v306
        %v746 = vunpack.c.h.b16 %v306
        %v747 = vunpack.c.l.b16 %v307
        %v748 = vunpack.c.h.b16 %v307
        %v749 = vunpack.c.l.b16 %v308
        %v750 = vunpack.c.h.b16 %v308
        %v751 = vunpack.c.l.b16 %v309
        %v752 = vunpack.c.h.b16 %v309
        %v753 = vunpack.c.l.b16 %v310
        %v754 = vunpack.c.h.b16 %v310
        %v755 = vunpack.c.l.b16 %v311
        %v756 = vunpack.c.h.b16 %v311
        %v757 = vunpack.c.l.b16 %v312
        %v758 = vunpack.c.h.b16 %v312
        %v759 = vunpack.c.l.b16 %v313
        %v760 = vunpack.c.h.b16 %v313
        %v761 = vunpack.c.l.b16 %v314
        %v762 = vunpack.c.h.b16 %v314
        %v763 = vunpack.c.l.b16 %v315
        %v764 = vunpack.c.h.b16 %v315
        %v765 = vunpack.c.l.b16 %v316
        %v766 = vunpack.c.h.b16 %v316
        %v767 = vunpack.c.l.b16 %v317
        %v768 = vunpack.c.h.b16 %v317
        %v769 = vunpack.c.l.b16 %v318
        %v770 = vunpack.c.h.b16 %v318
        %v771 = vunpack.c.l.b16 %v319
        %v772 = vunpack.c.h.b16 %v319
        %v773 = vunpack.c.l.b16 %v320
        %v774 = vunpack.c.h.b16 %v320
        %v775 = vunpack.c.l.b16 %v321
        %v776 = vunpack.c.h.b16 %v321
        %v777 = vunpack.c.l.b16 %v322
        %v778 = vunpack.c.h.b16 %v322
        %v779 = vunpack.c.l.b16 %v323
        %v780 = vunpack.c.h.b16 %v323
        %v781 = vunpack.c.l.b16 %v324
        %v782 = vunpack.c.h.b16 %v324
        %v783 = vunpack.c.l.b16 %v325
        %v784 = vunpack.c.h.b16 %v325
        %v785 = vunpack.c.l.b16 %v326
        %v786 = vunpack.c.h.b16 %v326
        %v787 = vunpack.c.l.b16 %v327
        %v788 = vunpack.c.h.b16 %v327
        %v789 = vunpack.c.l.b16 %v328
        %v790 = vunpack.c.h.b16 %v328
        %v791 = vunpack.c.l.b16 %v329
        %v792 = vunpack.c.h.b16 %v329
        %v793 = vunpack.c.l.b16 %v330
        %v794 = vunpack.c.h.b16 %v330
        %v795 = vunpack.c.l.b16 %v331
        %v796 = vunpack.c.h.b16 %v331
        %v797 = vunpack.c.l.b16 %v332
        %v798 = vunpack.c.h.b16 %v332
        %v799 = vunpack.c.l.b16 %v333
        %v800 = vunpack.c.h.b16 %v333
        %v801 = vunpack.c.l.b16 %v334
        %v802 = vunpack.c.h.b16 %v334
        %v803 = vunpack.c.l.b16 %v335
        %v804 = vunpack.c.h.b16 %v335
        %v805 = vunpack.c.l.b16 %v336
        %v806 = vunpack.c.h.b16 %v336
        %v807 = vunpack.c.l.b16 %v337
        %v808 = vunpack.c.h.b16 %v337
        %v809 = vunpack.c.l.b16 %v338
        %v810 = vunpack.c.h.b16 %v338
        %v811 = vunpack.c.l.b16 %v339
        %v812 = vunpack.c.h.b16 %v339
        %v813 = vunpack.c.l.b16 %v340
        %v814 = vunpack.c.h.b16 %v340
        %v815 = vunpack.c.l.b16 %v341
        %v816 = vunpack.c.h.b16 %v341
        %v817 = vunpack.c.l.b16 %v342
        %v818 = vunpack.c.h.b16 %v342
        %v819 = vunpack.c.l.b16 %v343
        %v820 = vunpack.c.h.b16 %v343
        %v821 = vunpack.c.l.b16 %v344
        %v822 = vunpack.c.h.b16 %v344
        %v823 = vunpack.c.l.b16 %v345
        %v824 = vunpack.c.h.b16 %v345
        %v825 = vunpack.c.l.b16 %v346
        %v826 = vunpack.c.h.b16 %v346
        %v827 = vpack.c.b16 %v641, %v635
        %v828 = vpack.c.b16 %v642, %v636
        %v829 = vpack.c.b16 %v643, %v637
        %v830 = vpack.c.b16 %v644, %v638
        %v831 = vpack.c.b16 %v645, %v639
        %v832 = vpack.c.b16 %v646, %v640
        %v833 = vpack.c.b16 %v653, %v647
        %v834 = vpack.c.b16 %v654, %v648
        %v835 = vpack.c.b16 %v655, %v649
        %v836 = vpack.c.b16 %v656, %v650
        %v837 = vpack.c.b16 %v657, %v651
        %v838 = vpack.c.b16 %v658, %v652
        %v839 = vpack.c.b16 %v665, %v659
        %v840 = vpack.c.b16 %v666, %v660
        %v841 = vpack.c.b16 %v667, %v661
        %v842 = vpack.c.b16 %v668, %v662
        %v843 = vpack.c.b16 %v669, %v663
        %v844 = vpack.c.b16 %v670, %v664
        %v845 = vpack.c.b16 %v677, %v671
        %v846 = vpack.c.b16 %v678, %v672
        %v847 = vpack.c.b16 %v679, %v673
        %v848 = vpack.c.b16 %v680, %v674
        %v849 = vpack.c.b16 %v681, %v675
        %v850 = vpack.c.b16 %v682, %v676
        %v851 = vpack.c.b16 %v689, %v683
        %v852 = vpack.c.b16 %v690, %v684
        %v853 = vpack.c.b16 %v691, %v685
        %v854 = vpack.c.b16 %v692, %v686
        %v855 = vpack.c.b16 %v693, %v687
        %v856 = vpack.c.b16 %v694, %v688
        %v857 = vpack.c.b16 %v701, %v695
        %v858 = vpack.c.b16 %v702, %v696
        %v859 = vpack.c.b16 %v703, %v697
        %v860 = vpack.c.b16 %v704, %v698
        %v861 = vpack.c.b16 %v705, %v699
        %v862 = vpack.c.b16 %v706, %v700
        %v863 = vpack.c.b16 %v713, %v707
        %v864 = vpack.c.b16 %v714, %v708
        %v865 = vpack.c.b16 %v715, %v709
        %v866 = vpack.c.b16 %v716, %v710
        %v867 = vpack.c.b16 %v717, %v711
        %v868 = vpack.c.b16 %v718, %v712
        %v869 = vpack.c.b16 %v725, %v719
        %v870 = vpack.c.b16 %v726, %v720
        %v871 = vpack.c.b16 %v727, %v721
        %v872 = vpack.c.b16 %v728, %v722
        %v873 = vpack.c.b16 %v729, %v723
        %v874 = vpack.c.b16 %v730, %v724
        %v875 = vpack.c.b16 %v737, %v731
        %v876 = vpack.c.b16 %v738, %v732
        %v877 = vpack.c.b16 %v739, %v733
        %v878 = vpack.c.b16 %v740, %v734
        %v879 = vpack.c.b16 %v741, %v735
        %v880 = vpack.c.b16 %v742, %v736
        %v881 = vpack.c.b16 %v749, %v743
        %v882 = vpack.c.b16 %v750, %v744
        %v883 = vpack.c.b16 %v751, %v745
        %v884 = vpack.c.b16 %v752, %v746
        %v885 = vpack.c.b16 %v753, %v747
        %v886 = vpack.c.b16 %v754, %v748
        %v887 = vpack.c.b16 %v761, %v755
        %v888 = vpack.c.b16 %v762, %v756
        %v889 = vpack.c.b16 %v763, %v757
        %v890 = vpack.c.b16 %v764, %v758
        %v891 = vpack.c.b16 %v765, %v759
        %v892 = vpack.c.b16 %v766, %v760
        %v893 = vpack.c.b16 %v773, %v767
        %v894 = vpack.c.b16 %v774, %v768
        %v895 = vpack.c.b16 %v775, %v769
        %v896 = vpack.c.b16 %v776, %v770
        %v897 = vpack.c.b16 %v777, %v771
        %v898 = vpack.c.b16 %v778, %v772
        %v899 = vpack.c.b16 %v785, %v779
        %v900 = vpack.c.b16 %v786, %v780
        %v901 = vpack.c.b16 %v787, %v781
        %v902 = vpack.c.b16 %v788, %v782
        %v903 = vpack.c.b16 %v789, %v783
        %v904 = vpack.c.b16 %v790, %v784
        %v905 = vpack.c.b16 %v797, %v791
        %v906 = vpack.c.b16 %v798, %v792
        %v907 = vpack.c.b16 %v799, %v793
        %v908 = vpack.c.b16 %v800, %v794
        %v909 = vpack.c.b16 %v801, %v795
        %v910 = vpack.c.b16 %v802, %v796
        %v911 = vpack.c.b16 %v809, %v803
        %v912 = vpack.c.b16 %v810, %v804
        %v913 = vpack.c.b16 %v811, %v805
        %v914 = vpack.c.b16 %v812, %v806
        %v915 = vpack.c.b16 %v813, %v807
        %v916 = vpack.c.b16 %v814, %v808
        %v917 = vpack.c.b16 %v821, %v815
        %v918 = vpack.c.b16 %v822, %v816
        %v919 = vpack.c.b16 %v823, %v817
        %v920 = vpack.c.b16 %v824, %v818
        %v921 = vpack.c.b16 %v825, %v819
        %v922 = vpack.c.b16 %v826, %v820
        %1019 = vmatprep.subr.bf16.mxu0 %v828
        %1020 = vmatpush1.bf16.msra.mxu0 %v827
        %1021 = vmatprep.subr.bf16.mxu0 %v834
        %1022 = vmatpush1.bf16.msra.mxu0 %v833
        %1023 = vmatprep.subr.bf16.mxu0 %v840
        %1024 = vmatpush1.bf16.msra.mxu0 %v839
        %1025 = vmatprep.subr.bf16.mxu0 %v846
        %1026 = vmatpush1.bf16.msra.mxu0 %v845
        %1027 = vmatprep.subr.bf16.mxu0 %v852
        %1028 = vmatpush1.bf16.msra.mxu0 %v851
        %1029 = vmatprep.subr.bf16.mxu0 %v858
        %1030 = vmatpush1.bf16.msra.mxu0 %v857
        %1031 = vmatprep.subr.bf16.mxu0 %v864
        %1032 = vmatpush1.bf16.msra.mxu0 %v863
        %1033 = vmatprep.subr.bf16.mxu0 %v870
        %1034 = vmatpush1.bf16.msra.mxu0 %v869
        %1035 = vmatprep.subr.bf16.mxu0 %v876
        %1036 = vmatpush1.bf16.msra.mxu0 %v875
        %1037 = vmatprep.subr.bf16.mxu0 %v882
        %1038 = vmatpush1.bf16.msra.mxu0 %v881
        %1039 = vmatprep.subr.bf16.mxu0 %v888
        %1040 = vmatpush1.bf16.msra.mxu0 %v887
        %1041 = vmatprep.subr.bf16.mxu0 %v894
        %1042 = vmatpush1.bf16.msra.mxu0 %v893
        %1043 = vmatprep.subr.bf16.mxu0 %v900
        %1044 = vmatpush1.bf16.msra.mxu0 %v899
        %1045 = vmatprep.subr.bf16.mxu0 %v906
        %1046 = vmatpush1.bf16.msra.mxu0 %v905
        %1047 = vmatprep.subr.bf16.mxu0 %v912
        %1048 = vmatpush1.bf16.msra.mxu0 %v911
        %1049 = vmatprep.subr.bf16.mxu0 %v918
        %1050 = vmatpush1.bf16.msra.mxu0 %v917
        %1051 = vmatprep.mubr.bf16.mxu0 %v476
        %1052 = vmatmul.mubr.bf16.gmra.mrb[0].mxu0 %v475
        %v1053 = vpop.f32.mrb[0].mxu0
        %v1054 = vadd.f32 %v352, %v1053
        %v1055 = vpop.f32.mrb[0].mxu0
        %v1056 = vadd.f32 %v356, %v1055
        %v1057 = vpop.f32.mrb[0].mxu0
        %v1058 = vadd.f32 %v352, %v1057
        %v1059 = vpop.f32.mrb[0].mxu0
        %v1060 = vadd.f32 %v356, %v1059
        %1061 = vmatprep.mubr.bf16.mxu0 %v478
        %1062 = vmatmul.mubr.bf16.gmra.mrb[0].mxu0 %v477
        %v1063 = vpop.f32.mrb[0].mxu0
        %v1064 = vadd.f32 %v352, %v1063
        %v1065 = vpop.f32.mrb[0].mxu0
        %v1066 = vadd.f32 %v356, %v1065
        %v1067 = vpop.f32.mrb[0].mxu0
        %v1068 = vadd.f32 %v352, %v1067
        %v1069 = vpop.f32.mrb[0].mxu0
        %v1070 = vadd.f32 %v356, %v1069
        %1071 = vmatprep.mubr.bf16.mxu0 %v480
        %1072 = vmatmul.mubr.bf16.gmra.mrb[0].mxu0 %v479
        %v1073 = vpop.f32.mrb[0].mxu0
        %v1074 = vadd.f32 %v352, %v1073
        %v1075 = vpop.f32.mrb[0].mxu0
        %v1076 = vadd.f32 %v356, %v1075
        %v1077 = vpop.f32.mrb[0].mxu0
        %v1078 = vadd.f32 %v352, %v1077
        %v1079 = vpop.f32.mrb[0].mxu0
        %v1080 = vadd.f32 %v356, %v1079
        %1081 = vmatprep.mubr.bf16.mxu0 %v482
        %1082 = vmatmul.mubr.bf16.gmra.mrb[0].mxu0 %v481
        %v1083 = vpop.f32.mrb[0].mxu0
        %v1084 = vadd.f32 %v352, %v1083
        %v1085 = vpop.f32.mrb[0].mxu0
        %v1086 = vadd.f32 %v356, %v1085
        %v1087 = vpop.f32.mrb[0].mxu0
        %v1088 = vadd.f32 %v352, %v1087
        %v1089 = vpop.f32.mrb[0].mxu0
        %v1090 = vadd.f32 %v356, %v1089
        %1091 = vmatprep.mubr.bf16.mxu0 %v484
        %1092 = vmatmul.mubr.bf16.gmra.mrb[0].mxu0 %v483
        %v1093 = vpop.f32.mrb[0].mxu0
        %v1094 = vadd.f32 %v352, %v1093
        %v1095 = vpop.f32.mrb[0].mxu0
        %v1096 = vadd.f32 %v356, %v1095
        %v1097 = vpop.f32.mrb[0].mxu0
        %v1098 = vadd.f32 %v352, %v1097
        %v1099 = vpop.f32.mrb[0].mxu0
        %v1100 = vadd.f32 %v356, %v1099
        %1101 = vmatprep.mubr.bf16.mxu0 %v486
        %1102 = vmatmul.mubr.bf16.gmra.mrb[0].mxu0 %v485
        %v1103 = vpop.f32.mrb[0].mxu0
        %v1104 = vadd.f32 %v352, %v1103
        %v1105 = vpop.f32.mrb[0].mxu0
        %v1106 = vadd.f32 %v356, %v1105
        %v1107 = vpop.f32.mrb[0].mxu0
        %v1108 = vadd.f32 %v352, %v1107
        %v1109 = vpop.f32.mrb[0].mxu0
        %v1110 = vadd.f32 %v356, %v1109
        %1111 = vmatprep.mubr.bf16.mxu0 %v488
        %1112 = vmatmul.mubr.bf16.gmra.mrb[0].mxu0 %v487
        %v1113 = vpop.f32.mrb[0].mxu0
        %v1114 = vadd.f32 %v352, %v1113
        %v1115 = vpop.f32.mrb[0].mxu0
        %v1116 = vadd.f32 %v356, %v1115
        %v1117 = vpop.f32.mrb[0].mxu0
        %v1118 = vadd.f32 %v352, %v1117
        %v1119 = vpop.f32.mrb[0].mxu0
        %v1120 = vadd.f32 %v356, %v1119
        %1121 = vmatprep.mubr.bf16.mxu0 %v490
        %1122 = vmatmul.mubr.bf16.gmra.mrb[0].mxu0 %v489
        %v1123 = vpop.f32.mrb[0].mxu0
        %v1124 = vadd.f32 %v352, %v1123
        %v1125 = vpop.f32.mrb[0].mxu0
        %v1126 = vadd.f32 %v356, %v1125
        %v1127 = vpop.f32.mrb[0].mxu0
        %v1128 = vadd.f32 %v352, %v1127
        %v1129 = vpop.f32.mrb[0].mxu0
        %v1130 = vadd.f32 %v356, %v1129
        %1131 = vmatprep.mubr.bf16.mxu0 %v492
        %1132 = vmatmul.mubr.bf16.gmra.mrb[0].mxu0 %v491
        %v1133 = vpop.f32.mrb[0].mxu0
        %v1134 = vadd.f32 %v352, %v1133
        %v1135 = vpop.f32.mrb[0].mxu0
        %v1136 = vadd.f32 %v356, %v1135
        %v1137 = vpop.f32.mrb[0].mxu0
        %v1138 = vadd.f32 %v352, %v1137
        %v1139 = vpop.f32.mrb[0].mxu0
        %v1140 = vadd.f32 %v356, %v1139
        %1141 = vmatprep.mubr.bf16.mxu0 %v494
        %1142 = vmatmul.mubr.bf16.gmra.mrb[0].mxu0 %v493
        %v1143 = vpop.f32.mrb[0].mxu0
        %v1144 = vadd.f32 %v352, %v1143
        %v1145 = vpop.f32.mrb[0].mxu0
        %v1146 = vadd.f32 %v356, %v1145
        %v1147 = vpop.f32.mrb[0].mxu0
        %v1148 = vadd.f32 %v352, %v1147
        %v1149 = vpop.f32.mrb[0].mxu0
        %v1150 = vadd.f32 %v356, %v1149
        %1151 = vmatprep.mubr.bf16.mxu0 %v496
        %1152 = vmatmul.mubr.bf16.gmra.mrb[0].mxu0 %v495
        %v1153 = vpop.f32.mrb[0].mxu0
        %v1154 = vadd.f32 %v352, %v1153
        %v1155 = vpop.f32.mrb[0].mxu0
        %v1156 = vadd.f32 %v356, %v1155
        %v1157 = vpop.f32.mrb[0].mxu0
        %v1158 = vadd.f32 %v352, %v1157
        %v1159 = vpop.f32.mrb[0].mxu0
        %v1160 = vadd.f32 %v356, %v1159
        %1161 = vmatprep.mubr.bf16.mxu0 %v498
        %1162 = vmatmul.mubr.bf16.gmra.mrb[0].mxu0 %v497
        %v1163 = vpop.f32.mrb[0].mxu0
        %v1164 = vadd.f32 %v352, %v1163
        %v1165 = vpop.f32.mrb[0].mxu0
        %v1166 = vadd.f32 %v356, %v1165
        %v1167 = vpop.f32.mrb[0].mxu0
        %v1168 = vadd.f32 %v352, %v1167
        %v1169 = vpop.f32.mrb[0].mxu0
        %v1170 = vadd.f32 %v356, %v1169
        %1171 = vmatprep.mubr.bf16.mxu0 %v500
        %1172 = vmatmul.mubr.bf16.gmra.mrb[0].mxu0 %v499
        %v1173 = vpop.f32.mrb[0].mxu0
        %v1174 = vadd.f32 %v352, %v1173
        %v1175 = vpop.f32.mrb[0].mxu0
        %v1176 = vadd.f32 %v356, %v1175
        %v1177 = vpop.f32.mrb[0].mxu0
        %v1178 = vadd.f32 %v352, %v1177
        %v1179 = vpop.f32.mrb[0].mxu0
        %v1180 = vadd.f32 %v356, %v1179
        %1181 = vmatprep.mubr.bf16.mxu0 %v502
        %1182 = vmatmul.mubr.bf16.gmra.mrb[0].mxu0 %v501
        %v1183 = vpop.f32.mrb[0].mxu0
        %v1184 = vadd.f32 %v352, %v1183
        %v1185 = vpop.f32.mrb[0].mxu0
        %v1186 = vadd.f32 %v356, %v1185
        %v1187 = vpop.f32.mrb[0].mxu0
        %v1188 = vadd.f32 %v352, %v1187
        %v1189 = vpop.f32.mrb[0].mxu0
        %v1190 = vadd.f32 %v356, %v1189
        %1191 = vmatprep.mubr.bf16.mxu0 %v504
        %1192 = vmatmul.mubr.bf16.gmra.mrb[0].mxu0 %v503
        %v1193 = vpop.f32.mrb[0].mxu0
        %v1194 = vadd.f32 %v352, %v1193
        %v1195 = vpop.f32.mrb[0].mxu0
        %v1196 = vadd.f32 %v356, %v1195
        %v1197 = vpop.f32.mrb[0].mxu0
        %v1198 = vadd.f32 %v352, %v1197
        %v1199 = vpop.f32.mrb[0].mxu0
        %v1200 = vadd.f32 %v356, %v1199
        %1201 = vmatprep.mubr.bf16.mxu0 %v506
        %1202 = vmatmul.mubr.bf16.gmra.mrb[0].mxu0 %v505
        %v1203 = vpop.f32.mrb[0].mxu0
        %v1204 = vadd.f32 %v352, %v1203
        %v1205 = vpop.f32.mrb[0].mxu0
        %v1206 = vadd.f32 %v356, %v1205
        %v1207 = vpop.f32.mrb[0].mxu0
        %v1208 = vadd.f32 %v352, %v1207
        %v1209 = vpop.f32.mrb[0].mxu0
        %v1210 = vadd.f32 %v356, %v1209
        %1211 = vdwg.mxu0
        %1212 = vmatprep.subr.bf16.mxu0 %v830
        %1213 = vmatpush1.bf16.msra.mxu0 %v829
        %1214 = vmatprep.subr.bf16.mxu0 %v836
        %1215 = vmatpush1.bf16.msra.mxu0 %v835
        %1216 = vmatprep.subr.bf16.mxu0 %v842
        %1217 = vmatpush1.bf16.msra.mxu0 %v841
        %1218 = vmatprep.subr.bf16.mxu0 %v848
        %1219 = vmatpush1.bf16.msra.mxu0 %v847
        %1220 = vmatprep.subr.bf16.mxu0 %v854
        %1221 = vmatpush1.bf16.msra.mxu0 %v853
        %1222 = vmatprep.subr.bf16.mxu0 %v860
        %1223 = vmatpush1.bf16.msra.mxu0 %v859
        %1224 = vmatprep.subr.bf16.mxu0 %v866
        %1225 = vmatpush1.bf16.msra.mxu0 %v865
        %1226 = vmatprep.subr.bf16.mxu0 %v872
        %1227 = vmatpush1.bf16.msra.mxu0 %v871
        %1228 = vmatprep.subr.bf16.mxu0 %v878
        %1229 = vmatpush1.bf16.msra.mxu0 %v877
        %1230 = vmatprep.subr.bf16.mxu0 %v884
        %1231 = vmatpush1.bf16.msra.mxu0 %v883
        %1232 = vmatprep.subr.bf16.mxu0 %v890
        %1233 = vmatpush1.bf16.msra.mxu0 %v889
        %1234 = vmatprep.subr.bf16.mxu0 %v896
        %1235 = vmatpush1.bf16.msra.mxu0 %v895
        %1236 = vmatprep.subr.bf16.mxu0 %v902
        %1237 = vmatpush1.bf16.msra.mxu0 %v901
        %1238 = vmatprep.subr.bf16.mxu0 %v908
        %1239 = vmatpush1.bf16.msra.mxu0 %v907
        %1240 = vmatprep.subr.bf16.mxu0 %v914
        %1241 = vmatpush1.bf16.msra.mxu0 %v913
        %1242 = vmatprep.subr.bf16.mxu0 %v920
        %1243 = vmatpush1.bf16.msra.mxu0 %v919
        %1244 = vmatprep.mubr.bf16.mxu0 %v476
        %1245 = vmatmul.mubr.bf16.gmra.mrb[0].mxu0 %v475
        %v1246 = vpop.f32.mrb[0].mxu0
        %v1247 = vadd.f32 %v360, %v1246
        %v1248 = vpop.f32.mrb[0].mxu0
        %v1249 = vadd.f32 %v364, %v1248
        %v1250 = vpop.f32.mrb[0].mxu0
        %v1251 = vadd.f32 %v360, %v1250
        %v1252 = vpop.f32.mrb[0].mxu0
        %v1253 = vadd.f32 %v364, %v1252
        %1254 = vmatprep.mubr.bf16.mxu0 %v478
        %1255 = vmatmul.mubr.bf16.gmra.mrb[0].mxu0 %v477
        %v1256 = vpop.f32.mrb[0].mxu0
        %v1257 = vadd.f32 %v360, %v1256
        %v1258 = vpop.f32.mrb[0].mxu0
        %v1259 = vadd.f32 %v364, %v1258
        %v1260 = vpop.f32.mrb[0].mxu0
        %v1261 = vadd.f32 %v360, %v1260
        %v1262 = vpop.f32.mrb[0].mxu0
        %v1263 = vadd.f32 %v364, %v1262
        %1264 = vmatprep.mubr.bf16.mxu0 %v480
        %1265 = vmatmul.mubr.bf16.gmra.mrb[0].mxu0 %v479
        %v1266 = vpop.f32.mrb[0].mxu0
        %v1267 = vadd.f32 %v360, %v1266
        %v1268 = vpop.f32.mrb[0].mxu0
        %v1269 = vadd.f32 %v364, %v1268
        %v1270 = vpop.f32.mrb[0].mxu0
        %v1271 = vadd.f32 %v360, %v1270
        %v1272 = vpop.f32.mrb[0].mxu0
        %v1273 = vadd.f32 %v364, %v1272
        %1274 = vmatprep.mubr.bf16.mxu0 %v482
        %1275 = vmatmul.mubr.bf16.gmra.mrb[0].mxu0 %v481
        %v1276 = vpop.f32.mrb[0].mxu0
        %v1277 = vadd.f32 %v360, %v1276
        %v1278 = vpop.f32.mrb[0].mxu0
        %v1279 = vadd.f32 %v364, %v1278
        %v1280 = vpop.f32.mrb[0].mxu0
        %v1281 = vadd.f32 %v360, %v1280
        %v1282 = vpop.f32.mrb[0].mxu0
        %v1283 = vadd.f32 %v364, %v1282
        %1284 = vmatprep.mubr.bf16.mxu0 %v484
        %1285 = vmatmul.mubr.bf16.gmra.mrb[0].mxu0 %v483
        %v1286 = vpop.f32.mrb[0].mxu0
        %v1287 = vadd.f32 %v360, %v1286
        %v1288 = vpop.f32.mrb[0].mxu0
        %v1289 = vadd.f32 %v364, %v1288
        %v1290 = vpop.f32.mrb[0].mxu0
        %v1291 = vadd.f32 %v360, %v1290
        %v1292 = vpop.f32.mrb[0].mxu0
        %v1293 = vadd.f32 %v364, %v1292
        %1294 = vmatprep.mubr.bf16.mxu0 %v486
        %1295 = vmatmul.mubr.bf16.gmra.mrb[0].mxu0 %v485
        %v1296 = vpop.f32.mrb[0].mxu0
        %v1297 = vadd.f32 %v360, %v1296
        %v1298 = vpop.f32.mrb[0].mxu0
        %v1299 = vadd.f32 %v364, %v1298
        %v1300 = vpop.f32.mrb[0].mxu0
        %v1301 = vadd.f32 %v360, %v1300
        %v1302 = vpop.f32.mrb[0].mxu0
        %v1303 = vadd.f32 %v364, %v1302
        %1304 = vmatprep.mubr.bf16.mxu0 %v488
        %1305 = vmatmul.mubr.bf16.gmra.mrb[0].mxu0 %v487
        %v1306 = vpop.f32.mrb[0].mxu0
        %v1307 = vadd.f32 %v360, %v1306
        %v1308 = vpop.f32.mrb[0].mxu0
        %v1309 = vadd.f32 %v364, %v1308
        %v1310 = vpop.f32.mrb[0].mxu0
        %v1311 = vadd.f32 %v360, %v1310
        %v1312 = vpop.f32.mrb[0].mxu0
        %v1313 = vadd.f32 %v364, %v1312
        %1314 = vmatprep.mubr.bf16.mxu0 %v490
        %1315 = vmatmul.mubr.bf16.gmra.mrb[0].mxu0 %v489
        %v1316 = vpop.f32.mrb[0].mxu0
        %v1317 = vadd.f32 %v360, %v1316
        %v1318 = vpop.f32.mrb[0].mxu0
        %v1319 = vadd.f32 %v364, %v1318
        %v1320 = vpop.f32.mrb[0].mxu0
        %v1321 = vadd.f32 %v360, %v1320
        %v1322 = vpop.f32.mrb[0].mxu0
        %v1323 = vadd.f32 %v364, %v1322
        %1324 = vmatprep.mubr.bf16.mxu0 %v492
        %1325 = vmatmul.mubr.bf16.gmra.mrb[0].mxu0 %v491
        %v1326 = vpop.f32.mrb[0].mxu0
        %v1327 = vadd.f32 %v360, %v1326
        %v1328 = vpop.f32.mrb[0].mxu0
        %v1329 = vadd.f32 %v364, %v1328
        %v1330 = vpop.f32.mrb[0].mxu0
        %v1331 = vadd.f32 %v360, %v1330
        %v1332 = vpop.f32.mrb[0].mxu0
        %v1333 = vadd.f32 %v364, %v1332
        %1334 = vmatprep.mubr.bf16.mxu0 %v494
        %1335 = vmatmul.mubr.bf16.gmra.mrb[0].mxu0 %v493
        %v1336 = vpop.f32.mrb[0].mxu0
        %v1337 = vadd.f32 %v360, %v1336
        %v1338 = vpop.f32.mrb[0].mxu0
        %v1339 = vadd.f32 %v364, %v1338
        %v1340 = vpop.f32.mrb[0].mxu0
        %v1341 = vadd.f32 %v360, %v1340
        %v1342 = vpop.f32.mrb[0].mxu0
        %v1343 = vadd.f32 %v364, %v1342
        %1344 = vmatprep.mubr.bf16.mxu0 %v496
        %1345 = vmatmul.mubr.bf16.gmra.mrb[0].mxu0 %v495
        %v1346 = vpop.f32.mrb[0].mxu0
        %v1347 = vadd.f32 %v360, %v1346
        %v1348 = vpop.f32.mrb[0].mxu0
        %v1349 = vadd.f32 %v364, %v1348
        %v1350 = vpop.f32.mrb[0].mxu0
        %v1351 = vadd.f32 %v360, %v1350
        %v1352 = vpop.f32.mrb[0].mxu0
        %v1353 = vadd.f32 %v364, %v1352
        %1354 = vmatprep.mubr.bf16.mxu0 %v498
        %1355 = vmatmul.mubr.bf16.gmra.mrb[0].mxu0 %v497
        %v1356 = vpop.f32.mrb[0].mxu0
        %v1357 = vadd.f32 %v360, %v1356
        %v1358 = vpop.f32.mrb[0].mxu0
        %v1359 = vadd.f32 %v364, %v1358
        %v1360 = vpop.f32.mrb[0].mxu0
        %v1361 = vadd.f32 %v360, %v1360
        %v1362 = vpop.f32.mrb[0].mxu0
        %v1363 = vadd.f32 %v364, %v1362
        %1364 = vmatprep.mubr.bf16.mxu0 %v500
        %1365 = vmatmul.mubr.bf16.gmra.mrb[0].mxu0 %v499
        %v1366 = vpop.f32.mrb[0].mxu0
        %v1367 = vadd.f32 %v360, %v1366
        %v1368 = vpop.f32.mrb[0].mxu0
        %v1369 = vadd.f32 %v364, %v1368
        %v1370 = vpop.f32.mrb[0].mxu0
        %v1371 = vadd.f32 %v360, %v1370
        %v1372 = vpop.f32.mrb[0].mxu0
        %v1373 = vadd.f32 %v364, %v1372
        %1374 = vmatprep.mubr.bf16.mxu0 %v502
        %1375 = vmatmul.mubr.bf16.gmra.mrb[0].mxu0 %v501
        %v1376 = vpop.f32.mrb[0].mxu0
        %v1377 = vadd.f32 %v360, %v1376
        %v1378 = vpop.f32.mrb[0].mxu0
        %v1379 = vadd.f32 %v364, %v1378
        %v1380 = vpop.f32.mrb[0].mxu0
        %v1381 = vadd.f32 %v360, %v1380
        %v1382 = vpop.f32.mrb[0].mxu0
        %v1383 = vadd.f32 %v364, %v1382
        %1384 = vmatprep.mubr.bf16.mxu0 %v504
        %1385 = vmatmul.mubr.bf16.gmra.mrb[0].mxu0 %v503
        %v1386 = vpop.f32.mrb[0].mxu0
        %v1387 = vadd.f32 %v360, %v1386
        %v1388 = vpop.f32.mrb[0].mxu0
        %v1389 = vadd.f32 %v364, %v1388
        %v1390 = vpop.f32.mrb[0].mxu0
        %v1391 = vadd.f32 %v360, %v1390
        %v1392 = vpop.f32.mrb[0].mxu0
        %v1393 = vadd.f32 %v364, %v1392
        %1394 = vmatprep.mubr.bf16.mxu0 %v506
        %1395 = vmatmul.mubr.bf16.gmra.mrb[0].mxu0 %v505
        %v1396 = vpop.f32.mrb[0].mxu0
        %v1397 = vadd.f32 %v360, %v1396
        %v1398 = vpop.f32.mrb[0].mxu0
        %v1399 = vadd.f32 %v364, %v1398
        %v1400 = vpop.f32.mrb[0].mxu0
        %v1401 = vadd.f32 %v360, %v1400
        %v1402 = vpop.f32.mrb[0].mxu0
        %v1403 = vadd.f32 %v364, %v1402
        %1404 = vdwg.mxu0
        %1405 = vmatprep.subr.bf16.mxu0 %v832
        %1406 = vmatpush1.bf16.msra.mxu0 %v831
        %1407 = vmatprep.subr.bf16.mxu0 %v838
        %1408 = vmatpush1.bf16.msra.mxu0 %v837
        %1409 = vmatprep.subr.bf16.mxu0 %v844
        %1410 = vmatpush1.bf16.msra.mxu0 %v843
        %1411 = vmatprep.subr.bf16.mxu0 %v850
        %1412 = vmatpush1.bf16.msra.mxu0 %v849
        %1413 = vmatprep.subr.bf16.mxu0 %v856
        %1414 = vmatpush1.bf16.msra.mxu0 %v855
        %1415 = vmatprep.subr.bf16.mxu0 %v862
        %1416 = vmatpush1.bf16.msra.mxu0 %v861
        %1417 = vmatprep.subr.bf16.mxu0 %v868
        %1418 = vmatpush1.bf16.msra.mxu0 %v867
        %1419 = vmatprep.subr.bf16.mxu0 %v874
        %1420 = vmatpush1.bf16.msra.mxu0 %v873
        %1421 = vmatprep.subr.bf16.mxu0 %v880
        %1422 = vmatpush1.bf16.msra.mxu0 %v879
        %1423 = vmatprep.subr.bf16.mxu0 %v886
        %1424 = vmatpush1.bf16.msra.mxu0 %v885
        %1425 = vmatprep.subr.bf16.mxu0 %v892
        %1426 = vmatpush1.bf16.msra.mxu0 %v891
        %1427 = vmatprep.subr.bf16.mxu0 %v898
        %1428 = vmatpush1.bf16.msra.mxu0 %v897
        %1429 = vmatprep.subr.bf16.mxu0 %v904
        %1430 = vmatpush1.bf16.msra.mxu0 %v903
        %1431 = vmatprep.subr.bf16.mxu0 %v910
        %1432 = vmatpush1.bf16.msra.mxu0 %v909
        %1433 = vmatprep.subr.bf16.mxu0 %v916
        %1434 = vmatpush1.bf16.msra.mxu0 %v915
        %1435 = vmatprep.subr.bf16.mxu0 %v922
        %1436 = vmatpush1.bf16.msra.mxu0 %v921
        %1437 = vmatprep.mubr.bf16.mxu0 %v476
        %1438 = vmatmul.mubr.bf16.gmra.mrb[0].mxu0 %v475
        %v1439 = vpop.f32.mrb[0].mxu0
        %v1440 = vadd.f32 %v368, %v1439
        %v1441 = vpop.f32.mrb[0].mxu0
        %v1442 = vadd.f32 %v372, %v1441
        %v1443 = vpop.f32.mrb[0].mxu0
        %v1444 = vadd.f32 %v368, %v1443
        %v1445 = vpop.f32.mrb[0].mxu0
        %v1446 = vadd.f32 %v372, %v1445
        %1447 = vmatprep.mubr.bf16.mxu0 %v478
        %1448 = vmatmul.mubr.bf16.gmra.mrb[0].mxu0 %v477
        %v1449 = vpop.f32.mrb[0].mxu0
        %v1450 = vadd.f32 %v368, %v1449
        %v1451 = vpop.f32.mrb[0].mxu0
        %v1452 = vadd.f32 %v372, %v1451
        %v1453 = vpop.f32.mrb[0].mxu0
        %v1454 = vadd.f32 %v368, %v1453
        %v1455 = vpop.f32.mrb[0].mxu0
        %v1456 = vadd.f32 %v372, %v1455
        %1457 = vmatprep.mubr.bf16.mxu0 %v480
        %1458 = vmatmul.mubr.bf16.gmra.mrb[0].mxu0 %v479
        %v1459 = vpop.f32.mrb[0].mxu0
        %v1460 = vadd.f32 %v368, %v1459
        %v1461 = vpop.f32.mrb[0].mxu0
        %v1462 = vadd.f32 %v372, %v1461
        %v1463 = vpop.f32.mrb[0].mxu0
        %v1464 = vadd.f32 %v368, %v1463
        %v1465 = vpop.f32.mrb[0].mxu0
        %v1466 = vadd.f32 %v372, %v1465
        %1467 = vmatprep.mubr.bf16.mxu0 %v482
        %1468 = vmatmul.mubr.bf16.gmra.mrb[0].mxu0 %v481
        %v1469 = vpop.f32.mrb[0].mxu0
        %v1470 = vadd.f32 %v368, %v1469
        %v1471 = vpop.f32.mrb[0].mxu0
        %v1472 = vadd.f32 %v372, %v1471
        %v1473 = vpop.f32.mrb[0].mxu0
        %v1474 = vadd.f32 %v368, %v1473
        %v1475 = vpop.f32.mrb[0].mxu0
        %v1476 = vadd.f32 %v372, %v1475
        %1477 = vmatprep.mubr.bf16.mxu0 %v484
        %1478 = vmatmul.mubr.bf16.gmra.mrb[0].mxu0 %v483
        %v1479 = vpop.f32.mrb[0].mxu0
        %v1480 = vadd.f32 %v368, %v1479
        %v1481 = vpop.f32.mrb[0].mxu0
        %v1482 = vadd.f32 %v372, %v1481
        %v1483 = vpop.f32.mrb[0].mxu0
        %v1484 = vadd.f32 %v368, %v1483
        %v1485 = vpop.f32.mrb[0].mxu0
        %v1486 = vadd.f32 %v372, %v1485
        %1487 = vmatprep.mubr.bf16.mxu0 %v486
        %1488 = vmatmul.mubr.bf16.gmra.mrb[0].mxu0 %v485
        %v1489 = vpop.f32.mrb[0].mxu0
        %v1490 = vadd.f32 %v368, %v1489
        %v1491 = vpop.f32.mrb[0].mxu0
        %v1492 = vadd.f32 %v372, %v1491
        %v1493 = vpop.f32.mrb[0].mxu0
        %v1494 = vadd.f32 %v368, %v1493
        %v1495 = vpop.f32.mrb[0].mxu0
        %v1496 = vadd.f32 %v372, %v1495
        %1497 = vmatprep.mubr.bf16.mxu0 %v488
        %1498 = vmatmul.mubr.bf16.gmra.mrb[0].mxu0 %v487
        %v1499 = vpop.f32.mrb[0].mxu0
        %v1500 = vadd.f32 %v368, %v1499
        %v1501 = vpop.f32.mrb[0].mxu0
        %v1502 = vadd.f32 %v372, %v1501
        %v1503 = vpop.f32.mrb[0].mxu0
        %v1504 = vadd.f32 %v368, %v1503
        %v1505 = vpop.f32.mrb[0].mxu0
        %v1506 = vadd.f32 %v372, %v1505
        %1507 = vmatprep.mubr.bf16.mxu0 %v490
        %1508 = vmatmul.mubr.bf16.gmra.mrb[0].mxu0 %v489
        %v1509 = vpop.f32.mrb[0].mxu0
        %v1510 = vadd.f32 %v368, %v1509
        %v1511 = vpop.f32.mrb[0].mxu0
        %v1512 = vadd.f32 %v372, %v1511
        %v1513 = vpop.f32.mrb[0].mxu0
        %v1514 = vadd.f32 %v368, %v1513
        %v1515 = vpop.f32.mrb[0].mxu0
        %v1516 = vadd.f32 %v372, %v1515
        %1517 = vmatprep.mubr.bf16.mxu0 %v492
        %1518 = vmatmul.mubr.bf16.gmra.mrb[0].mxu0 %v491
        %v1519 = vpop.f32.mrb[0].mxu0
        %v1520 = vadd.f32 %v368, %v1519
        %v1521 = vpop.f32.mrb[0].mxu0
        %v1522 = vadd.f32 %v372, %v1521
        %v1523 = vpop.f32.mrb[0].mxu0
        %v1524 = vadd.f32 %v368, %v1523
        %v1525 = vpop.f32.mrb[0].mxu0
        %v1526 = vadd.f32 %v372, %v1525
        %1527 = vmatprep.mubr.bf16.mxu0 %v494
        %1528 = vmatmul.mubr.bf16.gmra.mrb[0].mxu0 %v493
        %v1529 = vpop.f32.mrb[0].mxu0
        %v1530 = vadd.f32 %v368, %v1529
        %v1531 = vpop.f32.mrb[0].mxu0
        %v1532 = vadd.f32 %v372, %v1531
        %v1533 = vpop.f32.mrb[0].mxu0
        %v1534 = vadd.f32 %v368, %v1533
        %v1535 = vpop.f32.mrb[0].mxu0
        %v1536 = vadd.f32 %v372, %v1535
        %1537 = vmatprep.mubr.bf16.mxu0 %v496
        %1538 = vmatmul.mubr.bf16.gmra.mrb[0].mxu0 %v495
        %v1539 = vpop.f32.mrb[0].mxu0
        %v1540 = vadd.f32 %v368, %v1539
        %v1541 = vpop.f32.mrb[0].mxu0
        %v1542 = vadd.f32 %v372, %v1541
        %v1543 = vpop.f32.mrb[0].mxu0
        %v1544 = vadd.f32 %v368, %v1543
        %v1545 = vpop.f32.mrb[0].mxu0
        %v1546 = vadd.f32 %v372, %v1545
        %1547 = vmatprep.mubr.bf16.mxu0 %v498
        %1548 = vmatmul.mubr.bf16.gmra.mrb[0].mxu0 %v497
        %v1549 = vpop.f32.mrb[0].mxu0
        %v1550 = vadd.f32 %v368, %v1549
        %v1551 = vpop.f32.mrb[0].mxu0
        %v1552 = vadd.f32 %v372, %v1551
        %v1553 = vpop.f32.mrb[0].mxu0
        %v1554 = vadd.f32 %v368, %v1553
        %v1555 = vpop.f32.mrb[0].mxu0
        %v1556 = vadd.f32 %v372, %v1555
        %1557 = vmatprep.mubr.bf16.mxu0 %v500
        %1558 = vmatmul.mubr.bf16.gmra.mrb[0].mxu0 %v499
        %v1559 = vpop.f32.mrb[0].mxu0
        %v1560 = vadd.f32 %v368, %v1559
        %v1561 = vpop.f32.mrb[0].mxu0
        %v1562 = vadd.f32 %v372, %v1561
        %v1563 = vpop.f32.mrb[0].mxu0
        %v1564 = vadd.f32 %v368, %v1563
        %v1565 = vpop.f32.mrb[0].mxu0
        %v1566 = vadd.f32 %v372, %v1565
        %1567 = vmatprep.mubr.bf16.mxu0 %v502
        %1568 = vmatmul.mubr.bf16.gmra.mrb[0].mxu0 %v501
        %v1569 = vpop.f32.mrb[0].mxu0
        %v1570 = vadd.f32 %v368, %v1569
        %v1571 = vpop.f32.mrb[0].mxu0
        %v1572 = vadd.f32 %v372, %v1571
        %v1573 = vpop.f32.mrb[0].mxu0
        %v1574 = vadd.f32 %v368, %v1573
        %v1575 = vpop.f32.mrb[0].mxu0
        %v1576 = vadd.f32 %v372, %v1575
        %1577 = vmatprep.mubr.bf16.mxu0 %v504
        %1578 = vmatmul.mubr.bf16.gmra.mrb[0].mxu0 %v503
        %v1579 = vpop.f32.mrb[0].mxu0
        %v1580 = vadd.f32 %v368, %v1579
        %v1581 = vpop.f32.mrb[0].mxu0
        %v1582 = vadd.f32 %v372, %v1581
        %v1583 = vpop.f32.mrb[0].mxu0
        %v1584 = vadd.f32 %v368, %v1583
        %v1585 = vpop.f32.mrb[0].mxu0
        %v1586 = vadd.f32 %v372, %v1585
        %1587 = vmatprep.mubr.bf16.mxu0 %v506
        %1588 = vmatmul.mubr.bf16.gmra.mrb[0].mxu0 %v505
        %v1589 = vpop.f32.mrb[0].mxu0
        %v1590 = vadd.f32 %v368, %v1589
        %v1591 = vpop.f32.mrb[0].mxu0
        %v1592 = vadd.f32 %v372, %v1591
        %v1593 = vpop.f32.mrb[0].mxu0
        %v1594 = vadd.f32 %v368, %v1593
        %v1595 = vpop.f32.mrb[0].mxu0
        %v1596 = vadd.f32 %v372, %v1595
        %1597 = vdwg.mxu0
        %v1598 = vpack.c.bf16 %v1058, %v1054
        %v1599 = vpack.c.bf16 %v1060, %v1056
        %v1600 = vpack.c.bf16 %v1251, %v1247
        %v1601 = vpack.c.bf16 %v1253, %v1249
        %v1602 = vpack.c.bf16 %v1444, %v1440
        %v1603 = vpack.c.bf16 %v1446, %v1442
        %v1604 = vpack.c.bf16 %v1068, %v1064
        %v1605 = vpack.c.bf16 %v1070, %v1066
        %v1606 = vpack.c.bf16 %v1261, %v1257
        %v1607 = vpack.c.bf16 %v1263, %v1259
        %v1608 = vpack.c.bf16 %v1454, %v1450
        %v1609 = vpack.c.bf16 %v1456, %v1452
        %v1610 = vpack.c.bf16 %v1078, %v1074
        %v1611 = vpack.c.bf16 %v1080, %v1076
        %v1612 = vpack.c.bf16 %v1271, %v1267
        %v1613 = vpack.c.bf16 %v1273, %v1269
        %v1614 = vpack.c.bf16 %v1464, %v1460
        %v1615 = vpack.c.bf16 %v1466, %v1462
        %v1616 = vpack.c.bf16 %v1088, %v1084
        %v1617 = vpack.c.bf16 %v1090, %v1086
        %v1618 = vpack.c.bf16 %v1281, %v1277
        %v1619 = vpack.c.bf16 %v1283, %v1279
        %v1620 = vpack.c.bf16 %v1474, %v1470
        %v1621 = vpack.c.bf16 %v1476, %v1472
        %v1622 = vpack.c.bf16 %v1098, %v1094
        %v1623 = vpack.c.bf16 %v1100, %v1096
        %v1624 = vpack.c.bf16 %v1291, %v1287
        %v1625 = vpack.c.bf16 %v1293, %v1289
        %v1626 = vpack.c.bf16 %v1484, %v1480
        %v1627 = vpack.c.bf16 %v1486, %v1482
        %v1628 = vpack.c.bf16 %v1108, %v1104
        %v1629 = vpack.c.bf16 %v1110, %v1106
        %v1630 = vpack.c.bf16 %v1301, %v1297
        %v1631 = vpack.c.bf16 %v1303, %v1299
        %v1632 = vpack.c.bf16 %v1494, %v1490
        %v1633 = vpack.c.bf16 %v1496, %v1492
        %v1634 = vpack.c.bf16 %v1118, %v1114
        %v1635 = vpack.c.bf16 %v1120, %v1116
        %v1636 = vpack.c.bf16 %v1311, %v1307
        %v1637 = vpack.c.bf16 %v1313, %v1309
        %v1638 = vpack.c.bf16 %v1504, %v1500
        %v1639 = vpack.c.bf16 %v1506, %v1502
        %v1640 = vpack.c.bf16 %v1128, %v1124
        %v1641 = vpack.c.bf16 %v1130, %v1126
        %v1642 = vpack.c.bf16 %v1321, %v1317
        %v1643 = vpack.c.bf16 %v1323, %v1319
        %v1644 = vpack.c.bf16 %v1514, %v1510
        %v1645 = vpack.c.bf16 %v1516, %v1512
        %v1646 = vpack.c.bf16 %v1138, %v1134
        %v1647 = vpack.c.bf16 %v1140, %v1136
        %v1648 = vpack.c.bf16 %v1331, %v1327
        %v1649 = vpack.c.bf16 %v1333, %v1329
        %v1650 = vpack.c.bf16 %v1524, %v1520
        %v1651 = vpack.c.bf16 %v1526, %v1522
        %v1652 = vpack.c.bf16 %v1148, %v1144
        %v1653 = vpack.c.bf16 %v1150, %v1146
        %v1654 = vpack.c.bf16 %v1341, %v1337
        %v1655 = vpack.c.bf16 %v1343, %v1339
        %v1656 = vpack.c.bf16 %v1534, %v1530
        %v1657 = vpack.c.bf16 %v1536, %v1532
        %v1658 = vpack.c.bf16 %v1158, %v1154
        %v1659 = vpack.c.bf16 %v1160, %v1156
        %v1660 = vpack.c.bf16 %v1351, %v1347
        %v1661 = vpack.c.bf16 %v1353, %v1349
        %v1662 = vpack.c.bf16 %v1544, %v1540
        %v1663 = vpack.c.bf16 %v1546, %v1542
        %v1664 = vpack.c.bf16 %v1168, %v1164
        %v1665 = vpack.c.bf16 %v1170, %v1166
        %v1666 = vpack.c.bf16 %v1361, %v1357
        %v1667 = vpack.c.bf16 %v1363, %v1359
        %v1668 = vpack.c.bf16 %v1554, %v1550
        %v1669 = vpack.c.bf16 %v1556, %v1552
        %v1670 = vpack.c.bf16 %v1178, %v1174
        %v1671 = vpack.c.bf16 %v1180, %v1176
        %v1672 = vpack.c.bf16 %v1371, %v1367
        %v1673 = vpack.c.bf16 %v1373, %v1369
        %v1674 = vpack.c.bf16 %v1564, %v1560
        %v1675 = vpack.c.bf16 %v1566, %v1562
        %v1676 = vpack.c.bf16 %v1188, %v1184
        %v1677 = vpack.c.bf16 %v1190, %v1186
        %v1678 = vpack.c.bf16 %v1381, %v1377
        %v1679 = vpack.c.bf16 %v1383, %v1379
        %v1680 = vpack.c.bf16 %v1574, %v1570
        %v1681 = vpack.c.bf16 %v1576, %v1572
        %v1682 = vpack.c.bf16 %v1198, %v1194
        %v1683 = vpack.c.bf16 %v1200, %v1196
        %v1684 = vpack.c.bf16 %v1391, %v1387
        %v1685 = vpack.c.bf16 %v1393, %v1389
        %v1686 = vpack.c.bf16 %v1584, %v1580
        %v1687 = vpack.c.bf16 %v1586, %v1582
        %v1688 = vpack.c.bf16 %v1208, %v1204
        %v1689 = vpack.c.bf16 %v1210, %v1206
        %v1690 = vpack.c.bf16 %v1401, %v1397
        %v1691 = vpack.c.bf16 %v1403, %v1399
        %v1692 = vpack.c.bf16 %v1594, %v1590
        %v1693 = vpack.c.bf16 %v1596, %v1592
        %v1790 = vunpack.c.l.b16 %v1598
        %v1791 = vunpack.c.l.b16 %v1599
        %v1792 = vunpack.c.l.b16 %v1600
        %v1793 = vunpack.c.l.b16 %v1601
        %v1794 = vunpack.c.l.b16 %v1602
        %v1795 = vunpack.c.l.b16 %v1603
        %v1796 = vunpack.c.h.b16 %v1598
        %v1797 = vunpack.c.h.b16 %v1599
        %v1798 = vunpack.c.h.b16 %v1600
        %v1799 = vunpack.c.h.b16 %v1601
        %v1800 = vunpack.c.h.b16 %v1602
        %v1801 = vunpack.c.h.b16 %v1603
        %v1802 = vunpack.c.l.b16 %v1604
        %v1803 = vunpack.c.l.b16 %v1605
        %v1804 = vunpack.c.l.b16 %v1606
        %v1805 = vunpack.c.l.b16 %v1607
        %v1806 = vunpack.c.l.b16 %v1608
        %v1807 = vunpack.c.l.b16 %v1609
        %v1808 = vunpack.c.h.b16 %v1604
        %v1809 = vunpack.c.h.b16 %v1605
        %v1810 = vunpack.c.h.b16 %v1606
        %v1811 = vunpack.c.h.b16 %v1607
        %v1812 = vunpack.c.h.b16 %v1608
        %v1813 = vunpack.c.h.b16 %v1609
        %v1814 = vunpack.c.l.b16 %v1610
        %v1815 = vunpack.c.l.b16 %v1611
        %v1816 = vunpack.c.l.b16 %v1612
        %v1817 = vunpack.c.l.b16 %v1613
        %v1818 = vunpack.c.l.b16 %v1614
        %v1819 = vunpack.c.l.b16 %v1615
        %v1820 = vunpack.c.h.b16 %v1610
        %v1821 = vunpack.c.h.b16 %v1611
        %v1822 = vunpack.c.h.b16 %v1612
        %v1823 = vunpack.c.h.b16 %v1613
        %v1824 = vunpack.c.h.b16 %v1614
        %v1825 = vunpack.c.h.b16 %v1615
        %v1826 = vunpack.c.l.b16 %v1616
        %v1827 = vunpack.c.l.b16 %v1617
        %v1828 = vunpack.c.l.b16 %v1618
        %v1829 = vunpack.c.l.b16 %v1619
        %v1830 = vunpack.c.l.b16 %v1620
        %v1831 = vunpack.c.l.b16 %v1621
        %v1832 = vunpack.c.h.b16 %v1616
        %v1833 = vunpack.c.h.b16 %v1617
        %v1834 = vunpack.c.h.b16 %v1618
        %v1835 = vunpack.c.h.b16 %v1619
        %v1836 = vunpack.c.h.b16 %v1620
        %v1837 = vunpack.c.h.b16 %v1621
        %v1838 = vunpack.c.l.b16 %v1622
        %v1839 = vunpack.c.l.b16 %v1623
        %v1840 = vunpack.c.l.b16 %v1624
        %v1841 = vunpack.c.l.b16 %v1625
        %v1842 = vunpack.c.l.b16 %v1626
        %v1843 = vunpack.c.l.b16 %v1627
        %v1844 = vunpack.c.h.b16 %v1622
        %v1845 = vunpack.c.h.b16 %v1623
        %v1846 = vunpack.c.h.b16 %v1624
        %v1847 = vunpack.c.h.b16 %v1625
        %v1848 = vunpack.c.h.b16 %v1626
        %v1849 = vunpack.c.h.b16 %v1627
        %v1850 = vunpack.c.l.b16 %v1628
        %v1851 = vunpack.c.l.b16 %v1629
        %v1852 = vunpack.c.l.b16 %v1630
        %v1853 = vunpack.c.l.b16 %v1631
        %v1854 = vunpack.c.l.b16 %v1632
        %v1855 = vunpack.c.l.b16 %v1633
        %v1856 = vunpack.c.h.b16 %v1628
        %v1857 = vunpack.c.h.b16 %v1629
        %v1858 = vunpack.c.h.b16 %v1630
        %v1859 = vunpack.c.h.b16 %v1631
        %v1860 = vunpack.c.h.b16 %v1632
        %v1861 = vunpack.c.h.b16 %v1633
        %v1862 = vunpack.c.l.b16 %v1634
        %v1863 = vunpack.c.l.b16 %v1635
        %v1864 = vunpack.c.l.b16 %v1636
        %v1865 = vunpack.c.l.b16 %v1637
        %v1866 = vunpack.c.l.b16 %v1638
        %v1867 = vunpack.c.l.b16 %v1639
        %v1868 = vunpack.c.h.b16 %v1634
        %v1869 = vunpack.c.h.b16 %v1635
        %v1870 = vunpack.c.h.b16 %v1636
        %v1871 = vunpack.c.h.b16 %v1637
        %v1872 = vunpack.c.h.b16 %v1638
        %v1873 = vunpack.c.h.b16 %v1639
        %v1874 = vunpack.c.l.b16 %v1640
        %v1875 = vunpack.c.l.b16 %v1641
        %v1876 = vunpack.c.l.b16 %v1642
        %v1877 = vunpack.c.l.b16 %v1643
        %v1878 = vunpack.c.l.b16 %v1644
        %v1879 = vunpack.c.l.b16 %v1645
        %v1880 = vunpack.c.h.b16 %v1640
        %v1881 = vunpack.c.h.b16 %v1641
        %v1882 = vunpack.c.h.b16 %v1642
        %v1883 = vunpack.c.h.b16 %v1643
        %v1884 = vunpack.c.h.b16 %v1644
        %v1885 = vunpack.c.h.b16 %v1645
        %v1886 = vunpack.c.l.b16 %v1646
        %v1887 = vunpack.c.l.b16 %v1647
        %v1888 = vunpack.c.l.b16 %v1648
        %v1889 = vunpack.c.l.b16 %v1649
        %v1890 = vunpack.c.l.b16 %v1650
        %v1891 = vunpack.c.l.b16 %v1651
        %v1892 = vunpack.c.h.b16 %v1646
        %v1893 = vunpack.c.h.b16 %v1647
        %v1894 = vunpack.c.h.b16 %v1648
        %v1895 = vunpack.c.h.b16 %v1649
        %v1896 = vunpack.c.h.b16 %v1650
        %v1897 = vunpack.c.h.b16 %v1651
        %v1898 = vunpack.c.l.b16 %v1652
        %v1899 = vunpack.c.l.b16 %v1653
        %v1900 = vunpack.c.l.b16 %v1654
        %v1901 = vunpack.c.l.b16 %v1655
        %v1902 = vunpack.c.l.b16 %v1656
        %v1903 = vunpack.c.l.b16 %v1657
        %v1904 = vunpack.c.h.b16 %v1652
        %v1905 = vunpack.c.h.b16 %v1653
        %v1906 = vunpack.c.h.b16 %v1654
        %v1907 = vunpack.c.h.b16 %v1655
        %v1908 = vunpack.c.h.b16 %v1656
        %v1909 = vunpack.c.h.b16 %v1657
        %v1910 = vunpack.c.l.b16 %v1658
        %v1911 = vunpack.c.l.b16 %v1659
        %v1912 = vunpack.c.l.b16 %v1660
        %v1913 = vunpack.c.l.b16 %v1661
        %v1914 = vunpack.c.l.b16 %v1662
        %v1915 = vunpack.c.l.b16 %v1663
        %v1916 = vunpack.c.h.b16 %v1658
        %v1917 = vunpack.c.h.b16 %v1659
        %v1918 = vunpack.c.h.b16 %v1660
        %v1919 = vunpack.c.h.b16 %v1661
        %v1920 = vunpack.c.h.b16 %v1662
        %v1921 = vunpack.c.h.b16 %v1663
        %v1922 = vunpack.c.l.b16 %v1664
        %v1923 = vunpack.c.l.b16 %v1665
        %v1924 = vunpack.c.l.b16 %v1666
        %v1925 = vunpack.c.l.b16 %v1667
        %v1926 = vunpack.c.l.b16 %v1668
        %v1927 = vunpack.c.l.b16 %v1669
        %v1928 = vunpack.c.h.b16 %v1664
        %v1929 = vunpack.c.h.b16 %v1665
        %v1930 = vunpack.c.h.b16 %v1666
        %v1931 = vunpack.c.h.b16 %v1667
        %v1932 = vunpack.c.h.b16 %v1668
        %v1933 = vunpack.c.h.b16 %v1669
        %v1934 = vunpack.c.l.b16 %v1670
        %v1935 = vunpack.c.l.b16 %v1671
        %v1936 = vunpack.c.l.b16 %v1672
        %v1937 = vunpack.c.l.b16 %v1673
        %v1938 = vunpack.c.l.b16 %v1674
        %v1939 = vunpack.c.l.b16 %v1675
        %v1940 = vunpack.c.h.b16 %v1670
        %v1941 = vunpack.c.h.b16 %v1671
        %v1942 = vunpack.c.h.b16 %v1672
        %v1943 = vunpack.c.h.b16 %v1673
        %v1944 = vunpack.c.h.b16 %v1674
        %v1945 = vunpack.c.h.b16 %v1675
        %v1946 = vunpack.c.l.b16 %v1676
        %v1947 = vunpack.c.l.b16 %v1677
        %v1948 = vunpack.c.l.b16 %v1678
        %v1949 = vunpack.c.l.b16 %v1679
        %v1950 = vunpack.c.l.b16 %v1680
        %v1951 = vunpack.c.l.b16 %v1681
        %v1952 = vunpack.c.h.b16 %v1676
        %v1953 = vunpack.c.h.b16 %v1677
        %v1954 = vunpack.c.h.b16 %v1678
        %v1955 = vunpack.c.h.b16 %v1679
        %v1956 = vunpack.c.h.b16 %v1680
        %v1957 = vunpack.c.h.b16 %v1681
        %v1958 = vunpack.c.l.b16 %v1682
        %v1959 = vunpack.c.l.b16 %v1683
        %v1960 = vunpack.c.l.b16 %v1684
        %v1961 = vunpack.c.l.b16 %v1685
        %v1962 = vunpack.c.l.b16 %v1686
        %v1963 = vunpack.c.l.b16 %v1687
        %v1964 = vunpack.c.h.b16 %v1682
        %v1965 = vunpack.c.h.b16 %v1683
        %v1966 = vunpack.c.h.b16 %v1684
        %v1967 = vunpack.c.h.b16 %v1685
        %v1968 = vunpack.c.h.b16 %v1686
        %v1969 = vunpack.c.h.b16 %v1687
        %v1970 = vunpack.c.l.b16 %v1688
        %v1971 = vunpack.c.l.b16 %v1689
        %v1972 = vunpack.c.l.b16 %v1690
        %v1973 = vunpack.c.l.b16 %v1691
        %v1974 = vunpack.c.l.b16 %v1692
        %v1975 = vunpack.c.l.b16 %v1693
        %v1976 = vunpack.c.h.b16 %v1688
        %v1977 = vunpack.c.h.b16 %v1689
        %v1978 = vunpack.c.h.b16 %v1690
        %v1979 = vunpack.c.h.b16 %v1691
        %v1980 = vunpack.c.h.b16 %v1692
        %v1981 = vunpack.c.h.b16 %v1693
        %v1982 = vpack.c.b16 %v1791, %v1790
        %v1983 = vpack.c.b16 %v1793, %v1792
        %v1984 = vpack.c.b16 %v1795, %v1794
        %v1985 = vpack.c.b16 %v1797, %v1796
        %v1986 = vpack.c.b16 %v1799, %v1798
        %v1987 = vpack.c.b16 %v1801, %v1800
        %v1988 = vpack.c.b16 %v1803, %v1802
        %v1989 = vpack.c.b16 %v1805, %v1804
        %v1990 = vpack.c.b16 %v1807, %v1806
        %v1991 = vpack.c.b16 %v1809, %v1808
        %v1992 = vpack.c.b16 %v1811, %v1810
        %v1993 = vpack.c.b16 %v1813, %v1812
        %v1994 = vpack.c.b16 %v1815, %v1814
        %v1995 = vpack.c.b16 %v1817, %v1816
        %v1996 = vpack.c.b16 %v1819, %v1818
        %v1997 = vpack.c.b16 %v1821, %v1820
        %v1998 = vpack.c.b16 %v1823, %v1822
        %v1999 = vpack.c.b16 %v1825, %v1824
        %v2000 = vpack.c.b16 %v1827, %v1826
        %v2001 = vpack.c.b16 %v1829, %v1828
        %v2002 = vpack.c.b16 %v1831, %v1830
        %v2003 = vpack.c.b16 %v1833, %v1832
        %v2004 = vpack.c.b16 %v1835, %v1834
        %v2005 = vpack.c.b16 %v1837, %v1836
        %v2006 = vpack.c.b16 %v1839, %v1838
        %v2007 = vpack.c.b16 %v1841, %v1840
        %v2008 = vpack.c.b16 %v1843, %v1842
        %v2009 = vpack.c.b16 %v1845, %v1844
        %v2010 = vpack.c.b16 %v1847, %v1846
        %v2011 = vpack.c.b16 %v1849, %v1848
        %v2012 = vpack.c.b16 %v1851, %v1850
        %v2013 = vpack.c.b16 %v1853, %v1852
        %v2014 = vpack.c.b16 %v1855, %v1854
        %v2015 = vpack.c.b16 %v1857, %v1856
        %v2016 = vpack.c.b16 %v1859, %v1858
        %v2017 = vpack.c.b16 %v1861, %v1860
        %v2018 = vpack.c.b16 %v1863, %v1862
        %v2019 = vpack.c.b16 %v1865, %v1864
        %v2020 = vpack.c.b16 %v1867, %v1866
        %v2021 = vpack.c.b16 %v1869, %v1868
        %v2022 = vpack.c.b16 %v1871, %v1870
        %v2023 = vpack.c.b16 %v1873, %v1872
        %v2024 = vpack.c.b16 %v1875, %v1874
        %v2025 = vpack.c.b16 %v1877, %v1876
        %v2026 = vpack.c.b16 %v1879, %v1878
        %v2027 = vpack.c.b16 %v1881, %v1880
        %v2028 = vpack.c.b16 %v1883, %v1882
        %v2029 = vpack.c.b16 %v1885, %v1884
        %v2030 = vpack.c.b16 %v1887, %v1886
        %v2031 = vpack.c.b16 %v1889, %v1888
        %v2032 = vpack.c.b16 %v1891, %v1890
        %v2033 = vpack.c.b16 %v1893, %v1892
        %v2034 = vpack.c.b16 %v1895, %v1894
        %v2035 = vpack.c.b16 %v1897, %v1896
        %v2036 = vpack.c.b16 %v1899, %v1898
        %v2037 = vpack.c.b16 %v1901, %v1900
        %v2038 = vpack.c.b16 %v1903, %v1902
        %v2039 = vpack.c.b16 %v1905, %v1904
        %v2040 = vpack.c.b16 %v1907, %v1906
        %v2041 = vpack.c.b16 %v1909, %v1908
        %v2042 = vpack.c.b16 %v1911, %v1910
        %v2043 = vpack.c.b16 %v1913, %v1912
        %v2044 = vpack.c.b16 %v1915, %v1914
        %v2045 = vpack.c.b16 %v1917, %v1916
        %v2046 = vpack.c.b16 %v1919, %v1918
        %v2047 = vpack.c.b16 %v1921, %v1920
        %v2048 = vpack.c.b16 %v1923, %v1922
        %v2049 = vpack.c.b16 %v1925, %v1924
        %v2050 = vpack.c.b16 %v1927, %v1926
        %v2051 = vpack.c.b16 %v1929, %v1928
        %v2052 = vpack.c.b16 %v1931, %v1930
        %v2053 = vpack.c.b16 %v1933, %v1932
        %v2054 = vpack.c.b16 %v1935, %v1934
        %v2055 = vpack.c.b16 %v1937, %v1936
        %v2056 = vpack.c.b16 %v1939, %v1938
        %v2057 = vpack.c.b16 %v1941, %v1940
        %v2058 = vpack.c.b16 %v1943, %v1942
        %v2059 = vpack.c.b16 %v1945, %v1944
        %v2060 = vpack.c.b16 %v1947, %v1946
        %v2061 = vpack.c.b16 %v1949, %v1948
        %v2062 = vpack.c.b16 %v1951, %v1950
        %v2063 = vpack.c.b16 %v1953, %v1952
        %v2064 = vpack.c.b16 %v1955, %v1954
        %v2065 = vpack.c.b16 %v1957, %v1956
        %v2066 = vpack.c.b16 %v1959, %v1958
        %v2067 = vpack.c.b16 %v1961, %v1960
        %v2068 = vpack.c.b16 %v1963, %v1962
        %v2069 = vpack.c.b16 %v1965, %v1964
        %v2070 = vpack.c.b16 %v1967, %v1966
        %v2071 = vpack.c.b16 %v1969, %v1968
        %v2072 = vpack.c.b16 %v1971, %v1970
        %v2073 = vpack.c.b16 %v1973, %v1972
        %v2074 = vpack.c.b16 %v1975, %v1974
        %v2075 = vpack.c.b16 %v1977, %v1976
        %v2076 = vpack.c.b16 %v1979, %v1978
        %v2077 = vpack.c.b16 %v1981, %v1980
        %2174 = vst [vmem:[%s216] sm:$0xff] %v1982
        %2175 = vst [vmem:[%s216 + $0x8] sm:$0xff] %v1983
        %2176 = vst [vmem:[%s216 + $0x10] sm:$0xff] %v1984
        %2177 = vst [vmem:[%s216 + $0x18] sm:$0xff] %v1985
        %2178 = vst [vmem:[%s216 + $0x20] sm:$0xff] %v1986
        %2179 = vst [vmem:[%s216 + $0x28] sm:$0xff] %v1987
        %2180 = vst [vmem:[%s216 + $0x30] sm:$0xff] %v1988
        %2181 = vst [vmem:[%s216 + $0x38] sm:$0xff] %v1989
        %2182 = vst [vmem:[%s216 + $0x40] sm:$0xff] %v1990
        %2183 = vst [vmem:[%s216 + $0x48] sm:$0xff] %v1991
        %2184 = vst [vmem:[%s216 + $0x50] sm:$0xff] %v1992
        %2185 = vst [vmem:[%s216 + $0x58] sm:$0xff] %v1993
        %2186 = vst [vmem:[%s216 + $0x60] sm:$0xff] %v1994
        %2187 = vst [vmem:[%s216 + $0x68] sm:$0xff] %v1995
        %2188 = vst [vmem:[%s216 + $0x70] sm:$0xff] %v1996
        %2189 = vst [vmem:[%s216 + $0x78] sm:$0xff] %v1997
        %2190 = vst [vmem:[%s216 + $0x80] sm:$0xff] %v1998
        %2191 = vst [vmem:[%s216 + $0x88] sm:$0xff] %v1999
        %2192 = vst [vmem:[%s216 + $0x90] sm:$0xff] %v2000
        %2193 = vst [vmem:[%s216 + $0x98] sm:$0xff] %v2001
        %2194 = vst [vmem:[%s216 + $0xa0] sm:$0xff] %v2002
        %2195 = vst [vmem:[%s216 + $0xa8] sm:$0xff] %v2003
        %2196 = vst [vmem:[%s216 + $0xb0] sm:$0xff] %v2004
        %2197 = vst [vmem:[%s216 + $0xb8] sm:$0xff] %v2005
        %2198 = vst [vmem:[%s216 + $0xc0] sm:$0xff] %v2006
        %2199 = vst [vmem:[%s216 + $0xc8] sm:$0xff] %v2007
        %2200 = vst [vmem:[%s216 + $0xd0] sm:$0xff] %v2008
        %2201 = vst [vmem:[%s216 + $0xd8] sm:$0xff] %v2009
        %2202 = vst [vmem:[%s216 + $0xe0] sm:$0xff] %v2010
        %2203 = vst [vmem:[%s216 + $0xe8] sm:$0xff] %v2011
        %2204 = vst [vmem:[%s216 + $0xf0] sm:$0xff] %v2012
        %2205 = vst [vmem:[%s216 + $0xf8] sm:$0xff] %v2013
        %2206 = vst [vmem:[%s216 + $0x100] sm:$0xff] %v2014
        %2207 = vst [vmem:[%s216 + $0x108] sm:$0xff] %v2015
        %2208 = vst [vmem:[%s216 + $0x110] sm:$0xff] %v2016
        %2209 = vst [vmem:[%s216 + $0x118] sm:$0xff] %v2017
        %2210 = vst [vmem:[%s216 + $0x120] sm:$0xff] %v2018
        %2211 = vst [vmem:[%s216 + $0x128] sm:$0xff] %v2019
        %2212 = vst [vmem:[%s216 + $0x130] sm:$0xff] %v2020
        %2213 = vst [vmem:[%s216 + $0x138] sm:$0xff] %v2021
        %2214 = vst [vmem:[%s216 + $0x140] sm:$0xff] %v2022
        %2215 = vst [vmem:[%s216 + $0x148] sm:$0xff] %v2023
        %2216 = vst [vmem:[%s216 + $0x150] sm:$0xff] %v2024
        %2217 = vst [vmem:[%s216 + $0x158] sm:$0xff] %v2025
        %2218 = vst [vmem:[%s216 + $0x160] sm:$0xff] %v2026
        %2219 = vst [vmem:[%s216 + $0x168] sm:$0xff] %v2027
        %2220 = vst [vmem:[%s216 + $0x170] sm:$0xff] %v2028
        %2221 = vst [vmem:[%s216 + $0x178] sm:$0xff] %v2029
        %2222 = vst [vmem:[%s216 + $0x180] sm:$0xff] %v2030
        %2223 = vst [vmem:[%s216 + $0x188] sm:$0xff] %v2031
        %2224 = vst [vmem:[%s216 + $0x190] sm:$0xff] %v2032
        %2225 = vst [vmem:[%s216 + $0x198] sm:$0xff] %v2033
        %2226 = vst [vmem:[%s216 + $0x1a0] sm:$0xff] %v2034
        %2227 = vst [vmem:[%s216 + $0x1a8] sm:$0xff] %v2035
        %2228 = vst [vmem:[%s216 + $0x1b0] sm:$0xff] %v2036
        %2229 = vst [vmem:[%s216 + $0x1b8] sm:$0xff] %v2037
        %2230 = vst [vmem:[%s216 + $0x1c0] sm:$0xff] %v2038
        %2231 = vst [vmem:[%s216 + $0x1c8] sm:$0xff] %v2039
        %2232 = vst [vmem:[%s216 + $0x1d0] sm:$0xff] %v2040
        %2233 = vst [vmem:[%s216 + $0x1d8] sm:$0xff] %v2041
        %2234 = vst [vmem:[%s216 + $0x1e0] sm:$0xff] %v2042
        %2235 = vst [vmem:[%s216 + $0x1e8] sm:$0xff] %v2043
        %2236 = vst [vmem:[%s216 + $0x1f0] sm:$0xff] %v2044
        %2237 = vst [vmem:[%s216 + $0x1f8] sm:$0xff] %v2045
        %2238 = vst [vmem:[%s216 + $0x200] sm:$0xff] %v2046
        %2239 = vst [vmem:[%s216 + $0x208] sm:$0xff] %v2047
        %2240 = vst [vmem:[%s216 + $0x210] sm:$0xff] %v2048
        %2241 = vst [vmem:[%s216 + $0x218] sm:$0xff] %v2049
        %2242 = vst [vmem:[%s216 + $0x220] sm:$0xff] %v2050
        %2243 = vst [vmem:[%s216 + $0x228] sm:$0xff] %v2051
        %2244 = vst [vmem:[%s216 + $0x230] sm:$0xff] %v2052
        %2245 = vst [vmem:[%s216 + $0x238] sm:$0xff] %v2053
        %2246 = vst [vmem:[%s216 + $0x240] sm:$0xff] %v2054
        %2247 = vst [vmem:[%s216 + $0x248] sm:$0xff] %v2055
        %2248 = vst [vmem:[%s216 + $0x250] sm:$0xff] %v2056
        %2249 = vst [vmem:[%s216 + $0x258] sm:$0xff] %v2057
        %2250 = vst [vmem:[%s216 + $0x260] sm:$0xff] %v2058
        %2251 = vst [vmem:[%s216 + $0x268] sm:$0xff] %v2059
        %2252 = vst [vmem:[%s216 + $0x270] sm:$0xff] %v2060
        %2253 = vst [vmem:[%s216 + $0x278] sm:$0xff] %v2061
        %2254 = vst [vmem:[%s216 + $0x280] sm:$0xff] %v2062
        %2255 = vst [vmem:[%s216 + $0x288] sm:$0xff] %v2063
        %2256 = vst [vmem:[%s216 + $0x290] sm:$0xff] %v2064
        %2257 = vst [vmem:[%s216 + $0x298] sm:$0xff] %v2065
        %2258 = vst [vmem:[%s216 + $0x2a0] sm:$0xff] %v2066
        %2259 = vst [vmem:[%s216 + $0x2a8] sm:$0xff] %v2067
        %2260 = vst [vmem:[%s216 + $0x2b0] sm:$0xff] %v2068
        %2261 = vst [vmem:[%s216 + $0x2b8] sm:$0xff] %v2069
        %2262 = vst [vmem:[%s216 + $0x2c0] sm:$0xff] %v2070
        %2263 = vst [vmem:[%s216 + $0x2c8] sm:$0xff] %v2071
        %2264 = vst [vmem:[%s216 + $0x2d0] sm:$0xff] %v2072
        %2265 = vst [vmem:[%s216 + $0x2d8] sm:$0xff] %v2073
        %2266 = vst [vmem:[%s216 + $0x2e0] sm:$0xff] %v2074
        %2267 = vst [vmem:[%s216 + $0x2e8] sm:$0xff] %v2075
        %2268 = vst [vmem:[%s216 + $0x2f0] sm:$0xff] %v2076
        %2269 = vst [vmem:[%s216 + $0x2f8] sm:$0xff] %v2077
        %s2270 = sand.u32 %s97, 1
        %s2271 = scalar_lea.sflag [#allocation4], %s2270
        %s2272 = sand.u32 %s97, 1
        %s2273 = smul.addr %s2272, 768
        %s2274 = scalar_lea.vmem [#allocation8], %s2273
        // Predicated region
        $region45: #{causal_self_attention.3} parent=31 // pred_check
          %p2275 = pneg %p107
        $region46: #{causal_self_attention.3} parent=31 // pred_check_branch
          %2277 = sbr.rel (%p2275) target = $region48
        $region47: #{causal_self_attention.3} parent=31 // pred_region
          %s2278 = smul.u32 32, %s21
          %s2280 = ssub.s32 12288, 12288
          %2281 = vsyncadd %s2271, %s2280
          %s2282 = smul.addr %s2278, 6
          %s2283 = smul.addr %s2282, 64
          %s2284 = scalar_lea.hbm %s3, %s2283
          %s2285 = sshll.u32 %s2274, 4
          %s2286 = int_to_ptr.vmem [resolvable:$true] %s2285
          %2291 = dma.vmem_to_hbm [thread:$0]  %s2286, 12288, %s2284, %s2271, 384, 384, 24
        $region48: #{causal_self_attention.3} parent=31 // pred_fallthru
          _
      $region32: #{causal_self_attention.3} parent=5 // pred_fallthru
        _
      %p2292 = scmp.le.s32.totalorder 2, %s16
      // Predicated region
      $region49: #{causal_self_attention.3} parent=5 // pred_check
        %p2293 = pneg %p2292
      $region50: #{causal_self_attention.3} parent=5 // pred_check_branch
        %2295 = sbr.rel (%p2293) target = $region52
      $region51: #{causal_self_attention.3} parent=5 // pred_region
        %s2296 = ssub.s32 %s16, 2
        // Predicated region
        $region53: #{causal_self_attention.3} parent=51 // pred_check
          %p2297 = pneg %p113
        $region54: #{causal_self_attention.3} parent=51 // pred_check_branch
          %2299 = sbr.rel (%p2297) target = $region56
        $region55: #{causal_self_attention.3} parent=51 // pred_region
          %s2300 = sand.u32 %s98, 1
          %s2301 = scalar_lea.sflag [#allocation4], %s2300
          %s2302 = sand.u32 %s98, 1
          %s2303 = smul.addr %s2302, 768
          %s2304 = scalar_lea.vmem [#allocation8], %s2303
          %2305 = dma.done %s2301, 12288
        $region56: #{causal_self_attention.3} parent=51 // pred_fallthru
          _
      $region52: #{causal_self_attention.3} parent=5 // pred_fallthru
        _
    $region6: #{causal_self_attention.3} parent=1 // loop_footer
      %s20 = sadd.s32 1, %s16
    $region7: #{causal_self_attention.3} parent=1 // loop_footer_branch
      %15 = sbr.rel target = $region3
    $region8: #{causal_self_attention.3} parent=1 // loop_exit
      _
    %2306 = vsyncpa [#allocation3], 1
    %s2307 = scalar_lea.sflag [#allocation3], 1
    %2308 = vsyncpa %s2307, 1
    %2309 = vsyncpa [#allocation6], 1
    %2310 = vsyncpa [#allocation4], 1
    %s2311 = scalar_lea.sflag [#allocation4], 1
    %2312 = vsyncpa %s2311, 1

// kernel: causal_self_attention.5
$region0: #{causal_self_attention.5}
  #allocation0 [shape = 'u32[]', space=smem, size = 0x4, offset = 0x4, fixed_abs, tag = 'smem constant byte address 0x4 - core index']
  #allocation1 [shape = 'u32[144,128]{1,0:T(1,128)}', space=vmem, size = 0x12000, scoped, tag = 'internal scratch']
  %s0 = inlined_call_operand.hbm [shape: bf16[512,256], index: 0, kind: input, shape index: {}]
  %s1 = inlined_call_operand.hbm [shape: bf16[256,256], index: 1, kind: input, shape index: {}]
  %s2 = inlined_call_operand.hbm [shape: f32[1,256], index: 2, kind: input, shape index: {}]
  %s3 = inlined_call_operand.hbm [shape: f32[512,256], index: 3, kind: output, shape index: {}]
  %s4 = sld [smem:[#allocation0]]
  $region57: #{causal_self_attention.5} parent=0
    _
  %s6 = ssub.s32 1, %s4
  %s7 = scalar_select 0, %s6, %s4
  $region1: #{causal_self_attention.5} parent=0
    #allocation2 [shape = 'u8[262144]{0}', space=vmem, size = 0x40000, scoped, tag = 'input window, operand 0']
    #allocation3 [shape = 's32[2]{0}', space=sflag, size = 0x8, scoped, tag = 'scoped memory for causal_self_attention.5']
    #allocation4 [shape = 's32[2]{0}', space=sflag, size = 0x8, scoped, tag = 'scoped memory for causal_self_attention.5']
    #allocation5 [shape = 'u8[131072]{0}', space=vmem, size = 0x20000, scoped, tag = 'input window, operand 1, single buffered']
    #allocation6 [shape = 's32[1]{0}', space=sflag, size = 0x4, scoped, tag = 'scoped memory for causal_self_attention.5']
    #allocation7 [shape = 'u8[1024]{0}', space=vmem, size = 0x400, scoped, tag = 'input window, operand 2, single buffered']
    #allocation8 [shape = 'u8[524288]{0}', space=vmem, size = 0x80000, scoped, tag = 'output window, operand 0']
    %8 = vsyncpa [#allocation3], 0
    %s9 = scalar_lea.sflag [#allocation3], 1
    %10 = vsyncpa %s9, 0
    %11 = vsyncpa [#allocation6], 0
    %12 = vsyncpa [#allocation4], 0
    %s13 = scalar_lea.sflag [#allocation4], 1
    %14 = vsyncpa %s13, 0
    loop: start=0, step=1, limit=4
    $region2: #{causal_self_attention.5} parent=1 // loop_pre_header
      _
    $region3: #{causal_self_attention.5} parent=1 // loop_header
      %s16 = sphi 0, %s20
      %p17 = scmp.ge.s32.totalorder %s16, 4
      %s26 = sphi 0, %s28
      %s29 = sphi 0, %s26
      %s30 = sphi 0, %s29
      %s46 = sphi 0, %s30
      %s50 = sphi 0, %s50
      %s52 = sphi 0, %s50
      %s53 = sphi 0, %s52
      %s67 = sphi 0, %s53
      %s71 = sphi 0, %s71
      %s73 = sphi 0, %s71
      %s74 = sphi 0, %s73
      %s88 = sphi 0, %s74
      %s94 = sphi 0, %s96
      %s97 = sphi 0, %s94
      %s98 = sphi 0, %s97
      %s114 = sphi 0, %s98
    $region4: #{causal_self_attention.5} parent=1 // loop_header_branch
      %19 = sbr.rel (%p17) target = $region8
    $region5: #{causal_self_attention.5} parent=1 // loop_body
      %s21 = ssub.s32 %s16, 1
      %s22 = ssub.s32 %s16, 2
      %s23 = sadd.s32 %s16, 1
      %s24 = ssub.s32 %s16, %s23
      %p25 = scmp.eq.s32.totalorder %s24, 0
      %s27 = sadd.s32 %s26, 1
      %s28 = scalar_select %p25, %s26, %s27
      %p31 = pneg %p25
      %p32 = scmp.eq.s32.totalorder %s16, 1
      %p33 = por %p31, %p32
      %p34 = scmp.ne.s32.totalorder %s26, %s29
      %p35 = scmp.eq.s32.totalorder %s16, 0
      %p36 = por %p34, %p35
      %p37 = scmp.ne.s32.totalorder %s26, %s29
      %p38 = scmp.eq.s32.totalorder %s21, 1
      %p39 = por %p37, %p38
      %p40 = scmp.ne.s32.totalorder %s29, %s30
      %p41 = scmp.eq.s32.totalorder %s21, 0
      %p42 = por %p40, %p41
      %p43 = scmp.ne.s32.totalorder %s29, %s30
      %p44 = scmp.eq.s32.totalorder %s22, 1
      %p45 = por %p43, %p44
      %p47 = scmp.ne.s32.totalorder %s30, %s46
      %p48 = scmp.eq.s32.totalorder %s22, 0
      %p49 = por %p47, %p48
      %s51 = sadd.s32 %s50, 1
      %p54 = scmp.eq.s32.totalorder %s16, 1
      %p55 = scmp.ne.s32.totalorder %s50, %s52
      %p56 = scmp.eq.s32.totalorder %s16, 0
      %p57 = por %p55, %p56
      %p58 = scmp.ne.s32.totalorder %s50, %s52
      %p59 = scmp.eq.s32.totalorder %s21, 1
      %p60 = por %p58, %p59
      %p61 = scmp.ne.s32.totalorder %s52, %s53
      %p62 = scmp.eq.s32.totalorder %s21, 0
      %p63 = por %p61, %p62
      %p64 = scmp.ne.s32.totalorder %s52, %s53
      %p65 = scmp.eq.s32.totalorder %s22, 1
      %p66 = por %p64, %p65
      %p68 = scmp.ne.s32.totalorder %s53, %s67
      %p69 = scmp.eq.s32.totalorder %s22, 0
      %p70 = por %p68, %p69
      %s72 = sadd.s32 %s71, 1
      %p75 = scmp.eq.s32.totalorder %s16, 1
      %p76 = scmp.ne.s32.totalorder %s71, %s73
      %p77 = scmp.eq.s32.totalorder %s16, 0
      %p78 = por %p76, %p77
      %p79 = scmp.ne.s32.totalorder %s71, %s73
      %p80 = scmp.eq.s32.totalorder %s21, 1
      %p81 = por %p79, %p80
      %p82 = scmp.ne.s32.totalorder %s73, %s74
      %p83 = scmp.eq.s32.totalorder %s21, 0
      %p84 = por %p82, %p83
      %p85 = scmp.ne.s32.totalorder %s73, %s74
      %p86 = scmp.eq.s32.totalorder %s22, 1
      %p87 = por %p85, %p86
      %p89 = scmp.ne.s32.totalorder %s74, %s88
      %p90 = scmp.eq.s32.totalorder %s22, 0
      %p91 = por %p89, %p90
      %s92 = ssub.s32 %s16, %s23
      %p93 = scmp.eq.s32.totalorder %s92, 0
      %s95 = sadd.s32 %s94, 1
      %s96 = scalar_select %p93, %s94, %s95
      %p99 = pneg %p93
      %p100 = scmp.eq.s32.totalorder %s16, 1
      %p101 = por %p99, %p100
      %p102 = scmp.ne.s32.totalorder %s94, %s97
      %p103 = scmp.eq.s32.totalorder %s16, 0
      %p104 = por %p102, %p103
      %p105 = scmp.ne.s32.totalorder %s94, %s97
      %p106 = scmp.eq.s32.totalorder %s21, 1
      %p107 = por %p105, %p106
      %p108 = scmp.ne.s32.totalorder %s97, %s98
      %p109 = scmp.eq.s32.totalorder %s21, 0
      %p110 = por %p108, %p109
      %p111 = scmp.ne.s32.totalorder %s97, %s98
      %p112 = scmp.eq.s32.totalorder %s22, 1
      %p113 = por %p111, %p112
      %p115 = scmp.ne.s32.totalorder %s98, %s114
      %p116 = scmp.eq.s32.totalorder %s22, 0
      %p117 = por %p115, %p116
      %p118 = scmp.le.s32.totalorder 1, %s16
      %p119 = scmp.lt.s32.totalorder %s16, 3
      %p120 = pnand %p118, %p119
      %p121 = pneg %p120
      // Predicated region
      $region9: #{causal_self_attention.5} parent=5 // pred_check
        _
      $region10: #{causal_self_attention.5} parent=5 // pred_check_branch
        %123 = sbr.rel (%p120) target = $region12
      $region11: #{causal_self_attention.5} parent=5 // pred_region
        %s124 = ssub.s32 %s16, 1
        // Predicated region
        $region13: #{causal_self_attention.5} parent=11 // pred_check
          %p125 = pneg %p63
        $region14: #{causal_self_attention.5} parent=11 // pred_check_branch
          %127 = sbr.rel (%p125) target = $region16
        $region15: #{causal_self_attention.5} parent=11 // pred_region
          %s129 = ssub.s32 4096, 4096
          %130 = vsyncadd [#allocation6], %s129
          %s131 = sshll.u32 [#allocation5], 4
          %s132 = int_to_ptr.vmem [resolvable:$true] %s131
          %137 = dma.hbm_to_vmem [thread:$0]  %s1, 4096, %s132, [#allocation6], 128, 128, 8
        $region16: #{causal_self_attention.5} parent=11 // pred_fallthru
          _
        // Predicated region
        $region17: #{causal_self_attention.5} parent=11 // pred_check
          %p138 = pneg %p84
        $region18: #{causal_self_attention.5} parent=11 // pred_check_branch
          %140 = sbr.rel (%p138) target = $region20
        $region19: #{causal_self_attention.5} parent=11 // pred_region
          %s142 = ssub.s32 32, 32
          %143 = vsyncadd [#allocation6], %s142
          %s145 = sshll.u32 [#allocation7], 4
          %s146 = int_to_ptr.vmem [resolvable:$true] %s145
          %148 = dma.hbm_to_vmem [thread:$0]  %s2, 32, %s146, [#allocation6]
        $region20: #{causal_self_attention.5} parent=11 // pred_fallthru
          _
      $region12: #{causal_self_attention.5} parent=5 // pred_fallthru
        _
      %p149 = scmp.lt.s32.totalorder %s16, 2
      // Predicated region
      $region21: #{causal_self_attention.5} parent=5 // pred_check
        %p150 = pneg %p149
      $region22: #{causal_self_attention.5} parent=5 // pred_check_branch
        %152 = sbr.rel (%p150) target = $region24
      $region23: #{causal_self_attention.5} parent=5 // pred_region
        // Predicated region
        $region25: #{causal_self_attention.5} parent=23 // pred_check
          %p153 = pneg %p36
        $region26: #{causal_self_attention.5} parent=23 // pred_check_branch
          %155 = sbr.rel (%p153) target = $region28
        $region27: #{causal_self_attention.5} parent=23 // pred_region
          %s156 = sand.u32 %s26, 1
          %s157 = scalar_lea.sflag [#allocation3], %s156
          %s158 = sand.u32 %s26, 1
          %s159 = smul.addr %s158, 256
          %s160 = scalar_lea.vmem [#allocation2], %s159
          %s161 = smul.u32 32, %s16
          %s163 = ssub.s32 4096, 4096
          %164 = vsyncadd %s157, %s163
          %s165 = smul.addr %s161, 2
          %s166 = smul.addr %s165, 64
          %s167 = scalar_lea.hbm %s0, %s166
          %s168 = sshll.u32 %s160, 4
          %s169 = int_to_ptr.vmem [resolvable:$true] %s168
          %174 = dma.hbm_to_vmem [thread:$0]  %s167, 4096, %s169, %s157, 128, 128, 8
        $region28: #{causal_self_attention.5} parent=23 // pred_fallthru
          _
      $region24: #{causal_self_attention.5} parent=5 // pred_fallthru
        _
      %p175 = scmp.le.s32.totalorder 1, %s16
      %p176 = scmp.lt.s32.totalorder %s16, 3
      %p177 = pnand %p175, %p176
      %p178 = pneg %p177
      // Predicated region
      $region29: #{causal_self_attention.5} parent=5 // pred_check
        _
      $region30: #{causal_self_attention.5} parent=5 // pred_check_branch
        %180 = sbr.rel (%p177) target = $region32
      $region31: #{causal_self_attention.5} parent=5 // pred_region
        %s181 = ssub.s32 %s16, 1
        %s182 = sand.u32 %s29, 1
        %s183 = scalar_lea.sflag [#allocation3], %s182
        %s184 = sand.u32 %s29, 1
        %s185 = smul.addr %s184, 256
        %s186 = scalar_lea.vmem [#allocation2], %s185
        // Predicated region
        $region33: #{causal_self_attention.5} parent=31 // pred_check
          %p187 = pneg %p42
        $region34: #{causal_self_attention.5} parent=31 // pred_check_branch
          %189 = sbr.rel (%p187) target = $region36
        $region35: #{causal_self_attention.5} parent=31 // pred_region
          %190 = dma.done %s183, 4096
        $region36: #{causal_self_attention.5} parent=31 // pred_fallthru
          _
        // Predicated region
        $region37: #{causal_self_attention.5} parent=31 // pred_check
          %p191 = pneg %p63
        $region38: #{causal_self_attention.5} parent=31 // pred_check_branch
          %193 = sbr.rel (%p191) target = $region40
        $region39: #{causal_self_attention.5} parent=31 // pred_region
          %194 = dma.done [#allocation6], 4096
        $region40: #{causal_self_attention.5} parent=31 // pred_fallthru
          _
        // Predicated region
        $region41: #{causal_self_attention.5} parent=31 // pred_check
          %p195 = pneg %p84
        $region42: #{causal_self_attention.5} parent=31 // pred_check_branch
          %197 = sbr.rel (%p195) target = $region44
        $region43: #{causal_self_attention.5} parent=31 // pred_region
          %198 = dma.done [#allocation6], 32
        $region44: #{causal_self_attention.5} parent=31 // pred_fallthru
          _
        %s199 = sand.u32 %s29, 1
        %s200 = scalar_lea.sflag [#allocation3], %s199
        %s201 = sand.u32 %s29, 1
        %s202 = smul.addr %s201, 256
        %s203 = scalar_lea.vmem [#allocation2], %s202
        %p204 = pneg %p42
        %p205 = pneg %p39
        %p206 = pneg %p63
        %p207 = pneg %p60
        %p208 = pneg %p84
        %p209 = pneg %p81
        %p210 = pneg %p110
        %p211 = pneg %p107
        %s212 = sand.u32 %s97, 1
        %s213 = scalar_lea.sflag [#allocation4], %s212
        %s214 = sand.u32 %s97, 1
        %s215 = smul.addr %s214, 512
        %s216 = scalar_lea.vmem [#allocation8], %s215
        %s217 = smul.u32 32, %s21
        %s218 = smul.u32 32, %s21
        %v219 = vld [vmem:[%s186] sm:$0xff]
        %v220 = vld [vmem:[%s186 + $0x8] sm:$0xff]
        %v221 = vld [vmem:[%s186 + $0x10] sm:$0xff]
        %v222 = vld [vmem:[%s186 + $0x18] sm:$0xff]
        %v223 = vld [vmem:[%s186 + $0x20] sm:$0xff]
        %v224 = vld [vmem:[%s186 + $0x28] sm:$0xff]
        %v225 = vld [vmem:[%s186 + $0x30] sm:$0xff]
        %v226 = vld [vmem:[%s186 + $0x38] sm:$0xff]
        %v227 = vld [vmem:[%s186 + $0x40] sm:$0xff]
        %v228 = vld [vmem:[%s186 + $0x48] sm:$0xff]
        %v229 = vld [vmem:[%s186 + $0x50] sm:$0xff]
        %v230 = vld [vmem:[%s186 + $0x58] sm:$0xff]
        %v231 = vld [vmem:[%s186 + $0x60] sm:$0xff]
        %v232 = vld [vmem:[%s186 + $0x68] sm:$0xff]
        %v233 = vld [vmem:[%s186 + $0x70] sm:$0xff]
        %v234 = vld [vmem:[%s186 + $0x78] sm:$0xff]
        %v235 = vld [vmem:[%s186 + $0x80] sm:$0xff]
        %v236 = vld [vmem:[%s186 + $0x88] sm:$0xff]
        %v237 = vld [vmem:[%s186 + $0x90] sm:$0xff]
        %v238 = vld [vmem:[%s186 + $0x98] sm:$0xff]
        %v239 = vld [vmem:[%s186 + $0xa0] sm:$0xff]
        %v240 = vld [vmem:[%s186 + $0xa8] sm:$0xff]
        %v241 = vld [vmem:[%s186 + $0xb0] sm:$0xff]
        %v242 = vld [vmem:[%s186 + $0xb8] sm:$0xff]
        %v243 = vld [vmem:[%s186 + $0xc0] sm:$0xff]
        %v244 = vld [vmem:[%s186 + $0xc8] sm:$0xff]
        %v245 = vld [vmem:[%s186 + $0xd0] sm:$0xff]
        %v246 = vld [vmem:[%s186 + $0xd8] sm:$0xff]
        %v247 = vld [vmem:[%s186 + $0xe0] sm:$0xff]
        %v248 = vld [vmem:[%s186 + $0xe8] sm:$0xff]
        %v249 = vld [vmem:[%s186 + $0xf0] sm:$0xff]
        %v250 = vld [vmem:[%s186 + $0xf8] sm:$0xff]
        %v251 = vld [vmem:[#allocation5] sm:$0xff]
        %v252 = vld [vmem:[#allocation5 + $0x8] sm:$0xff]
        %v253 = vld [vmem:[#allocation5 + $0x10] sm:$0xff]
        %v254 = vld [vmem:[#allocation5 + $0x18] sm:$0xff]
        %v255 = vld [vmem:[#allocation5 + $0x20] sm:$0xff]
        %v256 = vld [vmem:[#allocation5 + $0x28] sm:$0xff]
        %v257 = vld [vmem:[#allocation5 + $0x30] sm:$0xff]
        %v258 = vld [vmem:[#allocation5 + $0x38] sm:$0xff]
        %v259 = vld [vmem:[#allocation5 + $0x40] sm:$0xff]
        %v260 = vld [vmem:[#allocation5 + $0x48] sm:$0xff]
        %v261 = vld [vmem:[#allocation5 + $0x50] sm:$0xff]
        %v262 = vld [vmem:[#allocation5 + $0x58] sm:$0xff]
        %v263 = vld [vmem:[#allocation5 + $0x60] sm:$0xff]
        %v264 = vld [vmem:[#allocation5 + $0x68] sm:$0xff]
        %v265 = vld [vmem:[#allocation5 + $0x70] sm:$0xff]
        %v266 = vld [vmem:[#allocation5 + $0x78] sm:$0xff]
        %v267 = vld [vmem:[#allocation5 + $0x80] sm:$0xff]
        %v268 = vld [vmem:[#allocation5 + $0x88] sm:$0xff]
        %v269 = vld [vmem:[#allocation5 + $0x90] sm:$0xff]
        %v270 = vld [vmem:[#allocation5 + $0x98] sm:$0xff]
        %v271 = vld [vmem:[#allocation5 + $0xa0] sm:$0xff]
        %v272 = vld [vmem:[#allocation5 + $0xa8] sm:$0xff]
        %v273 = vld [vmem:[#allocation5 + $0xb0] sm:$0xff]
        %v274 = vld [vmem:[#allocation5 + $0xb8] sm:$0xff]
        %v275 = vld [vmem:[#allocation5 + $0xc0] sm:$0xff]
        %v276 = vld [vmem:[#allocation5 + $0xc8] sm:$0xff]
        %v277 = vld [vmem:[#allocation5 + $0xd0] sm:$0xff]
        %v278 = vld [vmem:[#allocation5 + $0xd8] sm:$0xff]
        %v279 = vld [vmem:[#allocation5 + $0xe0] sm:$0xff]
        %v280 = vld [vmem:[#allocation5 + $0xe8] sm:$0xff]
        %v281 = vld [vmem:[#allocation5 + $0xf0] sm:$0xff]
        %v282 = vld [vmem:[#allocation5 + $0xf8] sm:$0xff]
        %v283 = vld [vmem:[#allocation7] sm:$0x3]
        %v285 = vlaneseq
        %v286 = vshrl.u32 %v285, 7
        %v287 = vsub.s32 0, %v286
        %v288 = vrot.slane %v283, %v287
        %v289 = vlaneseq
        %v290 = vshrl.u32 %v289, 7
        %v291 = vsub.s32 1, %v290
        %v292 = vrot.slane %v283, %v291
        %v327 = vunpack.c.l.b16 %v219
        %v328 = vunpack.c.h.b16 %v219
        %v329 = vunpack.c.l.b16 %v220
        %v330 = vunpack.c.h.b16 %v220
        %v331 = vunpack.c.l.b16 %v221
        %v332 = vunpack.c.h.b16 %v221
        %v333 = vunpack.c.l.b16 %v222
        %v334 = vunpack.c.h.b16 %v222
        %v335 = vunpack.c.l.b16 %v223
        %v336 = vunpack.c.h.b16 %v223
        %v337 = vunpack.c.l.b16 %v224
        %v338 = vunpack.c.h.b16 %v224
        %v339 = vunpack.c.l.b16 %v225
        %v340 = vunpack.c.h.b16 %v225
        %v341 = vunpack.c.l.b16 %v226
        %v342 = vunpack.c.h.b16 %v226
        %v343 = vunpack.c.l.b16 %v227
        %v344 = vunpack.c.h.b16 %v227
        %v345 = vunpack.c.l.b16 %v228
        %v346 = vunpack.c.h.b16 %v228
        %v347 = vunpack.c.l.b16 %v229
        %v348 = vunpack.c.h.b16 %v229
        %v349 = vunpack.c.l.b16 %v230
        %v350 = vunpack.c.h.b16 %v230
        %v351 = vunpack.c.l.b16 %v231
        %v352 = vunpack.c.h.b16 %v231
        %v353 = vunpack.c.l.b16 %v232
        %v354 = vunpack.c.h.b16 %v232
        %v355 = vunpack.c.l.b16 %v233
        %v356 = vunpack.c.h.b16 %v233
        %v357 = vunpack.c.l.b16 %v234
        %v358 = vunpack.c.h.b16 %v234
        %v359 = vunpack.c.l.b16 %v235
        %v360 = vunpack.c.h.b16 %v235
        %v361 = vunpack.c.l.b16 %v236
        %v362 = vunpack.c.h.b16 %v236
        %v363 = vunpack.c.l.b16 %v237
        %v364 = vunpack.c.h.b16 %v237
        %v365 = vunpack.c.l.b16 %v238
        %v366 = vunpack.c.h.b16 %v238
        %v367 = vunpack.c.l.b16 %v239
        %v368 = vunpack.c.h.b16 %v239
        %v369 = vunpack.c.l.b16 %v240
        %v370 = vunpack.c.h.b16 %v240
        %v371 = vunpack.c.l.b16 %v241
        %v372 = vunpack.c.h.b16 %v241
        %v373 = vunpack.c.l.b16 %v242
        %v374 = vunpack.c.h.b16 %v242
        %v375 = vunpack.c.l.b16 %v243
        %v376 = vunpack.c.h.b16 %v243
        %v377 = vunpack.c.l.b16 %v244
        %v378 = vunpack.c.h.b16 %v244
        %v379 = vunpack.c.l.b16 %v245
        %v380 = vunpack.c.h.b16 %v245
        %v381 = vunpack.c.l.b16 %v246
        %v382 = vunpack.c.h.b16 %v246
        %v383 = vunpack.c.l.b16 %v247
        %v384 = vunpack.c.h.b16 %v247
        %v385 = vunpack.c.l.b16 %v248
        %v386 = vunpack.c.h.b16 %v248
        %v387 = vunpack.c.l.b16 %v249
        %v388 = vunpack.c.h.b16 %v249
        %v389 = vunpack.c.l.b16 %v250
        %v390 = vunpack.c.h.b16 %v250
        %v391 = vpack.c.b16 %v329, %v327
        %v392 = vpack.c.b16 %v330, %v328
        %v393 = vpack.c.b16 %v333, %v331
        %v394 = vpack.c.b16 %v334, %v332
        %v395 = vpack.c.b16 %v337, %v335
        %v396 = vpack.c.b16 %v338, %v336
        %v397 = vpack.c.b16 %v341, %v339
        %v398 = vpack.c.b16 %v342, %v340
        %v399 = vpack.c.b16 %v345, %v343
        %v400 = vpack.c.b16 %v346, %v344
        %v401 = vpack.c.b16 %v349, %v347
        %v402 = vpack.c.b16 %v350, %v348
        %v403 = vpack.c.b16 %v353, %v351
        %v404 = vpack.c.b16 %v354, %v352
        %v405 = vpack.c.b16 %v357, %v355
        %v406 = vpack.c.b16 %v358, %v356
        %v407 = vpack.c.b16 %v361, %v359
        %v408 = vpack.c.b16 %v362, %v360
        %v409 = vpack.c.b16 %v365, %v363
        %v410 = vpack.c.b16 %v366, %v364
        %v411 = vpack.c.b16 %v369, %v367
        %v412 = vpack.c.b16 %v370, %v368
        %v413 = vpack.c.b16 %v373, %v371
        %v414 = vpack.c.b16 %v374, %v372
        %v415 = vpack.c.b16 %v377, %v375
        %v416 = vpack.c.b16 %v378, %v376
        %v417 = vpack.c.b16 %v381, %v379
        %v418 = vpack.c.b16 %v382, %v380
        %v419 = vpack.c.b16 %v385, %v383
        %v420 = vpack.c.b16 %v386, %v384
        %v421 = vpack.c.b16 %v389, %v387
        %v422 = vpack.c.b16 %v390, %v388
        %v487 = vunpack.c.l.b16 %v251
        %v488 = vunpack.c.h.b16 %v251
        %v489 = vunpack.c.l.b16 %v252
        %v490 = vunpack.c.h.b16 %v252
        %v491 = vunpack.c.l.b16 %v253
        %v492 = vunpack.c.h.b16 %v253
        %v493 = vunpack.c.l.b16 %v254
        %v494 = vunpack.c.h.b16 %v254
        %v495 = vunpack.c.l.b16 %v255
        %v496 = vunpack.c.h.b16 %v255
        %v497 = vunpack.c.l.b16 %v256
        %v498 = vunpack.c.h.b16 %v256
        %v499 = vunpack.c.l.b16 %v257
        %v500 = vunpack.c.h.b16 %v257
        %v501 = vunpack.c.l.b16 %v258
        %v502 = vunpack.c.h.b16 %v258
        %v503 = vunpack.c.l.b16 %v259
        %v504 = vunpack.c.h.b16 %v259
        %v505 = vunpack.c.l.b16 %v260
        %v506 = vunpack.c.h.b16 %v260
        %v507 = vunpack.c.l.b16 %v261
        %v508 = vunpack.c.h.b16 %v261
        %v509 = vunpack.c.l.b16 %v262
        %v510 = vunpack.c.h.b16 %v262
        %v511 = vunpack.c.l.b16 %v263
        %v512 = vunpack.c.h.b16 %v263
        %v513 = vunpack.c.l.b16 %v264
        %v514 = vunpack.c.h.b16 %v264
        %v515 = vunpack.c.l.b16 %v265
        %v516 = vunpack.c.h.b16 %v265
        %v517 = vunpack.c.l.b16 %v266
        %v518 = vunpack.c.h.b16 %v266
        %v519 = vunpack.c.l.b16 %v267
        %v520 = vunpack.c.h.b16 %v267
        %v521 = vunpack.c.l.b16 %v268
        %v522 = vunpack.c.h.b16 %v268
        %v523 = vunpack.c.l.b16 %v269
        %v524 = vunpack.c.h.b16 %v269
        %v525 = vunpack.c.l.b16 %v270
        %v526 = vunpack.c.h.b16 %v270
        %v527 = vunpack.c.l.b16 %v271
        %v528 = vunpack.c.h.b16 %v271
        %v529 = vunpack.c.l.b16 %v272
        %v530 = vunpack.c.h.b16 %v272
        %v531 = vunpack.c.l.b16 %v273
        %v532 = vunpack.c.h.b16 %v273
        %v533 = vunpack.c.l.b16 %v274
        %v534 = vunpack.c.h.b16 %v274
        %v535 = vunpack.c.l.b16 %v275
        %v536 = vunpack.c.h.b16 %v275
        %v537 = vunpack.c.l.b16 %v276
        %v538 = vunpack.c.h.b16 %v276
        %v539 = vunpack.c.l.b16 %v277
        %v540 = vunpack.c.h.b16 %v277
        %v541 = vunpack.c.l.b16 %v278
        %v542 = vunpack.c.h.b16 %v278
        %v543 = vunpack.c.l.b16 %v279
        %v544 = vunpack.c.h.b16 %v279
        %v545 = vunpack.c.l.b16 %v280
        %v546 = vunpack.c.h.b16 %v280
        %v547 = vunpack.c.l.b16 %v281
        %v548 = vunpack.c.h.b16 %v281
        %v549 = vunpack.c.l.b16 %v282
        %v550 = vunpack.c.h.b16 %v282
        %v551 = vpack.c.b16 %v489, %v487
        %v552 = vpack.c.b16 %v490, %v488
        %v553 = vpack.c.b16 %v493, %v491
        %v554 = vpack.c.b16 %v494, %v492
        %v555 = vpack.c.b16 %v497, %v495
        %v556 = vpack.c.b16 %v498, %v496
        %v557 = vpack.c.b16 %v501, %v499
        %v558 = vpack.c.b16 %v502, %v500
        %v559 = vpack.c.b16 %v505, %v503
        %v560 = vpack.c.b16 %v506, %v504
        %v561 = vpack.c.b16 %v509, %v507
        %v562 = vpack.c.b16 %v510, %v508
        %v563 = vpack.c.b16 %v513, %v511
        %v564 = vpack.c.b16 %v514, %v512
        %v565 = vpack.c.b16 %v517, %v515
        %v566 = vpack.c.b16 %v518, %v516
        %v567 = vpack.c.b16 %v521, %v519
        %v568 = vpack.c.b16 %v522, %v520
        %v569 = vpack.c.b16 %v525, %v523
        %v570 = vpack.c.b16 %v526, %v524
        %v571 = vpack.c.b16 %v529, %v527
        %v572 = vpack.c.b16 %v530, %v528
        %v573 = vpack.c.b16 %v533, %v531
        %v574 = vpack.c.b16 %v534, %v532
        %v575 = vpack.c.b16 %v537, %v535
        %v576 = vpack.c.b16 %v538, %v536
        %v577 = vpack.c.b16 %v541, %v539
        %v578 = vpack.c.b16 %v542, %v540
        %v579 = vpack.c.b16 %v545, %v543
        %v580 = vpack.c.b16 %v546, %v544
        %v581 = vpack.c.b16 %v549, %v547
        %v582 = vpack.c.b16 %v550, %v548
        %615 = vmatprep.subr.bf16.mxu0 %v552
        %616 = vmatpush1.bf16.msra.mxu0 %v551
        %617 = vmatprep.subr.bf16.mxu0 %v554
        %618 = vmatpush1.bf16.msra.mxu0 %v553
        %619 = vmatprep.subr.bf16.mxu0 %v556
        %620 = vmatpush1.bf16.msra.mxu0 %v555
        %621 = vmatprep.subr.bf16.mxu0 %v558
        %622 = vmatpush1.bf16.msra.mxu0 %v557
        %623 = vmatprep.subr.bf16.mxu0 %v560
        %624 = vmatpush1.bf16.msra.mxu0 %v559
        %625 = vmatprep.subr.bf16.mxu0 %v562
        %626 = vmatpush1.bf16.msra.mxu0 %v561
        %627 = vmatprep.subr.bf16.mxu0 %v564
        %628 = vmatpush1.bf16.msra.mxu0 %v563
        %629 = vmatprep.subr.bf16.mxu0 %v566
        %630 = vmatpush1.bf16.msra.mxu0 %v565
        %631 = vmatprep.subr.bf16.mxu0 %v568
        %632 = vmatpush1.bf16.msra.mxu0 %v567
        %633 = vmatprep.subr.bf16.mxu0 %v570
        %634 = vmatpush1.bf16.msra.mxu0 %v569
        %635 = vmatprep.subr.bf16.mxu0 %v572
        %636 = vmatpush1.bf16.msra.mxu0 %v571
        %637 = vmatprep.subr.bf16.mxu0 %v574
        %638 = vmatpush1.bf16.msra.mxu0 %v573
        %639 = vmatprep.subr.bf16.mxu0 %v576
        %640 = vmatpush1.bf16.msra.mxu0 %v575
        %641 = vmatprep.subr.bf16.mxu0 %v578
        %642 = vmatpush1.bf16.msra.mxu0 %v577
        %643 = vmatprep.subr.bf16.mxu0 %v580
        %644 = vmatpush1.bf16.msra.mxu0 %v579
        %645 = vmatprep.subr.bf16.mxu0 %v582
        %646 = vmatpush1.bf16.msra.mxu0 %v581
        %647 = vmatprep.mubr.bf16.mxu0 %v392
        %648 = vmatmul.mubr.bf16.gmra.mrb[0].mxu0 %v391
        %v649 = vpop.f32.mrb[0].mxu0
        %v650 = vadd.f32 %v288, %v649
        %v651 = vpop.f32.mrb[0].mxu0
        %v652 = vadd.f32 %v292, %v651
        %v653 = vpop.f32.mrb[0].mxu0
        %v654 = vadd.f32 %v288, %v653
        %v655 = vpop.f32.mrb[0].mxu0
        %v656 = vadd.f32 %v292, %v655
        %657 = vmatprep.mubr.bf16.mxu0 %v394
        %658 = vmatmul.mubr.bf16.gmra.mrb[0].mxu0 %v393
        %v659 = vpop.f32.mrb[0].mxu0
        %v660 = vadd.f32 %v288, %v659
        %v661 = vpop.f32.mrb[0].mxu0
        %v662 = vadd.f32 %v292, %v661
        %v663 = vpop.f32.mrb[0].mxu0
        %v664 = vadd.f32 %v288, %v663
        %v665 = vpop.f32.mrb[0].mxu0
        %v666 = vadd.f32 %v292, %v665
        %667 = vmatprep.mubr.bf16.mxu0 %v396
        %668 = vmatmul.mubr.bf16.gmra.mrb[0].mxu0 %v395
        %v669 = vpop.f32.mrb[0].mxu0
        %v670 = vadd.f32 %v288, %v669
        %v671 = vpop.f32.mrb[0].mxu0
        %v672 = vadd.f32 %v292, %v671
        %v673 = vpop.f32.mrb[0].mxu0
        %v674 = vadd.f32 %v288, %v673
        %v675 = vpop.f32.mrb[0].mxu0
        %v676 = vadd.f32 %v292, %v675
        %677 = vmatprep.mubr.bf16.mxu0 %v398
        %678 = vmatmul.mubr.bf16.gmra.mrb[0].mxu0 %v397
        %v679 = vpop.f32.mrb[0].mxu0
        %v680 = vadd.f32 %v288, %v679
        %v681 = vpop.f32.mrb[0].mxu0
        %v682 = vadd.f32 %v292, %v681
        %v683 = vpop.f32.mrb[0].mxu0
        %v684 = vadd.f32 %v288, %v683
        %v685 = vpop.f32.mrb[0].mxu0
        %v686 = vadd.f32 %v292, %v685
        %687 = vmatprep.mubr.bf16.mxu0 %v400
        %688 = vmatmul.mubr.bf16.gmra.mrb[0].mxu0 %v399
        %v689 = vpop.f32.mrb[0].mxu0
        %v690 = vadd.f32 %v288, %v689
        %v691 = vpop.f32.mrb[0].mxu0
        %v692 = vadd.f32 %v292, %v691
        %v693 = vpop.f32.mrb[0].mxu0
        %v694 = vadd.f32 %v288, %v693
        %v695 = vpop.f32.mrb[0].mxu0
        %v696 = vadd.f32 %v292, %v695
        %697 = vmatprep.mubr.bf16.mxu0 %v402
        %698 = vmatmul.mubr.bf16.gmra.mrb[0].mxu0 %v401
        %v699 = vpop.f32.mrb[0].mxu0
        %v700 = vadd.f32 %v288, %v699
        %v701 = vpop.f32.mrb[0].mxu0
        %v702 = vadd.f32 %v292, %v701
        %v703 = vpop.f32.mrb[0].mxu0
        %v704 = vadd.f32 %v288, %v703
        %v705 = vpop.f32.mrb[0].mxu0
        %v706 = vadd.f32 %v292, %v705
        %707 = vmatprep.mubr.bf16.mxu0 %v404
        %708 = vmatmul.mubr.bf16.gmra.mrb[0].mxu0 %v403
        %v709 = vpop.f32.mrb[0].mxu0
        %v710 = vadd.f32 %v288, %v709
        %v711 = vpop.f32.mrb[0].mxu0
        %v712 = vadd.f32 %v292, %v711
        %v713 = vpop.f32.mrb[0].mxu0
        %v714 = vadd.f32 %v288, %v713
        %v715 = vpop.f32.mrb[0].mxu0
        %v716 = vadd.f32 %v292, %v715
        %717 = vmatprep.mubr.bf16.mxu0 %v406
        %718 = vmatmul.mubr.bf16.gmra.mrb[0].mxu0 %v405
        %v719 = vpop.f32.mrb[0].mxu0
        %v720 = vadd.f32 %v288, %v719
        %v721 = vpop.f32.mrb[0].mxu0
        %v722 = vadd.f32 %v292, %v721
        %v723 = vpop.f32.mrb[0].mxu0
        %v724 = vadd.f32 %v288, %v723
        %v725 = vpop.f32.mrb[0].mxu0
        %v726 = vadd.f32 %v292, %v725
        %727 = vmatprep.mubr.bf16.mxu0 %v408
        %728 = vmatmul.mubr.bf16.gmra.mrb[0].mxu0 %v407
        %v729 = vpop.f32.mrb[0].mxu0
        %v730 = vadd.f32 %v288, %v729
        %v731 = vpop.f32.mrb[0].mxu0
        %v732 = vadd.f32 %v292, %v731
        %v733 = vpop.f32.mrb[0].mxu0
        %v734 = vadd.f32 %v288, %v733
        %v735 = vpop.f32.mrb[0].mxu0
        %v736 = vadd.f32 %v292, %v735
        %737 = vmatprep.mubr.bf16.mxu0 %v410
        %738 = vmatmul.mubr.bf16.gmra.mrb[0].mxu0 %v409
        %v739 = vpop.f32.mrb[0].mxu0
        %v740 = vadd.f32 %v288, %v739
        %v741 = vpop.f32.mrb[0].mxu0
        %v742 = vadd.f32 %v292, %v741
        %v743 = vpop.f32.mrb[0].mxu0
        %v744 = vadd.f32 %v288, %v743
        %v745 = vpop.f32.mrb[0].mxu0
        %v746 = vadd.f32 %v292, %v745
        %747 = vmatprep.mubr.bf16.mxu0 %v412
        %748 = vmatmul.mubr.bf16.gmra.mrb[0].mxu0 %v411
        %v749 = vpop.f32.mrb[0].mxu0
        %v750 = vadd.f32 %v288, %v749
        %v751 = vpop.f32.mrb[0].mxu0
        %v752 = vadd.f32 %v292, %v751
        %v753 = vpop.f32.mrb[0].mxu0
        %v754 = vadd.f32 %v288, %v753
        %v755 = vpop.f32.mrb[0].mxu0
        %v756 = vadd.f32 %v292, %v755
        %757 = vmatprep.mubr.bf16.mxu0 %v414
        %758 = vmatmul.mubr.bf16.gmra.mrb[0].mxu0 %v413
        %v759 = vpop.f32.mrb[0].mxu0
        %v760 = vadd.f32 %v288, %v759
        %v761 = vpop.f32.mrb[0].mxu0
        %v762 = vadd.f32 %v292, %v761
        %v763 = vpop.f32.mrb[0].mxu0
        %v764 = vadd.f32 %v288, %v763
        %v765 = vpop.f32.mrb[0].mxu0
        %v766 = vadd.f32 %v292, %v765
        %767 = vmatprep.mubr.bf16.mxu0 %v416
        %768 = vmatmul.mubr.bf16.gmra.mrb[0].mxu0 %v415
        %v769 = vpop.f32.mrb[0].mxu0
        %v770 = vadd.f32 %v288, %v769
        %v771 = vpop.f32.mrb[0].mxu0
        %v772 = vadd.f32 %v292, %v771
        %v773 = vpop.f32.mrb[0].mxu0
        %v774 = vadd.f32 %v288, %v773
        %v775 = vpop.f32.mrb[0].mxu0
        %v776 = vadd.f32 %v292, %v775
        %777 = vmatprep.mubr.bf16.mxu0 %v418
        %778 = vmatmul.mubr.bf16.gmra.mrb[0].mxu0 %v417
        %v779 = vpop.f32.mrb[0].mxu0
        %v780 = vadd.f32 %v288, %v779
        %v781 = vpop.f32.mrb[0].mxu0
        %v782 = vadd.f32 %v292, %v781
        %v783 = vpop.f32.mrb[0].mxu0
        %v784 = vadd.f32 %v288, %v783
        %v785 = vpop.f32.mrb[0].mxu0
        %v786 = vadd.f32 %v292, %v785
        %787 = vmatprep.mubr.bf16.mxu0 %v420
        %788 = vmatmul.mubr.bf16.gmra.mrb[0].mxu0 %v419
        %v789 = vpop.f32.mrb[0].mxu0
        %v790 = vadd.f32 %v288, %v789
        %v791 = vpop.f32.mrb[0].mxu0
        %v792 = vadd.f32 %v292, %v791
        %v793 = vpop.f32.mrb[0].mxu0
        %v794 = vadd.f32 %v288, %v793
        %v795 = vpop.f32.mrb[0].mxu0
        %v796 = vadd.f32 %v292, %v795
        %797 = vmatprep.mubr.bf16.mxu0 %v422
        %798 = vmatmul.mubr.bf16.gmra.mrb[0].mxu0 %v421
        %v799 = vpop.f32.mrb[0].mxu0
        %v800 = vadd.f32 %v288, %v799
        %v801 = vpop.f32.mrb[0].mxu0
        %v802 = vadd.f32 %v292, %v801
        %v803 = vpop.f32.mrb[0].mxu0
        %v804 = vadd.f32 %v288, %v803
        %v805 = vpop.f32.mrb[0].mxu0
        %v806 = vadd.f32 %v292, %v805
        %807 = vdwg.mxu0
        %808 = vst [vmem:[%s216] sm:$0xff] %v650
        %809 = vst [vmem:[%s216 + $0x8] sm:$0xff] %v652
        %810 = vst [vmem:[%s216 + $0x10] sm:$0xff] %v654
        %811 = vst [vmem:[%s216 + $0x18] sm:$0xff] %v656
        %812 = vst [vmem:[%s216 + $0x20] sm:$0xff] %v660
        %813 = vst [vmem:[%s216 + $0x28] sm:$0xff] %v662
        %814 = vst [vmem:[%s216 + $0x30] sm:$0xff] %v664
        %815 = vst [vmem:[%s216 + $0x38] sm:$0xff] %v666
        %816 = vst [vmem:[%s216 + $0x40] sm:$0xff] %v670
        %817 = vst [vmem:[%s216 + $0x48] sm:$0xff] %v672
        %818 = vst [vmem:[%s216 + $0x50] sm:$0xff] %v674
        %819 = vst [vmem:[%s216 + $0x58] sm:$0xff] %v676
        %820 = vst [vmem:[%s216 + $0x60] sm:$0xff] %v680
        %821 = vst [vmem:[%s216 + $0x68] sm:$0xff] %v682
        %822 = vst [vmem:[%s216 + $0x70] sm:$0xff] %v684
        %823 = vst [vmem:[%s216 + $0x78] sm:$0xff] %v686
        %824 = vst [vmem:[%s216 + $0x80] sm:$0xff] %v690
        %825 = vst [vmem:[%s216 + $0x88] sm:$0xff] %v692
        %826 = vst [vmem:[%s216 + $0x90] sm:$0xff] %v694
        %827 = vst [vmem:[%s216 + $0x98] sm:$0xff] %v696
        %828 = vst [vmem:[%s216 + $0xa0] sm:$0xff] %v700
        %829 = vst [vmem:[%s216 + $0xa8] sm:$0xff] %v702
        %830 = vst [vmem:[%s216 + $0xb0] sm:$0xff] %v704
        %831 = vst [vmem:[%s216 + $0xb8] sm:$0xff] %v706
        %832 = vst [vmem:[%s216 + $0xc0] sm:$0xff] %v710
        %833 = vst [vmem:[%s216 + $0xc8] sm:$0xff] %v712
        %834 = vst [vmem:[%s216 + $0xd0] sm:$0xff] %v714
        %835 = vst [vmem:[%s216 + $0xd8] sm:$0xff] %v716
        %836 = vst [vmem:[%s216 + $0xe0] sm:$0xff] %v720
        %837 = vst [vmem:[%s216 + $0xe8] sm:$0xff] %v722
        %838 = vst [vmem:[%s216 + $0xf0] sm:$0xff] %v724
        %839 = vst [vmem:[%s216 + $0xf8] sm:$0xff] %v726
        %840 = vst [vmem:[%s216 + $0x100] sm:$0xff] %v730
        %841 = vst [vmem:[%s216 + $0x108] sm:$0xff] %v732
        %842 = vst [vmem:[%s216 + $0x110] sm:$0xff] %v734
        %843 = vst [vmem:[%s216 + $0x118] sm:$0xff] %v736
        %844 = vst [vmem:[%s216 + $0x120] sm:$0xff] %v740
        %845 = vst [vmem:[%s216 + $0x128] sm:$0xff] %v742
        %846 = vst [vmem:[%s216 + $0x130] sm:$0xff] %v744
        %847 = vst [vmem:[%s216 + $0x138] sm:$0xff] %v746
        %848 = vst [vmem:[%s216 + $0x140] sm:$0xff] %v750
        %849 = vst [vmem:[%s216 + $0x148] sm:$0xff] %v752
        %850 = vst [vmem:[%s216 + $0x150] sm:$0xff] %v754
        %851 = vst [vmem:[%s216 + $0x158] sm:$0xff] %v756
        %852 = vst [vmem:[%s216 + $0x160] sm:$0xff] %v760
        %853 = vst [vmem:[%s216 + $0x168] sm:$0xff] %v762
        %854 = vst [vmem:[%s216 + $0x170] sm:$0xff] %v764
        %855 = vst [vmem:[%s216 + $0x178] sm:$0xff] %v766
        %856 = vst [vmem:[%s216 + $0x180] sm:$0xff] %v770
        %857 = vst [vmem:[%s216 + $0x188] sm:$0xff] %v772
        %858 = vst [vmem:[%s216 + $0x190] sm:$0xff] %v774
        %859 = vst [vmem:[%s216 + $0x198] sm:$0xff] %v776
        %860 = vst [vmem:[%s216 + $0x1a0] sm:$0xff] %v780
        %861 = vst [vmem:[%s216 + $0x1a8] sm:$0xff] %v782
        %862 = vst [vmem:[%s216 + $0x1b0] sm:$0xff] %v784
        %863 = vst [vmem:[%s216 + $0x1b8] sm:$0xff] %v786
        %864 = vst [vmem:[%s216 + $0x1c0] sm:$0xff] %v790
        %865 = vst [vmem:[%s216 + $0x1c8] sm:$0xff] %v792
        %866 = vst [vmem:[%s216 + $0x1d0] sm:$0xff] %v794
        %867 = vst [vmem:[%s216 + $0x1d8] sm:$0xff] %v796
        %868 = vst [vmem:[%s216 + $0x1e0] sm:$0xff] %v800
        %869 = vst [vmem:[%s216 + $0x1e8] sm:$0xff] %v802
        %870 = vst [vmem:[%s216 + $0x1f0] sm:$0xff] %v804
        %871 = vst [vmem:[%s216 + $0x1f8] sm:$0xff] %v806
        %s872 = sand.u32 %s97, 1
        %s873 = scalar_lea.sflag [#allocation4], %s872
        %s874 = sand.u32 %s97, 1
        %s875 = smul.addr %s874, 512
        %s876 = scalar_lea.vmem [#allocation8], %s875
        // Predicated region
        $region45: #{causal_self_attention.5} parent=31 // pred_check
          %p877 = pneg %p107
        $region46: #{causal_self_attention.5} parent=31 // pred_check_branch
          %879 = sbr.rel (%p877) target = $region48
        $region47: #{causal_self_attention.5} parent=31 // pred_region
          %s880 = smul.u32 32, %s21
          %s882 = ssub.s32 8192, 8192
          %883 = vsyncadd %s873, %s882
          %s884 = smul.addr %s880, 2
          %s885 = smul.addr %s884, 128
          %s886 = scalar_lea.hbm %s3, %s885
          %s887 = sshll.u32 %s876, 4
          %s888 = int_to_ptr.vmem [resolvable:$true] %s887
          %893 = dma.vmem_to_hbm [thread:$0]  %s888, 8192, %s886, %s873, 256, 256, 16
        $region48: #{causal_self_attention.5} parent=31 // pred_fallthru
          _
      $region32: #{causal_self_attention.5} parent=5 // pred_fallthru
        _
      %p894 = scmp.le.s32.totalorder 2, %s16
      // Predicated region
      $region49: #{causal_self_attention.5} parent=5 // pred_check
        %p895 = pneg %p894
      $region50: #{causal_self_attention.5} parent=5 // pred_check_branch
        %897 = sbr.rel (%p895) target = $region52
      $region51: #{causal_self_attention.5} parent=5 // pred_region
        %s898 = ssub.s32 %s16, 2
        // Predicated region
        $region53: #{causal_self_attention.5} parent=51 // pred_check
          %p899 = pneg %p113
        $region54: #{causal_self_attention.5} parent=51 // pred_check_branch
          %901 = sbr.rel (%p899) target = $region56
        $region55: #{causal_self_attention.5} parent=51 // pred_region
          %s902 = sand.u32 %s98, 1
          %s903 = scalar_lea.sflag [#allocation4], %s902
          %s904 = sand.u32 %s98, 1
          %s905 = smul.addr %s904, 512
          %s906 = scalar_lea.vmem [#allocation8], %s905
          %907 = dma.done %s903, 8192
        $region56: #{causal_self_attention.5} parent=51 // pred_fallthru
          _
      $region52: #{causal_self_attention.5} parent=5 // pred_fallthru
        _
    $region6: #{causal_self_attention.5} parent=1 // loop_footer
      %s20 = sadd.s32 1, %s16
    $region7: #{causal_self_attention.5} parent=1 // loop_footer_branch
      %15 = sbr.rel target = $region3
    $region8: #{causal_self_attention.5} parent=1 // loop_exit
      _
    %908 = vsyncpa [#allocation3], 1
    %s909 = scalar_lea.sflag [#allocation3], 1
    %910 = vsyncpa %s909, 1
    %911 = vsyncpa [#allocation6], 1
    %912 = vsyncpa [#allocation4], 1
    %s913 = scalar_lea.sflag [#allocation4], 1
    %914 = vsyncpa %s913, 1

// kernel: causal_self_attention.4
$region0: #{causal_self_attention.4}
  #allocation0 [shape = 'u32[]', space=smem, size = 0x4, offset = 0x4, fixed_abs, tag = 'smem constant byte address 0x4 - core index']
  #allocation1 [shape = 'u32[144,128]{1,0:T(1,128)}', space=vmem, size = 0x12000, scoped, tag = 'internal scratch']
  #allocation2 [shape = 'f32[128,1]{1,0:T(8,128)}', space=vmem, size = 0x10000, scoped, tag = 'scratch operand']
  #allocation3 [shape = 'f32[128,1]{1,0:T(8,128)}', space=vmem, size = 0x10000, scoped, tag = 'scratch operand']
  #allocation4 [shape = 'f32[128,128]{1,0:T(8,128)}', space=vmem, size = 0x10000, scoped, tag = 'scratch operand']
  %s0 = inlined_call_operand.hbm [shape: bf16[2,2,256,128], index: 0, kind: input, shape index: {}]
  %s1 = inlined_call_operand.hbm [shape: bf16[2,2,256,128], index: 1, kind: input, shape index: {}]
  %s2 = inlined_call_operand.hbm [shape: bf16[2,2,256,128], index: 2, kind: input, shape index: {}]
  %s3 = inlined_call_operand.hbm [shape: bf16[2,2,256,128], index: 3, kind: output, shape index: {}]
  %s4 = sld [smem:[#allocation0]]
  $region73: #{causal_self_attention.4} parent=0
    _
  %s6 = ssub.s32 1, %s4
  %s7 = scalar_select 0, %s6, %s4
  $region1: #{causal_self_attention.4} parent=0
    #allocation5 [shape = 'u8[65536]{0}', space=vmem, size = 0x10000, scoped, tag = 'input window, operand 0']
    #allocation6 [shape = 's32[2]{0}', space=sflag, size = 0x8, scoped, tag = 'scoped memory for causal_self_attention.4']
    #allocation7 [shape = 's32[2]{0}', space=sflag, size = 0x8, scoped, tag = 'scoped memory for causal_self_attention.4']
    #allocation8 [shape = 'u8[65536]{0}', space=vmem, size = 0x10000, scoped, tag = 'input window, operand 1']
    #allocation9 [shape = 's32[2]{0}', space=sflag, size = 0x8, scoped, tag = 'scoped memory for causal_self_attention.4']
    #allocation10 [shape = 'u8[65536]{0}', space=vmem, size = 0x10000, scoped, tag = 'input window, operand 2']
    #allocation11 [shape = 'u8[65536]{0}', space=vmem, size = 0x10000, scoped, tag = 'output window, operand 0']
    %8 = vsyncpa [#allocation6], 0
    %s9 = scalar_lea.sflag [#allocation6], 1
    %10 = vsyncpa %s9, 0
    %11 = vsyncpa [#allocation9], 0
    %s12 = scalar_lea.sflag [#allocation9], 1
    %13 = vsyncpa %s12, 0
    %14 = vsyncpa [#allocation7], 0
    %s15 = scalar_lea.sflag [#allocation7], 1
    %16 = vsyncpa %s15, 0
    loop: start=0, step=1, limit=18
    $region2: #{causal_self_attention.4} parent=1 // loop_pre_header
      _
    $region3: #{causal_self_attention.4} parent=1 // loop_header
      %s18 = sphi 0, %s22
      %p19 = scmp.ge.s32.totalorder %s18, 18
      %s25 = sphi 0, %s51
      %s26 = sphi 0, %s47
      %s27 = sphi 0, %s43
      %s28 = sphi 0, %s39
      %s29 = sphi 0, %s25
      %s30 = sphi 0, %s26
      %s31 = sphi 0, %s27
      %s32 = sphi 0, %s28
      %s33 = sphi 0, %s29
      %s34 = sphi 0, %s30
      %s35 = sphi 0, %s31
      %s36 = sphi 0, %s32
      %s58 = sphi 0, %s60
      %s61 = sphi 0, %s58
      %s62 = sphi 0, %s61
      %s78 = sphi 0, %s62
      %s88 = sphi 0, %s90
      %s91 = sphi 0, %s88
      %s92 = sphi 0, %s91
      %s108 = sphi 0, %s92
      %s118 = sphi 0, %s120
      %s121 = sphi 0, %s118
      %s122 = sphi 0, %s121
      %s138 = sphi 0, %s122
      %s148 = sphi 0, %s150
      %s151 = sphi 0, %s148
      %s152 = sphi 0, %s151
      %s168 = sphi 0, %s152
    $region4: #{causal_self_attention.4} parent=1 // loop_header_branch
      %21 = sbr.rel (%p19) target = $region8
    $region5: #{causal_self_attention.4} parent=1 // loop_body
      %s23 = ssub.s32 %s18, 1
      %s24 = ssub.s32 %s18, 2
      %s37 = sadd.s32 1, %s28
      %p38 = scmp.ge.s32.totalorder %s37, 2
      %s39 = scalar_select %p38, 0, %s37
      %s40 = sadd.s32 1, %s27
      %s41 = scalar_select %p38, %s40, %s27
      %p42 = scmp.ge.s32.totalorder %s41, 2
      %s43 = scalar_select %p42, 0, %s41
      %s44 = sadd.s32 1, %s26
      %s45 = scalar_select %p42, %s44, %s26
      %p46 = scmp.ge.s32.totalorder %s45, 2
      %s47 = scalar_select %p46, 0, %s45
      %s48 = sadd.s32 1, %s25
      %s49 = scalar_select %p46, %s48, %s25
      %p50 = scmp.ge.s32.totalorder %s49, 2
      %s51 = scalar_select %p50, 0, %s49
      %s52 = ssub.s32 %s25, %s51
      %s53 = ssub.s32 %s26, %s47
      %s54 = sor.u32 %s52, %s53
      %s55 = ssub.s32 %s27, %s43
      %s56 = sor.u32 %s54, %s55
      %p57 = scmp.eq.s32.totalorder %s56, 0
      %s59 = sadd.s32 %s58, 1
      %s60 = scalar_select %p57, %s58, %s59
      %p63 = pneg %p57
      %p64 = scmp.eq.s32.totalorder %s18, 15
      %p65 = por %p63, %p64
      %p66 = scmp.ne.s32.totalorder %s58, %s61
      %p67 = scmp.eq.s32.totalorder %s18, 0
      %p68 = por %p66, %p67
      %p69 = scmp.ne.s32.totalorder %s58, %s61
      %p70 = scmp.eq.s32.totalorder %s23, 15
      %p71 = por %p69, %p70
      %p72 = scmp.ne.s32.totalorder %s61, %s62
      %p73 = scmp.eq.s32.totalorder %s23, 0
      %p74 = por %p72, %p73
      %p75 = scmp.ne.s32.totalorder %s61, %s62
      %p76 = scmp.eq.s32.totalorder %s24, 15
      %p77 = por %p75, %p76
      %p79 = scmp.ne.s32.totalorder %s62, %s78
      %p80 = scmp.eq.s32.totalorder %s24, 0
      %p81 = por %p79, %p80
      %s82 = ssub.s32 %s25, %s51
      %s83 = ssub.s32 %s26, %s47
      %s84 = sor.u32 %s82, %s83
      %s85 = ssub.s32 %s28, %s39
      %s86 = sor.u32 %s84, %s85
      %p87 = scmp.eq.s32.totalorder %s86, 0
      %s89 = sadd.s32 %s88, 1
      %s90 = scalar_select %p87, %s88, %s89
      %p93 = pneg %p87
      %p94 = scmp.eq.s32.totalorder %s18, 15
      %p95 = por %p93, %p94
      %p96 = scmp.ne.s32.totalorder %s88, %s91
      %p97 = scmp.eq.s32.totalorder %s18, 0
      %p98 = por %p96, %p97
      %p99 = scmp.ne.s32.totalorder %s88, %s91
      %p100 = scmp.eq.s32.totalorder %s23, 15
      %p101 = por %p99, %p100
      %p102 = scmp.ne.s32.totalorder %s91, %s92
      %p103 = scmp.eq.s32.totalorder %s23, 0
      %p104 = por %p102, %p103
      %p105 = scmp.ne.s32.totalorder %s91, %s92
      %p106 = scmp.eq.s32.totalorder %s24, 15
      %p107 = por %p105, %p106
      %p109 = scmp.ne.s32.totalorder %s92, %s108
      %p110 = scmp.eq.s32.totalorder %s24, 0
      %p111 = por %p109, %p110
      %s112 = ssub.s32 %s25, %s51
      %s113 = ssub.s32 %s26, %s47
      %s114 = sor.u32 %s112, %s113
      %s115 = ssub.s32 %s28, %s39
      %s116 = sor.u32 %s114, %s115
      %p117 = scmp.eq.s32.totalorder %s116, 0
      %s119 = sadd.s32 %s118, 1
      %s120 = scalar_select %p117, %s118, %s119
      %p123 = pneg %p117
      %p124 = scmp.eq.s32.totalorder %s18, 15
      %p125 = por %p123, %p124
      %p126 = scmp.ne.s32.totalorder %s118, %s121
      %p127 = scmp.eq.s32.totalorder %s18, 0
      %p128 = por %p126, %p127
      %p129 = scmp.ne.s32.totalorder %s118, %s121
      %p130 = scmp.eq.s32.totalorder %s23, 15
      %p131 = por %p129, %p130
      %p132 = scmp.ne.s32.totalorder %s121, %s122
      %p133 = scmp.eq.s32.totalorder %s23, 0
      %p134 = por %p132, %p133
      %p135 = scmp.ne.s32.totalorder %s121, %s122
      %p136 = scmp.eq.s32.totalorder %s24, 15
      %p137 = por %p135, %p136
      %p139 = scmp.ne.s32.totalorder %s122, %s138
      %p140 = scmp.eq.s32.totalorder %s24, 0
      %p141 = por %p139, %p140
      %s142 = ssub.s32 %s25, %s51
      %s143 = ssub.s32 %s26, %s47
      %s144 = sor.u32 %s142, %s143
      %s145 = ssub.s32 %s27, %s43
      %s146 = sor.u32 %s144, %s145
      %p147 = scmp.eq.s32.totalorder %s146, 0
      %s149 = sadd.s32 %s148, 1
      %s150 = scalar_select %p147, %s148, %s149
      %p153 = pneg %p147
      %p154 = scmp.eq.s32.totalorder %s18, 15
      %p155 = por %p153, %p154
      %p156 = scmp.ne.s32.totalorder %s148, %s151
      %p157 = scmp.eq.s32.totalorder %s18, 0
      %p158 = por %p156, %p157
      %p159 = scmp.ne.s32.totalorder %s148, %s151
      %p160 = scmp.eq.s32.totalorder %s23, 15
      %p161 = por %p159, %p160
      %p162 = scmp.ne.s32.totalorder %s151, %s152
      %p163 = scmp.eq.s32.totalorder %s23, 0
      %p164 = por %p162, %p163
      %p165 = scmp.ne.s32.totalorder %s151, %s152
      %p166 = scmp.eq.s32.totalorder %s24, 15
      %p167 = por %p165, %p166
      %p169 = scmp.ne.s32.totalorder %s152, %s168
      %p170 = scmp.eq.s32.totalorder %s24, 0
      %p171 = por %p169, %p170
      %p172 = scmp.le.s32.totalorder 1, %s18
      %p173 = scmp.lt.s32.totalorder %s18, 17
      %p174 = pnand %p172, %p173
      %p175 = pneg %p174
      // Predicated region
      $region9: #{causal_self_attention.4} parent=5 // pred_check
        _
      $region10: #{causal_self_attention.4} parent=5 // pred_check_branch
        %177 = sbr.rel (%p174) target = $region12
      $region11: #{causal_self_attention.4} parent=5 // pred_region
        %s178 = ssub.s32 %s18, 1
      $region12: #{causal_self_attention.4} parent=5 // pred_fallthru
        _
      %p179 = scmp.lt.s32.totalorder %s18, 16
      // Predicated region
      $region13: #{causal_self_attention.4} parent=5 // pred_check
        %p180 = pneg %p179
      $region14: #{causal_self_attention.4} parent=5 // pred_check_branch
        %182 = sbr.rel (%p180) target = $region16
      $region15: #{causal_self_attention.4} parent=5 // pred_region
        // Predicated region
        $region17: #{causal_self_attention.4} parent=15 // pred_check
          %p183 = pneg %p68
        $region18: #{causal_self_attention.4} parent=15 // pred_check_branch
          %185 = sbr.rel (%p183) target = $region20
        $region19: #{causal_self_attention.4} parent=15 // pred_region
          %s186 = sand.u32 %s58, 1
          %s187 = scalar_lea.sflag [#allocation6], %s186
          %s188 = sand.u32 %s58, 1
          %s189 = smul.addr %s188, 64
          %s190 = scalar_lea.vmem [#allocation5], %s189
          %s191 = smul.u32 16, %s27
          %s193 = ssub.s32 1024, 1024
          %194 = vsyncadd %s187, %s193
          %s195 = smul.addr %s26, 32
          %s196 = sadd.s32 %s191, %s195
          %s197 = smul.addr %s25, 64
          %s198 = sadd.s32 %s196, %s197
          %s199 = smul.addr %s198, 64
          %s200 = scalar_lea.hbm %s0, %s199
          %s201 = sshll.u32 %s190, 4
          %s202 = int_to_ptr.vmem [resolvable:$true] %s201
          %207 = dma.hbm_to_vmem [thread:$0]  %s200, 1024, %s202, %s187, 64, 64, 4
        $region20: #{causal_self_attention.4} parent=15 // pred_fallthru
          _
        // Predicated region
        $region21: #{causal_self_attention.4} parent=15 // pred_check
          %p208 = pneg %p98
        $region22: #{causal_self_attention.4} parent=15 // pred_check_branch
          %210 = sbr.rel (%p208) target = $region24
        $region23: #{causal_self_attention.4} parent=15 // pred_region
          %s211 = sand.u32 %s18, 1
          %s212 = scalar_lea.sflag [#allocation9], %s211
          %s213 = sand.u32 %s88, 1
          %s214 = smul.addr %s213, 64
          %s215 = scalar_lea.vmem [#allocation8], %s214
          %s216 = smul.u32 16, %s28
          %s218 = ssub.s32 1024, 1024
          %219 = vsyncadd %s212, %s218
          %s220 = smul.addr %s26, 32
          %s221 = sadd.s32 %s216, %s220
          %s222 = smul.addr %s25, 64
          %s223 = sadd.s32 %s221, %s222
          %s224 = smul.addr %s223, 64
          %s225 = scalar_lea.hbm %s1, %s224
          %s226 = sshll.u32 %s215, 4
          %s227 = int_to_ptr.vmem [resolvable:$true] %s226
          %232 = dma.hbm_to_vmem [thread:$0]  %s225, 1024, %s227, %s212, 64, 64, 4
        $region24: #{causal_self_attention.4} parent=15 // pred_fallthru
          _
        // Predicated region
        $region25: #{causal_self_attention.4} parent=15 // pred_check
          %p233 = pneg %p128
        $region26: #{causal_self_attention.4} parent=15 // pred_check_branch
          %235 = sbr.rel (%p233) target = $region28
        $region27: #{causal_self_attention.4} parent=15 // pred_region
          %s236 = sand.u32 %s18, 1
          %s237 = scalar_lea.sflag [#allocation9], %s236
          %s238 = sand.u32 %s118, 1
          %s239 = smul.addr %s238, 64
          %s240 = scalar_lea.vmem [#allocation10], %s239
          %s241 = smul.u32 16, %s28
          %s243 = ssub.s32 1024, 1024
          %244 = vsyncadd %s237, %s243
          %s245 = smul.addr %s26, 32
          %s246 = sadd.s32 %s241, %s245
          %s247 = smul.addr %s25, 64
          %s248 = sadd.s32 %s246, %s247
          %s249 = smul.addr %s248, 64
          %s250 = scalar_lea.hbm %s2, %s249
          %s251 = sshll.u32 %s240, 4
          %s252 = int_to_ptr.vmem [resolvable:$true] %s251
          %257 = dma.hbm_to_vmem [thread:$0]  %s250, 1024, %s252, %s237, 64, 64, 4
        $region28: #{causal_self_attention.4} parent=15 // pred_fallthru
          _
      $region16: #{causal_self_attention.4} parent=5 // pred_fallthru
        _
      %p258 = scmp.le.s32.totalorder 1, %s18
      %p259 = scmp.lt.s32.totalorder %s18, 17
      %p260 = pnand %p258, %p259
      %p261 = pneg %p260
      // Predicated region
      $region29: #{causal_self_attention.4} parent=5 // pred_check
        _
      $region30: #{causal_self_attention.4} parent=5 // pred_check_branch
        %263 = sbr.rel (%p260) target = $region32
      $region31: #{causal_self_attention.4} parent=5 // pred_region
        %s264 = ssub.s32 %s18, 1
        %s265 = sand.u32 %s61, 1
        %s266 = scalar_lea.sflag [#allocation6], %s265
        %s267 = sand.u32 %s61, 1
        %s268 = smul.addr %s267, 64
        %s269 = scalar_lea.vmem [#allocation5], %s268
        // Predicated region
        $region33: #{causal_self_attention.4} parent=31 // pred_check
          %p270 = pneg %p74
        $region34: #{causal_self_attention.4} parent=31 // pred_check_branch
          %272 = sbr.rel (%p270) target = $region36
        $region35: #{causal_self_attention.4} parent=31 // pred_region
          %273 = dma.done %s266, 1024
        $region36: #{causal_self_attention.4} parent=31 // pred_fallthru
          _
        %s274 = sand.u32 %s23, 1
        %s275 = scalar_lea.sflag [#allocation9], %s274
        %s276 = sand.u32 %s91, 1
        %s277 = smul.addr %s276, 64
        %s278 = scalar_lea.vmem [#allocation8], %s277
        // Predicated region
        $region37: #{causal_self_attention.4} parent=31 // pred_check
          %p279 = pneg %p104
        $region38: #{causal_self_attention.4} parent=31 // pred_check_branch
          %281 = sbr.rel (%p279) target = $region40
        $region39: #{causal_self_attention.4} parent=31 // pred_region
          %282 = dma.done %s275, 1024
        $region40: #{causal_self_attention.4} parent=31 // pred_fallthru
          _
        %s283 = sand.u32 %s23, 1
        %s284 = scalar_lea.sflag [#allocation9], %s283
        %s285 = sand.u32 %s121, 1
        %s286 = smul.addr %s285, 64
        %s287 = scalar_lea.vmem [#allocation10], %s286
        // Predicated region
        $region41: #{causal_self_attention.4} parent=31 // pred_check
          %p288 = pneg %p134
        $region42: #{causal_self_attention.4} parent=31 // pred_check_branch
          %290 = sbr.rel (%p288) target = $region44
        $region43: #{causal_self_attention.4} parent=31 // pred_region
          %291 = dma.done %s284, 1024
        $region44: #{causal_self_attention.4} parent=31 // pred_fallthru
          _
        %s292 = sand.u32 %s61, 1
        %s293 = scalar_lea.sflag [#allocation6], %s292
        %s294 = sand.u32 %s61, 1
        %s295 = smul.addr %s294, 64
        %s296 = scalar_lea.vmem [#allocation5], %s295
        %p297 = pneg %p74
        %p298 = pneg %p71
        %s299 = sand.u32 %s23, 1
        %s300 = scalar_lea.sflag [#allocation9], %s299
        %s301 = sand.u32 %s91, 1
        %s302 = smul.addr %s301, 64
        %s303 = scalar_lea.vmem [#allocation8], %s302
        %p304 = pneg %p104
        %p305 = pneg %p101
        %s306 = sand.u32 %s23, 1
        %s307 = scalar_lea.sflag [#allocation9], %s306
        %s308 = sand.u32 %s121, 1
        %s309 = smul.addr %s308, 64
        %s310 = scalar_lea.vmem [#allocation10], %s309
        %p311 = pneg %p134
        %p312 = pneg %p131
        %p313 = pneg %p164
        %p314 = pneg %p161
        %s315 = sand.u32 %s151, 1
        %s316 = scalar_lea.sflag [#allocation7], %s315
        %s317 = sand.u32 %s151, 1
        %s318 = smul.addr %s317, 64
        %s319 = scalar_lea.vmem [#allocation11], %s318
        %s320 = smul.u32 16, %s31
        %s321 = smul.u32 16, %s32
        %s322 = smul.u32 16, %s32
        %s323 = smul.u32 16, %s31
        %p325 = scmp.eq.s32.totalorder %s32, 0
        // Predicated region
        $region45: #{causal_self_attention.4} parent=31 // pred_check
          %p326 = pneg %p325
        $region46: #{causal_self_attention.4} parent=31 // pred_check_branch
          %328 = sbr.rel (%p326) target = $region48
        $region47: #{causal_self_attention.4} parent=31 // pred_region
          %vm329 = vcmask 7168
          %330 = vst.msk [vmem:[#allocation2] sm:$0xff] %vm329, -1e+30
          %331 = vst.msk [vmem:[#allocation2 + $0x8] sm:$0xff] %vm329, -1e+30
          %332 = vst.msk [vmem:[#allocation2 + $0x10] sm:$0xff] %vm329, -1e+30
          %333 = vst.msk [vmem:[#allocation2 + $0x18] sm:$0xff] %vm329, -1e+30
          %334 = vst.msk [vmem:[#allocation2 + $0x20] sm:$0xff] %vm329, -1e+30
          %335 = vst.msk [vmem:[#allocation2 + $0x28] sm:$0xff] %vm329, -1e+30
          %336 = vst.msk [vmem:[#allocation2 + $0x30] sm:$0xff] %vm329, -1e+30
          %337 = vst.msk [vmem:[#allocation2 + $0x38] sm:$0xff] %vm329, -1e+30
          %338 = vst.msk [vmem:[#allocation2 + $0x40] sm:$0xff] %vm329, -1e+30
          %339 = vst.msk [vmem:[#allocation2 + $0x48] sm:$0xff] %vm329, -1e+30
          %340 = vst.msk [vmem:[#allocation2 + $0x50] sm:$0xff] %vm329, -1e+30
          %341 = vst.msk [vmem:[#allocation2 + $0x58] sm:$0xff] %vm329, -1e+30
          %342 = vst.msk [vmem:[#allocation2 + $0x60] sm:$0xff] %vm329, -1e+30
          %343 = vst.msk [vmem:[#allocation2 + $0x68] sm:$0xff] %vm329, -1e+30
          %344 = vst.msk [vmem:[#allocation2 + $0x70] sm:$0xff] %vm329, -1e+30
          %345 = vst.msk [vmem:[#allocation2 + $0x78] sm:$0xff] %vm329, -1e+30
          %346 = vst.msk [vmem:[#allocation3] sm:$0xff] %vm329, 0.0
          %347 = vst.msk [vmem:[#allocation3 + $0x8] sm:$0xff] %vm329, 0.0
          %348 = vst.msk [vmem:[#allocation3 + $0x10] sm:$0xff] %vm329, 0.0
          %349 = vst.msk [vmem:[#allocation3 + $0x18] sm:$0xff] %vm329, 0.0
          %350 = vst.msk [vmem:[#allocation3 + $0x20] sm:$0xff] %vm329, 0.0
          %351 = vst.msk [vmem:[#allocation3 + $0x28] sm:$0xff] %vm329, 0.0
          %352 = vst.msk [vmem:[#allocation3 + $0x30] sm:$0xff] %vm329, 0.0
          %353 = vst.msk [vmem:[#allocation3 + $0x38] sm:$0xff] %vm329, 0.0
          %354 = vst.msk [vmem:[#allocation3 + $0x40] sm:$0xff] %vm329, 0.0
          %355 = vst.msk [vmem:[#allocation3 + $0x48] sm:$0xff] %vm329, 0.0
          %356 = vst.msk [vmem:[#allocation3 + $0x50] sm:$0xff] %vm329, 0.0
          %357 = vst.msk [vmem:[#allocation3 + $0x58] sm:$0xff] %vm329, 0.0
          %358 = vst.msk [vmem:[#allocation3 + $0x60] sm:$0xff] %vm329, 0.0
          %359 = vst.msk [vmem:[#allocation3 + $0x68] sm:$0xff] %vm329, 0.0
          %360 = vst.msk [vmem:[#allocation3 + $0x70] sm:$0xff] %vm329, 0.0
          %361 = vst.msk [vmem:[#allocation3 + $0x78] sm:$0xff] %vm329, 0.0
          %362 = vst [vmem:[#allocation4] sm:$0xff] 0.0
          %363 = vst [vmem:[#allocation4 + $0x8] sm:$0xff] 0.0
          %364 = vst [vmem:[#allocation4 + $0x10] sm:$0xff] 0.0
          %365 = vst [vmem:[#allocation4 + $0x18] sm:$0xff] 0.0
          %366 = vst [vmem:[#allocation4 + $0x20] sm:$0xff] 0.0
          %367 = vst [vmem:[#allocation4 + $0x28] sm:$0xff] 0.0
          %368 = vst [vmem:[#allocation4 + $0x30] sm:$0xff] 0.0
          %369 = vst [vmem:[#allocation4 + $0x38] sm:$0xff] 0.0
          %370 = vst [vmem:[#allocation4 + $0x40] sm:$0xff] 0.0
          %371 = vst [vmem:[#allocation4 + $0x48] sm:$0xff] 0.0
          %372 = vst [vmem:[#allocation4 + $0x50] sm:$0xff] 0.0
          %373 = vst [vmem:[#allocation4 + $0x58] sm:$0xff] 0.0
          %374 = vst [vmem:[#allocation4 + $0x60] sm:$0xff] 0.0
          %375 = vst [vmem:[#allocation4 + $0x68] sm:$0xff] 0.0
          %376 = vst [vmem:[#allocation4 + $0x70] sm:$0xff] 0.0
          %377 = vst [vmem:[#allocation4 + $0x78] sm:$0xff] 0.0
        $region48: #{causal_self_attention.4} parent=31 // pred_fallthru
          _
        %p378 = scmp.lt.s32.totalorder %s32, %s31
        // Predicated region
        $region49: #{causal_self_attention.4} parent=31 // pred_check
          %p379 = pneg %p378
        $region50: #{causal_self_attention.4} parent=31 // pred_check_branch
          %381 = sbr.rel (%p379) target = $region52
        $region51: #{causal_self_attention.4} parent=31 // pred_region
          %v382 = vld [vmem:[%s269] sm:$0xf]
          %v383 = vld [vmem:[%s269 + $0x4] sm:$0xf]
          %v384 = vld [vmem:[%s269 + $0x8] sm:$0xf]
          %v385 = vld [vmem:[%s269 + $0xc] sm:$0xf]
          %v386 = vld [vmem:[%s269 + $0x10] sm:$0xf]
          %v387 = vld [vmem:[%s269 + $0x14] sm:$0xf]
          %v388 = vld [vmem:[%s269 + $0x18] sm:$0xf]
          %v389 = vld [vmem:[%s269 + $0x1c] sm:$0xf]
          %v390 = vld [vmem:[%s269 + $0x20] sm:$0xf]
          %v391 = vld [vmem:[%s269 + $0x24] sm:$0xf]
          %v392 = vld [vmem:[%s269 + $0x28] sm:$0xf]
          %v393 = vld [vmem:[%s269 + $0x2c] sm:$0xf]
          %v394 = vld [vmem:[%s269 + $0x30] sm:$0xf]
          %v395 = vld [vmem:[%s269 + $0x34] sm:$0xf]
          %v396 = vld [vmem:[%s269 + $0x38] sm:$0xf]
          %v397 = vld [vmem:[%s269 + $0x3c] sm:$0xf]
          %v398 = vld [vmem:[%s278] sm:$0xf]
          %v399 = vld [vmem:[%s278 + $0x4] sm:$0xf]
          %v400 = vld [vmem:[%s278 + $0x8] sm:$0xf]
          %v401 = vld [vmem:[%s278 + $0xc] sm:$0xf]
          %v402 = vld [vmem:[%s278 + $0x10] sm:$0xf]
          %v403 = vld [vmem:[%s278 + $0x14] sm:$0xf]
          %v404 = vld [vmem:[%s278 + $0x18] sm:$0xf]
          %v405 = vld [vmem:[%s278 + $0x1c] sm:$0xf]
          %v406 = vld [vmem:[%s278 + $0x20] sm:$0xf]
          %v407 = vld [vmem:[%s278 + $0x24] sm:$0xf]
          %v408 = vld [vmem:[%s278 + $0x28] sm:$0xf]
          %v409 = vld [vmem:[%s278 + $0x2c] sm:$0xf]
          %v410 = vld [vmem:[%s278 + $0x30] sm:$0xf]
          %v411 = vld [vmem:[%s278 + $0x34] sm:$0xf]
          %v412 = vld [vmem:[%s278 + $0x38] sm:$0xf]
          %v413 = vld [vmem:[%s278 + $0x3c] sm:$0xf]
          %v414 = vld [vmem:[%s287] sm:$0xf]
          %v415 = vld [vmem:[%s287 + $0x4] sm:$0xf]
          %v416 = vld [vmem:[%s287 + $0x8] sm:$0xf]
          %v417 = vld [vmem:[%s287 + $0xc] sm:$0xf]
          %v418 = vld [vmem:[%s287 + $0x10] sm:$0xf]
          %v419 = vld [vmem:[%s287 + $0x14] sm:$0xf]
          %v420 = vld [vmem:[%s287 + $0x18] sm:$0xf]
          %v421 = vld [vmem:[%s287 + $0x1c] sm:$0xf]
          %v422 = vld [vmem:[%s287 + $0x20] sm:$0xf]
          %v423 = vld [vmem:[%s287 + $0x24] sm:$0xf]
          %v424 = vld [vmem:[%s287 + $0x28] sm:$0xf]
          %v425 = vld [vmem:[%s287 + $0x2c] sm:$0xf]
          %v426 = vld [vmem:[%s287 + $0x30] sm:$0xf]
          %v427 = vld [vmem:[%s287 + $0x34] sm:$0xf]
          %v428 = vld [vmem:[%s287 + $0x38] sm:$0xf]
          %v429 = vld [vmem:[%s287 + $0x3c] sm:$0xf]
          %v446 = vunpack.c.l.b16 %v382
          %v447 = vunpack.c.l.b16 %v383
          %v448 = vunpack.c.l.b16 %v384
          %v449 = vunpack.c.l.b16 %v385
          %v450 = vunpack.c.l.b16 %v386
          %v451 = vunpack.c.l.b16 %v387
          %v452 = vunpack.c.l.b16 %v388
          %v453 = vunpack.c.l.b16 %v389
          %v454 = vunpack.c.l.b16 %v390
          %v455 = vunpack.c.l.b16 %v391
          %v456 = vunpack.c.l.b16 %v392
          %v457 = vunpack.c.l.b16 %v393
          %v458 = vunpack.c.l.b16 %v394
          %v459 = vunpack.c.l.b16 %v395
          %v460 = vunpack.c.l.b16 %v396
          %v461 = vunpack.c.l.b16 %v397
          %v462 = vpack.c.b16 %v447, %v446
          %v463 = vpack.c.b16 %v449, %v448
          %v464 = vpack.c.b16 %v451, %v450
          %v465 = vpack.c.b16 %v453, %v452
          %v466 = vpack.c.b16 %v455, %v454
          %v467 = vpack.c.b16 %v457, %v456
          %v468 = vpack.c.b16 %v459, %v458
          %v469 = vpack.c.b16 %v461, %v460
          %v494 = vunpack.c.l.b16 %v398
          %v495 = vunpack.c.l.b16 %v399
          %v496 = vunpack.c.l.b16 %v400
          %v497 = vunpack.c.l.b16 %v401
          %v498 = vunpack.c.l.b16 %v402
          %v499 = vunpack.c.l.b16 %v403
          %v500 = vunpack.c.l.b16 %v404
          %v501 = vunpack.c.l.b16 %v405
          %v502 = vunpack.c.l.b16 %v406
          %v503 = vunpack.c.l.b16 %v407
          %v504 = vunpack.c.l.b16 %v408
          %v505 = vunpack.c.l.b16 %v409
          %v506 = vunpack.c.l.b16 %v410
          %v507 = vunpack.c.l.b16 %v411
          %v508 = vunpack.c.l.b16 %v412
          %v509 = vunpack.c.l.b16 %v413
          %v510 = vpack.c.b16 %v495, %v494
          %v511 = vpack.c.b16 %v497, %v496
          %v512 = vpack.c.b16 %v499, %v498
          %v513 = vpack.c.b16 %v501, %v500
          %v514 = vpack.c.b16 %v503, %v502
          %v515 = vpack.c.b16 %v505, %v504
          %v516 = vpack.c.b16 %v507, %v506
          %v517 = vpack.c.b16 %v509, %v508
          %526 = vmatprep.subr.bf16.mxu0 0
          %527 = vmatpush1.bf16.xpose.msra.mxu0 %v510
          %528 = vmatprep.subr.bf16.mxu0 0
          %529 = vmatpush1.bf16.xpose.msra.mxu0 %v511
          %530 = vmatprep.subr.bf16.mxu0 0
          %531 = vmatpush1.bf16.xpose.msra.mxu0 %v512
          %532 = vmatprep.subr.bf16.mxu0 0
          %533 = vmatpush1.bf16.xpose.msra.mxu0 %v513
          %534 = vmatprep.subr.bf16.mxu0 0
          %535 = vmatpush1.bf16.xpose.msra.mxu0 %v514
          %536 = vmatprep.subr.bf16.mxu0 0
          %537 = vmatpush1.bf16.xpose.msra.mxu0 %v515
          %538 = vmatprep.subr.bf16.mxu0 0
          %539 = vmatpush1.bf16.xpose.msra.mxu0 %v516
          %540 = vmatprep.subr.bf16.mxu0 0
          %541 = vmatpush1.bf16.xpose.msra.mxu0 %v517
          %542 = vmatprep.subr.bf16.mxu0 0
          %543 = vmatpush1.bf16.xpose.msra.mxu0 0
          %544 = vmatprep.subr.bf16.mxu0 0
          %545 = vmatpush1.bf16.xpose.msra.mxu0 0
          %546 = vmatprep.subr.bf16.mxu0 0
          %547 = vmatpush1.bf16.xpose.msra.mxu0 0
          %548 = vmatprep.subr.bf16.mxu0 0
          %549 = vmatpush1.bf16.xpose.msra.mxu0 0
          %550 = vmatprep.subr.bf16.mxu0 0
          %551 = vmatpush1.bf16.xpose.msra.mxu0 0
          %552 = vmatprep.subr.bf16.mxu0 0
          %553 = vmatpush1.bf16.xpose.msra.mxu0 0
          %554 = vmatprep.subr.bf16.mxu0 0
          %555 = vmatpush1.bf16.xpose.msra.mxu0 0
          %556 = vmatprep.subr.bf16.mxu0 0
          %557 = vmatpush1.bf16.xpose.msra.mxu0 0
          %558 = vmatprep.mubr.bf16.mxu0 0
          %559 = vmatmul.mubr.bf16.gmra.mrb[0].mxu0 %v462
          %v560 = vpop.f32.mrb[0].mxu0
          %v561 = vadd.f32 0.0, %v560
          %v562 = vpop.f32.mrb[0].mxu0
          %v563 = vpop.f32.mrb[0].mxu0
          %v564 = vadd.f32 0.0, %v563
          %v565 = vpop.f32.mrb[0].mxu0
          %566 = vmatprep.mubr.bf16.mxu0 0
          %567 = vmatmul.mubr.bf16.gmra.mrb[0].mxu0 %v463
          %v568 = vpop.f32.mrb[0].mxu0
          %v569 = vadd.f32 0.0, %v568
          %v570 = vpop.f32.mrb[0].mxu0
          %v571 = vpop.f32.mrb[0].mxu0
          %v572 = vadd.f32 0.0, %v571
          %v573 = vpop.f32.mrb[0].mxu0
          %574 = vmatprep.mubr.bf16.mxu0 0
          %575 = vmatmul.mubr.bf16.gmra.mrb[0].mxu0 %v464
          %v576 = vpop.f32.mrb[0].mxu0
          %v577 = vadd.f32 0.0, %v576
          %v578 = vpop.f32.mrb[0].mxu0
          %v579 = vpop.f32.mrb[0].mxu0
          %v580 = vadd.f32 0.0, %v579
          %v581 = vpop.f32.mrb[0].mxu0
          %582 = vmatprep.mubr.bf16.mxu0 0
          %583 = vmatmul.mubr.bf16.gmra.mrb[0].mxu0 %v465
          %v584 = vpop.f32.mrb[0].mxu0
          %v585 = vadd.f32 0.0, %v584
          %v586 = vpop.f32.mrb[0].mxu0
          %v587 = vpop.f32.mrb[0].mxu0
          %v588 = vadd.f32 0.0, %v587
          %v589 = vpop.f32.mrb[0].mxu0
          %590 = vmatprep.mubr.bf16.mxu0 0
          %591 = vmatmul.mubr.bf16.gmra.mrb[0].mxu0 %v466
          %v592 = vpop.f32.mrb[0].mxu0
          %v593 = vadd.f32 0.0, %v592
          %v594 = vpop.f32.mrb[0].mxu0
          %v595 = vpop.f32.mrb[0].mxu0
          %v596 = vadd.f32 0.0, %v595
          %v597 = vpop.f32.mrb[0].mxu0
          %598 = vmatprep.mubr.bf16.mxu0 0
          %599 = vmatmul.mubr.bf16.gmra.mrb[0].mxu0 %v467
          %v600 = vpop.f32.mrb[0].mxu0
          %v601 = vadd.f32 0.0, %v600
          %v602 = vpop.f32.mrb[0].mxu0
          %v603 = vpop.f32.mrb[0].mxu0
          %v604 = vadd.f32 0.0, %v603
          %v605 = vpop.f32.mrb[0].mxu0
          %606 = vmatprep.mubr.bf16.mxu0 0
          %607 = vmatmul.mubr.bf16.gmra.mrb[0].mxu0 %v468
          %v608 = vpop.f32.mrb[0].mxu0
          %v609 = vadd.f32 0.0, %v608
          %v610 = vpop.f32.mrb[0].mxu0
          %v611 = vpop.f32.mrb[0].mxu0
          %v612 = vadd.f32 0.0, %v611
          %v613 = vpop.f32.mrb[0].mxu0
          %614 = vmatprep.mubr.bf16.mxu0 0
          %615 = vmatmul.mubr.bf16.gmra.mrb[0].mxu0 %v469
          %v616 = vpop.f32.mrb[0].mxu0
          %v617 = vadd.f32 0.0, %v616
          %v618 = vpop.f32.mrb[0].mxu0
          %v619 = vpop.f32.mrb[0].mxu0
          %v620 = vadd.f32 0.0, %v619
          %v621 = vpop.f32.mrb[0].mxu0
          %622 = vdwg.mxu0
          %v623 = vmul.f32 %v561, 0.088388346
          %v624 = vmul.f32 %v564, 0.088388346
          %v625 = vmul.f32 %v569, 0.088388346
          %v626 = vmul.f32 %v572, 0.088388346
          %v627 = vmul.f32 %v577, 0.088388346
          %v628 = vmul.f32 %v580, 0.088388346
          %v629 = vmul.f32 %v585, 0.088388346
          %v630 = vmul.f32 %v588, 0.088388346
          %v631 = vmul.f32 %v593, 0.088388346
          %v632 = vmul.f32 %v596, 0.088388346
          %v633 = vmul.f32 %v601, 0.088388346
          %v634 = vmul.f32 %v604, 0.088388346
          %v635 = vmul.f32 %v609, 0.088388346
          %v636 = vmul.f32 %v612, 0.088388346
          %v637 = vmul.f32 %v617, 0.088388346
          %v638 = vmul.f32 %v620, 0.088388346
          %v639 = vld [vmem:[#allocation2] sm:$0xff]
          %v640 = vld [vmem:[#allocation2 + $0x8] sm:$0xff]
          %v641 = vld [vmem:[#allocation2 + $0x10] sm:$0xff]
          %v642 = vld [vmem:[#allocation2 + $0x18] sm:$0xff]
          %v643 = vld [vmem:[#allocation2 + $0x20] sm:$0xff]
          %v644 = vld [vmem:[#allocation2 + $0x28] sm:$0xff]
          %v645 = vld [vmem:[#allocation2 + $0x30] sm:$0xff]
          %v646 = vld [vmem:[#allocation2 + $0x38] sm:$0xff]
          %v647 = vld [vmem:[#allocation2 + $0x40] sm:$0xff]
          %v648 = vld [vmem:[#allocation2 + $0x48] sm:$0xff]
          %v649 = vld [vmem:[#allocation2 + $0x50] sm:$0xff]
          %v650 = vld [vmem:[#allocation2 + $0x58] sm:$0xff]
          %v651 = vld [vmem:[#allocation2 + $0x60] sm:$0xff]
          %v652 = vld [vmem:[#allocation2 + $0x68] sm:$0xff]
          %v653 = vld [vmem:[#allocation2 + $0x70] sm:$0xff]
          %v654 = vld [vmem:[#allocation2 + $0x78] sm:$0xff]
          %655 = vmax.xlane.f32.xlu0 %v623
          %v656 = vpop.xlane.xlu0 %655
          %657 = vmax.xlane.f32.xlu0 %v624
          %v658 = vpop.xlane.xlu0 %657
          %659 = vmax.xlane.f32.xlu0 %v625
          %v660 = vpop.xlane.xlu0 %659
          %661 = vmax.xlane.f32.xlu0 %v626
          %v662 = vpop.xlane.xlu0 %661
          %663 = vmax.xlane.f32.xlu0 %v627
          %v664 = vpop.xlane.xlu0 %663
          %665 = vmax.xlane.f32.xlu0 %v628
          %v666 = vpop.xlane.xlu0 %665
          %667 = vmax.xlane.f32.xlu0 %v629
          %v668 = vpop.xlane.xlu0 %667
          %669 = vmax.xlane.f32.xlu0 %v630
          %v670 = vpop.xlane.xlu0 %669
          %671 = vmax.xlane.f32.xlu0 %v631
          %v672 = vpop.xlane.xlu0 %671
          %673 = vmax.xlane.f32.xlu0 %v632
          %v674 = vpop.xlane.xlu0 %673
          %675 = vmax.xlane.f32.xlu0 %v633
          %v676 = vpop.xlane.xlu0 %675
          %677 = vmax.xlane.f32.xlu0 %v634
          %v678 = vpop.xlane.xlu0 %677
          %679 = vmax.xlane.f32.xlu0 %v635
          %v680 = vpop.xlane.xlu0 %679
          %681 = vmax.xlane.f32.xlu0 %v636
          %v682 = vpop.xlane.xlu0 %681
          %683 = vmax.xlane.f32.xlu0 %v637
          %v684 = vpop.xlane.xlu0 %683
          %685 = vmax.xlane.f32.xlu0 %v638
          %v686 = vpop.xlane.xlu0 %685
          %v687 = vmax.f32 %v639, %v656
          %v688 = vmax.f32 %v640, %v658
          %v689 = vmax.f32 %v641, %v660
          %v690 = vmax.f32 %v642, %v662
          %v691 = vmax.f32 %v643, %v664
          %v692 = vmax.f32 %v644, %v666
          %v693 = vmax.f32 %v645, %v668
          %v694 = vmax.f32 %v646, %v670
          %v695 = vmax.f32 %v647, %v672
          %v696 = vmax.f32 %v648, %v674
          %v697 = vmax.f32 %v649, %v676
          %v698 = vmax.f32 %v650, %v678
          %v699 = vmax.f32 %v651, %v680
          %v700 = vmax.f32 %v652, %v682
          %v701 = vmax.f32 %v653, %v684
          %v702 = vmax.f32 %v654, %v686
          %v703 = vsub.f32 %v639, %v687
          %v704 = vsub.f32 %v640, %v688
          %v705 = vsub.f32 %v641, %v689
          %v706 = vsub.f32 %v642, %v690
          %v707 = vsub.f32 %v643, %v691
          %v708 = vsub.f32 %v644, %v692
          %v709 = vsub.f32 %v645, %v693
          %v710 = vsub.f32 %v646, %v694
          %v711 = vsub.f32 %v647, %v695
          %v712 = vsub.f32 %v648, %v696
          %v713 = vsub.f32 %v649, %v697
          %v714 = vsub.f32 %v650, %v698
          %v715 = vsub.f32 %v651, %v699
          %v716 = vsub.f32 %v652, %v700
          %v717 = vsub.f32 %v653, %v701
          %v718 = vsub.f32 %v654, %v702
          %v719 = vmul.f32 %v703, 1.442695
          %v720 = vpow.pop %v719
          %v721 = vmul.f32 %v704, 1.442695
          %v722 = vpow.pop %v721
          %v723 = vmul.f32 %v705, 1.442695
          %v724 = vpow.pop %v723
          %v725 = vmul.f32 %v706, 1.442695
          %v726 = vpow.pop %v725
          %v727 = vmul.f32 %v707, 1.442695
          %v728 = vpow.pop %v727
          %v729 = vmul.f32 %v708, 1.442695
          %v730 = vpow.pop %v729
          %v731 = vmul.f32 %v709, 1.442695
          %v732 = vpow.pop %v731
          %v733 = vmul.f32 %v710, 1.442695
          %v734 = vpow.pop %v733
          %v735 = vmul.f32 %v711, 1.442695
          %v736 = vpow.pop %v735
          %v737 = vmul.f32 %v712, 1.442695
          %v738 = vpow.pop %v737
          %v739 = vmul.f32 %v713, 1.442695
          %v740 = vpow.pop %v739
          %v741 = vmul.f32 %v714, 1.442695
          %v742 = vpow.pop %v741
          %v743 = vmul.f32 %v715, 1.442695
          %v744 = vpow.pop %v743
          %v745 = vmul.f32 %v716, 1.442695
          %v746 = vpow.pop %v745
          %v747 = vmul.f32 %v717, 1.442695
          %v748 = vpow.pop %v747
          %v749 = vmul.f32 %v718, 1.442695
          %v750 = vpow.pop %v749
          %752 = vset.pattern.permute.xlu0 0
          %753 = vperm.xlu0 %752, %v687
          %v754 = vpop.permute.xlu0 %753
          %757 = vset.pattern.permute.xlu0 0
          %758 = vperm.xlu0 %757, %v688
          %v759 = vpop.permute.xlu0 %758
          %762 = vset.pattern.permute.xlu0 0
          %763 = vperm.xlu0 %762, %v689
          %v764 = vpop.permute.xlu0 %763
          %767 = vset.pattern.permute.xlu0 0
          %768 = vperm.xlu0 %767, %v690
          %v769 = vpop.permute.xlu0 %768
          %772 = vset.pattern.permute.xlu0 0
          %773 = vperm.xlu0 %772, %v691
          %v774 = vpop.permute.xlu0 %773
          %777 = vset.pattern.permute.xlu0 0
          %778 = vperm.xlu0 %777, %v692
          %v779 = vpop.permute.xlu0 %778
          %782 = vset.pattern.permute.xlu0 0
          %783 = vperm.xlu0 %782, %v693
          %v784 = vpop.permute.xlu0 %783
          %787 = vset.pattern.permute.xlu0 0
          %788 = vperm.xlu0 %787, %v694
          %v789 = vpop.permute.xlu0 %788
          %792 = vset.pattern.permute.xlu0 0
          %793 = vperm.xlu0 %792, %v695
          %v794 = vpop.permute.xlu0 %793
          %797 = vset.pattern.permute.xlu0 0
          %798 = vperm.xlu0 %797, %v696
          %v799 = vpop.permute.xlu0 %798
          %802 = vset.pattern.permute.xlu0 0
          %803 = vperm.xlu0 %802, %v697
          %v804 = vpop.permute.xlu0 %803
          %807 = vset.pattern.permute.xlu0 0
          %808 = vperm.xlu0 %807, %v698
          %v809 = vpop.permute.xlu0 %808
          %812 = vset.pattern.permute.xlu0 0
          %813 = vperm.xlu0 %812, %v699
          %v814 = vpop.permute.xlu0 %813
          %817 = vset.pattern.permute.xlu0 0
          %818 = vperm.xlu0 %817, %v700
          %v819 = vpop.permute.xlu0 %818
          %822 = vset.pattern.permute.xlu0 0
          %823 = vperm.xlu0 %822, %v701
          %v824 = vpop.permute.xlu0 %823
          %827 = vset.pattern.permute.xlu0 0
          %828 = vperm.xlu0 %827, %v702
          %v829 = vpop.permute.xlu0 %828
          %v831 = vsub.f32 %v623, %v754
          %v832 = vsub.f32 %v624, %v759
          %v833 = vsub.f32 %v625, %v764
          %v834 = vsub.f32 %v626, %v769
          %v835 = vsub.f32 %v627, %v774
          %v836 = vsub.f32 %v628, %v779
          %v837 = vsub.f32 %v629, %v784
          %v838 = vsub.f32 %v630, %v789
          %v839 = vsub.f32 %v631, %v794
          %v840 = vsub.f32 %v632, %v799
          %v841 = vsub.f32 %v633, %v804
          %v842 = vsub.f32 %v634, %v809
          %v843 = vsub.f32 %v635, %v814
          %v844 = vsub.f32 %v636, %v819
          %v845 = vsub.f32 %v637, %v824
          %v846 = vsub.f32 %v638, %v829
          %v847 = vmul.f32 %v831, 1.442695
          %v848 = vpow.pop %v847
          %v849 = vmul.f32 %v832, 1.442695
          %v850 = vpow.pop %v849
          %v851 = vmul.f32 %v833, 1.442695
          %v852 = vpow.pop %v851
          %v853 = vmul.f32 %v834, 1.442695
          %v854 = vpow.pop %v853
          %v855 = vmul.f32 %v835, 1.442695
          %v856 = vpow.pop %v855
          %v857 = vmul.f32 %v836, 1.442695
          %v858 = vpow.pop %v857
          %v859 = vmul.f32 %v837, 1.442695
          %v860 = vpow.pop %v859
          %v861 = vmul.f32 %v838, 1.442695
          %v862 = vpow.pop %v861
          %v863 = vmul.f32 %v839, 1.442695
          %v864 = vpow.pop %v863
          %v865 = vmul.f32 %v840, 1.442695
          %v866 = vpow.pop %v865
          %v867 = vmul.f32 %v841, 1.442695
          %v868 = vpow.pop %v867
          %v869 = vmul.f32 %v842, 1.442695
          %v870 = vpow.pop %v869
          %v871 = vmul.f32 %v843, 1.442695
          %v872 = vpow.pop %v871
          %v873 = vmul.f32 %v844, 1.442695
          %v874 = vpow.pop %v873
          %v875 = vmul.f32 %v845, 1.442695
          %v876 = vpow.pop %v875
          %v877 = vmul.f32 %v846, 1.442695
          %v878 = vpow.pop %v877
          %v879 = vld [vmem:[#allocation3] sm:$0xff]
          %v880 = vld [vmem:[#allocation3 + $0x8] sm:$0xff]
          %v881 = vld [vmem:[#allocation3 + $0x10] sm:$0xff]
          %v882 = vld [vmem:[#allocation3 + $0x18] sm:$0xff]
          %v883 = vld [vmem:[#allocation3 + $0x20] sm:$0xff]
          %v884 = vld [vmem:[#allocation3 + $0x28] sm:$0xff]
          %v885 = vld [vmem:[#allocation3 + $0x30] sm:$0xff]
          %v886 = vld [vmem:[#allocation3 + $0x38] sm:$0xff]
          %v887 = vld [vmem:[#allocation3 + $0x40] sm:$0xff]
          %v888 = vld [vmem:[#allocation3 + $0x48] sm:$0xff]
          %v889 = vld [vmem:[#allocation3 + $0x50] sm:$0xff]
          %v890 = vld [vmem:[#allocation3 + $0x58] sm:$0xff]
          %v891 = vld [vmem:[#allocation3 + $0x60] sm:$0xff]
          %v892 = vld [vmem:[#allocation3 + $0x68] sm:$0xff]
          %v893 = vld [vmem:[#allocation3 + $0x70] sm:$0xff]
          %v894 = vld [vmem:[#allocation3 + $0x78] sm:$0xff]
          %v895 = vmul.f32 %v720, %v879
          %v896 = vmul.f32 %v722, %v880
          %v897 = vmul.f32 %v724, %v881
          %v898 = vmul.f32 %v726, %v882
          %v899 = vmul.f32 %v728, %v883
          %v900 = vmul.f32 %v730, %v884
          %v901 = vmul.f32 %v732, %v885
          %v902 = vmul.f32 %v734, %v886
          %v903 = vmul.f32 %v736, %v887
          %v904 = vmul.f32 %v738, %v888
          %v905 = vmul.f32 %v740, %v889
          %v906 = vmul.f32 %v742, %v890
          %v907 = vmul.f32 %v744, %v891
          %v908 = vmul.f32 %v746, %v892
          %v909 = vmul.f32 %v748, %v893
          %v910 = vmul.f32 %v750, %v894
          %911 = vadd.xlane.f32.xlu0 %v848
          %v912 = vpop.xlane.xlu0 %911
          %913 = vadd.xlane.f32.xlu0 %v850
          %v914 = vpop.xlane.xlu0 %913
          %915 = vadd.xlane.f32.xlu0 %v852
          %v916 = vpop.xlane.xlu0 %915
          %917 = vadd.xlane.f32.xlu0 %v854
          %v918 = vpop.xlane.xlu0 %917
          %919 = vadd.xlane.f32.xlu0 %v856
          %v920 = vpop.xlane.xlu0 %919
          %921 = vadd.xlane.f32.xlu0 %v858
          %v922 = vpop.xlane.xlu0 %921
          %923 = vadd.xlane.f32.xlu0 %v860
          %v924 = vpop.xlane.xlu0 %923
          %925 = vadd.xlane.f32.xlu0 %v862
          %v926 = vpop.xlane.xlu0 %925
          %927 = vadd.xlane.f32.xlu0 %v864
          %v928 = vpop.xlane.xlu0 %927
          %929 = vadd.xlane.f32.xlu0 %v866
          %v930 = vpop.xlane.xlu0 %929
          %931 = vadd.xlane.f32.xlu0 %v868
          %v932 = vpop.xlane.xlu0 %931
          %933 = vadd.xlane.f32.xlu0 %v870
          %v934 = vpop.xlane.xlu0 %933
          %935 = vadd.xlane.f32.xlu0 %v872
          %v936 = vpop.xlane.xlu0 %935
          %937 = vadd.xlane.f32.xlu0 %v874
          %v938 = vpop.xlane.xlu0 %937
          %939 = vadd.xlane.f32.xlu0 %v876
          %v940 = vpop.xlane.xlu0 %939
          %941 = vadd.xlane.f32.xlu0 %v878
          %v942 = vpop.xlane.xlu0 %941
          %v943 = vadd.f32 %v895, %v912
          %v944 = vadd.f32 %v896, %v914
          %v945 = vadd.f32 %v897, %v916
          %v946 = vadd.f32 %v898, %v918
          %v947 = vadd.f32 %v899, %v920
          %v948 = vadd.f32 %v900, %v922
          %v949 = vadd.f32 %v901, %v924
          %v950 = vadd.f32 %v902, %v926
          %v951 = vadd.f32 %v903, %v928
          %v952 = vadd.f32 %v904, %v930
          %v953 = vadd.f32 %v905, %v932
          %v954 = vadd.f32 %v906, %v934
          %v955 = vadd.f32 %v907, %v936
          %v956 = vadd.f32 %v908, %v938
          %v957 = vadd.f32 %v909, %v940
          %v958 = vadd.f32 %v910, %v942
          %vm959 = vcmask 7168
          %960 = vst.msk [vmem:[#allocation3] sm:$0xff] %vm959, %v943
          %961 = vst.msk [vmem:[#allocation3 + $0x8] sm:$0xff] %vm959, %v944
          %962 = vst.msk [vmem:[#allocation3 + $0x10] sm:$0xff] %vm959, %v945
          %963 = vst.msk [vmem:[#allocation3 + $0x18] sm:$0xff] %vm959, %v946
          %964 = vst.msk [vmem:[#allocation3 + $0x20] sm:$0xff] %vm959, %v947
          %965 = vst.msk [vmem:[#allocation3 + $0x28] sm:$0xff] %vm959, %v948
          %966 = vst.msk [vmem:[#allocation3 + $0x30] sm:$0xff] %vm959, %v949
          %967 = vst.msk [vmem:[#allocation3 + $0x38] sm:$0xff] %vm959, %v950
          %968 = vst.msk [vmem:[#allocation3 + $0x40] sm:$0xff] %vm959, %v951
          %969 = vst.msk [vmem:[#allocation3 + $0x48] sm:$0xff] %vm959, %v952
          %970 = vst.msk [vmem:[#allocation3 + $0x50] sm:$0xff] %vm959, %v953
          %971 = vst.msk [vmem:[#allocation3 + $0x58] sm:$0xff] %vm959, %v954
          %972 = vst.msk [vmem:[#allocation3 + $0x60] sm:$0xff] %vm959, %v955
          %973 = vst.msk [vmem:[#allocation3 + $0x68] sm:$0xff] %vm959, %v956
          %974 = vst.msk [vmem:[#allocation3 + $0x70] sm:$0xff] %vm959, %v957
          %975 = vst.msk [vmem:[#allocation3 + $0x78] sm:$0xff] %vm959, %v958
          %v976 = vld [vmem:[#allocation4] sm:$0xff]
          %v977 = vld [vmem:[#allocation4 + $0x8] sm:$0xff]
          %v978 = vld [vmem:[#allocation4 + $0x10] sm:$0xff]
          %v979 = vld [vmem:[#allocation4 + $0x18] sm:$0xff]
          %v980 = vld [vmem:[#allocation4 + $0x20] sm:$0xff]
          %v981 = vld [vmem:[#allocation4 + $0x28] sm:$0xff]
          %v982 = vld [vmem:[#allocation4 + $0x30] sm:$0xff]
          %v983 = vld [vmem:[#allocation4 + $0x38] sm:$0xff]
          %v984 = vld [vmem:[#allocation4 + $0x40] sm:$0xff]
          %v985 = vld [vmem:[#allocation4 + $0x48] sm:$0xff]
          %v986 = vld [vmem:[#allocation4 + $0x50] sm:$0xff]
          %v987 = vld [vmem:[#allocation4 + $0x58] sm:$0xff]
          %v988 = vld [vmem:[#allocation4 + $0x60] sm:$0xff]
          %v989 = vld [vmem:[#allocation4 + $0x68] sm:$0xff]
          %v990 = vld [vmem:[#allocation4 + $0x70] sm:$0xff]
          %v991 = vld [vmem:[#allocation4 + $0x78] sm:$0xff]
          %993 = vset.pattern.permute.xlu0 0
          %994 = vperm.xlu0 %993, %v720
          %v995 = vpop.permute.xlu0 %994
          %998 = vset.pattern.permute.xlu0 0
          %999 = vperm.xlu0 %998, %v722
          %v1000 = vpop.permute.xlu0 %999
          %1003 = vset.pattern.permute.xlu0 0
          %1004 = vperm.xlu0 %1003, %v724
          %v1005 = vpop.permute.xlu0 %1004
          %1008 = vset.pattern.permute.xlu0 0
          %1009 = vperm.xlu0 %1008, %v726
          %v1010 = vpop.permute.xlu0 %1009
          %1013 = vset.pattern.permute.xlu0 0
          %1014 = vperm.xlu0 %1013, %v728
          %v1015 = vpop.permute.xlu0 %1014
          %1018 = vset.pattern.permute.xlu0 0
          %1019 = vperm.xlu0 %1018, %v730
          %v1020 = vpop.permute.xlu0 %1019
          %1023 = vset.pattern.permute.xlu0 0
          %1024 = vperm.xlu0 %1023, %v732
          %v1025 = vpop.permute.xlu0 %1024
          %1028 = vset.pattern.permute.xlu0 0
          %1029 = vperm.xlu0 %1028, %v734
          %v1030 = vpop.permute.xlu0 %1029
          %1033 = vset.pattern.permute.xlu0 0
          %1034 = vperm.xlu0 %1033, %v736
          %v1035 = vpop.permute.xlu0 %1034
          %1038 = vset.pattern.permute.xlu0 0
          %1039 = vperm.xlu0 %1038, %v738
          %v1040 = vpop.permute.xlu0 %1039
          %1043 = vset.pattern.permute.xlu0 0
          %1044 = vperm.xlu0 %1043, %v740
          %v1045 = vpop.permute.xlu0 %1044
          %1048 = vset.pattern.permute.xlu0 0
          %1049 = vperm.xlu0 %1048, %v742
          %v1050 = vpop.permute.xlu0 %1049
          %1053 = vset.pattern.permute.xlu0 0
          %1054 = vperm.xlu0 %1053, %v744
          %v1055 = vpop.permute.xlu0 %1054
          %1058 = vset.pattern.permute.xlu0 0
          %1059 = vperm.xlu0 %1058, %v746
          %v1060 = vpop.permute.xlu0 %1059
          %1063 = vset.pattern.permute.xlu0 0
          %1064 = vperm.xlu0 %1063, %v748
          %v1065 = vpop.permute.xlu0 %1064
          %1068 = vset.pattern.permute.xlu0 0
          %1069 = vperm.xlu0 %1068, %v750
          %v1070 = vpop.permute.xlu0 %1069
          %v1072 = vmul.f32 %v995, %v976
          %v1073 = vmul.f32 %v1000, %v977
          %v1074 = vmul.f32 %v1005, %v978
          %v1075 = vmul.f32 %v1010, %v979
          %v1076 = vmul.f32 %v1015, %v980
          %v1077 = vmul.f32 %v1020, %v981
          %v1078 = vmul.f32 %v1025, %v982
          %v1079 = vmul.f32 %v1030, %v983
          %v1080 = vmul.f32 %v1035, %v984
          %v1081 = vmul.f32 %v1040, %v985
          %v1082 = vmul.f32 %v1045, %v986
          %v1083 = vmul.f32 %v1050, %v987
          %v1084 = vmul.f32 %v1055, %v988
          %v1085 = vmul.f32 %v1060, %v989
          %v1086 = vmul.f32 %v1065, %v990
          %v1087 = vmul.f32 %v1070, %v991
          %v1088 = vpack.c.bf16 %v850, %v848
          %v1089 = vpack.c.bf16 %v854, %v852
          %v1090 = vpack.c.bf16 %v858, %v856
          %v1091 = vpack.c.bf16 %v862, %v860
          %v1092 = vpack.c.bf16 %v866, %v864
          %v1093 = vpack.c.bf16 %v870, %v868
          %v1094 = vpack.c.bf16 %v874, %v872
          %v1095 = vpack.c.bf16 %v878, %v876
          %v1112 = vunpack.c.l.b16 %v414
          %v1113 = vunpack.c.l.b16 %v415
          %v1114 = vunpack.c.l.b16 %v416
          %v1115 = vunpack.c.l.b16 %v417
          %v1116 = vunpack.c.l.b16 %v418
          %v1117 = vunpack.c.l.b16 %v419
          %v1118 = vunpack.c.l.b16 %v420
          %v1119 = vunpack.c.l.b16 %v421
          %v1120 = vunpack.c.l.b16 %v422
          %v1121 = vunpack.c.l.b16 %v423
          %v1122 = vunpack.c.l.b16 %v424
          %v1123 = vunpack.c.l.b16 %v425
          %v1124 = vunpack.c.l.b16 %v426
          %v1125 = vunpack.c.l.b16 %v427
          %v1126 = vunpack.c.l.b16 %v428
          %v1127 = vunpack.c.l.b16 %v429
          %v1128 = vpack.c.b16 %v1113, %v1112
          %v1129 = vpack.c.b16 %v1115, %v1114
          %v1130 = vpack.c.b16 %v1117, %v1116
          %v1131 = vpack.c.b16 %v1119, %v1118
          %v1132 = vpack.c.b16 %v1121, %v1120
          %v1133 = vpack.c.b16 %v1123, %v1122
          %v1134 = vpack.c.b16 %v1125, %v1124
          %v1135 = vpack.c.b16 %v1127, %v1126
          %1144 = vmatprep.subr.bf16.mxu0 0
          %1145 = vmatpush1.bf16.msra.mxu0 %v1128
          %1146 = vmatprep.subr.bf16.mxu0 0
          %1147 = vmatpush1.bf16.msra.mxu0 %v1129
          %1148 = vmatprep.subr.bf16.mxu0 0
          %1149 = vmatpush1.bf16.msra.mxu0 %v1130
          %1150 = vmatprep.subr.bf16.mxu0 0
          %1151 = vmatpush1.bf16.msra.mxu0 %v1131
          %1152 = vmatprep.subr.bf16.mxu0 0
          %1153 = vmatpush1.bf16.msra.mxu0 %v1132
          %1154 = vmatprep.subr.bf16.mxu0 0
          %1155 = vmatpush1.bf16.msra.mxu0 %v1133
          %1156 = vmatprep.subr.bf16.mxu0 0
          %1157 = vmatpush1.bf16.msra.mxu0 %v1134
          %1158 = vmatprep.subr.bf16.mxu0 0
          %1159 = vmatpush1.bf16.msra.mxu0 %v1135
          %1160 = vmatprep.subr.bf16.mxu0 0
          %1161 = vmatpush1.bf16.msra.mxu0 0
          %1162 = vmatprep.subr.bf16.mxu0 0
          %1163 = vmatpush1.bf16.msra.mxu0 0
          %1164 = vmatprep.subr.bf16.mxu0 0
          %1165 = vmatpush1.bf16.msra.mxu0 0
          %1166 = vmatprep.subr.bf16.mxu0 0
          %1167 = vmatpush1.bf16.msra.mxu0 0
          %1168 = vmatprep.subr.bf16.mxu0 0
          %1169 = vmatpush1.bf16.msra.mxu0 0
          %1170 = vmatprep.subr.bf16.mxu0 0
          %1171 = vmatpush1.bf16.msra.mxu0 0
          %1172 = vmatprep.subr.bf16.mxu0 0
          %1173 = vmatpush1.bf16.msra.mxu0 0
          %1174 = vmatprep.subr.bf16.mxu0 0
          %1175 = vmatpush1.bf16.msra.mxu0 0
          %1176 = vmatprep.mubr.bf16.mxu0 0
          %1177 = vmatmul.mubr.bf16.gmra.mrb[0].mxu0 %v1088
          %v1178 = vpop.f32.mrb[0].mxu0
          %v1179 = vadd.f32 0.0, %v1178
          %v1180 = vpop.f32.mrb[0].mxu0
          %v1181 = vpop.f32.mrb[0].mxu0
          %v1182 = vadd.f32 0.0, %v1181
          %v1183 = vpop.f32.mrb[0].mxu0
          %1184 = vmatprep.mubr.bf16.mxu0 0
          %1185 = vmatmul.mubr.bf16.gmra.mrb[0].mxu0 %v1089
          %v1186 = vpop.f32.mrb[0].mxu0
          %v1187 = vadd.f32 0.0, %v1186
          %v1188 = vpop.f32.mrb[0].mxu0
          %v1189 = vpop.f32.mrb[0].mxu0
          %v1190 = vadd.f32 0.0, %v1189
          %v1191 = vpop.f32.mrb[0].mxu0
          %1192 = vmatprep.mubr.bf16.mxu0 0
          %1193 = vmatmul.mubr.bf16.gmra.mrb[0].mxu0 %v1090
          %v1194 = vpop.f32.mrb[0].mxu0
          %v1195 = vadd.f32 0.0, %v1194
          %v1196 = vpop.f32.mrb[0].mxu0
          %v1197 = vpop.f32.mrb[0].mxu0
          %v1198 = vadd.f32 0.0, %v1197
          %v1199 = vpop.f32.mrb[0].mxu0
          %1200 = vmatprep.mubr.bf16.mxu0 0
          %1201 = vmatmul.mubr.bf16.gmra.mrb[0].mxu0 %v1091
          %v1202 = vpop.f32.mrb[0].mxu0
          %v1203 = vadd.f32 0.0, %v1202
          %v1204 = vpop.f32.mrb[0].mxu0
          %v1205 = vpop.f32.mrb[0].mxu0
          %v1206 = vadd.f32 0.0, %v1205
          %v1207 = vpop.f32.mrb[0].mxu0
          %1208 = vmatprep.mubr.bf16.mxu0 0
          %1209 = vmatmul.mubr.bf16.gmra.mrb[0].mxu0 %v1092
          %v1210 = vpop.f32.mrb[0].mxu0
          %v1211 = vadd.f32 0.0, %v1210
          %v1212 = vpop.f32.mrb[0].mxu0
          %v1213 = vpop.f32.mrb[0].mxu0
          %v1214 = vadd.f32 0.0, %v1213
          %v1215 = vpop.f32.mrb[0].mxu0
          %1216 = vmatprep.mubr.bf16.mxu0 0
          %1217 = vmatmul.mubr.bf16.gmra.mrb[0].mxu0 %v1093
          %v1218 = vpop.f32.mrb[0].mxu0
          %v1219 = vadd.f32 0.0, %v1218
          %v1220 = vpop.f32.mrb[0].mxu0
          %v1221 = vpop.f32.mrb[0].mxu0
          %v1222 = vadd.f32 0.0, %v1221
          %v1223 = vpop.f32.mrb[0].mxu0
          %1224 = vmatprep.mubr.bf16.mxu0 0
          %1225 = vmatmul.mubr.bf16.gmra.mrb[0].mxu0 %v1094
          %v1226 = vpop.f32.mrb[0].mxu0
          %v1227 = vadd.f32 0.0, %v1226
          %v1228 = vpop.f32.mrb[0].mxu0
          %v1229 = vpop.f32.mrb[0].mxu0
          %v1230 = vadd.f32 0.0, %v1229
          %v1231 = vpop.f32.mrb[0].mxu0
          %1232 = vmatprep.mubr.bf16.mxu0 0
          %1233 = vmatmul.mubr.bf16.gmra.mrb[0].mxu0 %v1095
          %v1234 = vpop.f32.mrb[0].mxu0
          %v1235 = vadd.f32 0.0, %v1234
          %v1236 = vpop.f32.mrb[0].mxu0
          %v1237 = vpop.f32.mrb[0].mxu0
          %v1238 = vadd.f32 0.0, %v1237
          %v1239 = vpop.f32.mrb[0].mxu0
          %1240 = vdwg.mxu0
          %v1241 = vadd.f32 %v1072, %v1179
          %v1242 = vadd.f32 %v1073, %v1182
          %v1243 = vadd.f32 %v1074, %v1187
          %v1244 = vadd.f32 %v1075, %v1190
          %v1245 = vadd.f32 %v1076, %v1195
          %v1246 = vadd.f32 %v1077, %v1198
          %v1247 = vadd.f32 %v1078, %v1203
          %v1248 = vadd.f32 %v1079, %v1206
          %v1249 = vadd.f32 %v1080, %v1211
          %v1250 = vadd.f32 %v1081, %v1214
          %v1251 = vadd.f32 %v1082, %v1219
          %v1252 = vadd.f32 %v1083, %v1222
          %v1253 = vadd.f32 %v1084, %v1227
          %v1254 = vadd.f32 %v1085, %v1230
          %v1255 = vadd.f32 %v1086, %v1235
          %v1256 = vadd.f32 %v1087, %v1238
          %1257 = vst [vmem:[#allocation4] sm:$0xff] %v1241
          %1258 = vst [vmem:[#allocation4 + $0x8] sm:$0xff] %v1242
          %1259 = vst [vmem:[#allocation4 + $0x10] sm:$0xff] %v1243
          %1260 = vst [vmem:[#allocation4 + $0x18] sm:$0xff] %v1244
          %1261 = vst [vmem:[#allocation4 + $0x20] sm:$0xff] %v1245
          %1262 = vst [vmem:[#allocation4 + $0x28] sm:$0xff] %v1246
          %1263 = vst [vmem:[#allocation4 + $0x30] sm:$0xff] %v1247
          %1264 = vst [vmem:[#allocation4 + $0x38] sm:$0xff] %v1248
          %1265 = vst [vmem:[#allocation4 + $0x40] sm:$0xff] %v1249
          %1266 = vst [vmem:[#allocation4 + $0x48] sm:$0xff] %v1250
          %1267 = vst [vmem:[#allocation4 + $0x50] sm:$0xff] %v1251
          %1268 = vst [vmem:[#allocation4 + $0x58] sm:$0xff] %v1252
          %1269 = vst [vmem:[#allocation4 + $0x60] sm:$0xff] %v1253
          %1270 = vst [vmem:[#allocation4 + $0x68] sm:$0xff] %v1254
          %1271 = vst [vmem:[#allocation4 + $0x70] sm:$0xff] %v1255
          %1272 = vst [vmem:[#allocation4 + $0x78] sm:$0xff] %v1256
          %1273 = vst.msk [vmem:[#allocation2] sm:$0xff] %vm959, %v687
          %1274 = vst.msk [vmem:[#allocation2 + $0x8] sm:$0xff] %vm959, %v688
          %1275 = vst.msk [vmem:[#allocation2 + $0x10] sm:$0xff] %vm959, %v689
          %1276 = vst.msk [vmem:[#allocation2 + $0x18] sm:$0xff] %vm959, %v690
          %1277 = vst.msk [vmem:[#allocation2 + $0x20] sm:$0xff] %vm959, %v691
          %1278 = vst.msk [vmem:[#allocation2 + $0x28] sm:$0xff] %vm959, %v692
          %1279 = vst.msk [vmem:[#allocation2 + $0x30] sm:$0xff] %vm959, %v693
          %1280 = vst.msk [vmem:[#allocation2 + $0x38] sm:$0xff] %vm959, %v694
          %1281 = vst.msk [vmem:[#allocation2 + $0x40] sm:$0xff] %vm959, %v695
          %1282 = vst.msk [vmem:[#allocation2 + $0x48] sm:$0xff] %vm959, %v696
          %1283 = vst.msk [vmem:[#allocation2 + $0x50] sm:$0xff] %vm959, %v697
          %1284 = vst.msk [vmem:[#allocation2 + $0x58] sm:$0xff] %vm959, %v698
          %1285 = vst.msk [vmem:[#allocation2 + $0x60] sm:$0xff] %vm959, %v699
          %1286 = vst.msk [vmem:[#allocation2 + $0x68] sm:$0xff] %vm959, %v700
          %1287 = vst.msk [vmem:[#allocation2 + $0x70] sm:$0xff] %vm959, %v701
          %1288 = vst.msk [vmem:[#allocation2 + $0x78] sm:$0xff] %vm959, %v702
        $region52: #{causal_self_attention.4} parent=31 // pred_fallthru
          _
        %p1289 = scmp.eq.s32.totalorder %s32, %s31
        // Predicated region
        $region53: #{causal_self_attention.4} parent=31 // pred_check
          %p1290 = pneg %p1289
        $region54: #{causal_self_attention.4} parent=31 // pred_check_branch
          %1292 = sbr.rel (%p1290) target = $region56
        $region55: #{causal_self_attention.4} parent=31 // pred_region
          %v1293 = vld [vmem:[%s269] sm:$0xf]
          %v1294 = vld [vmem:[%s269 + $0x4] sm:$0xf]
          %v1295 = vld [vmem:[%s269 + $0x8] sm:$0xf]
          %v1296 = vld [vmem:[%s269 + $0xc] sm:$0xf]
          %v1297 = vld [vmem:[%s269 + $0x10] sm:$0xf]
          %v1298 = vld [vmem:[%s269 + $0x14] sm:$0xf]
          %v1299 = vld [vmem:[%s269 + $0x18] sm:$0xf]
          %v1300 = vld [vmem:[%s269 + $0x1c] sm:$0xf]
          %v1301 = vld [vmem:[%s269 + $0x20] sm:$0xf]
          %v1302 = vld [vmem:[%s269 + $0x24] sm:$0xf]
          %v1303 = vld [vmem:[%s269 + $0x28] sm:$0xf]
          %v1304 = vld [vmem:[%s269 + $0x2c] sm:$0xf]
          %v1305 = vld [vmem:[%s269 + $0x30] sm:$0xf]
          %v1306 = vld [vmem:[%s269 + $0x34] sm:$0xf]
          %v1307 = vld [vmem:[%s269 + $0x38] sm:$0xf]
          %v1308 = vld [vmem:[%s269 + $0x3c] sm:$0xf]
          %v1309 = vld [vmem:[%s278] sm:$0xf]
          %v1310 = vld [vmem:[%s278 + $0x4] sm:$0xf]
          %v1311 = vld [vmem:[%s278 + $0x8] sm:$0xf]
          %v1312 = vld [vmem:[%s278 + $0xc] sm:$0xf]
          %v1313 = vld [vmem:[%s278 + $0x10] sm:$0xf]
          %v1314 = vld [vmem:[%s278 + $0x14] sm:$0xf]
          %v1315 = vld [vmem:[%s278 + $0x18] sm:$0xf]
          %v1316 = vld [vmem:[%s278 + $0x1c] sm:$0xf]
          %v1317 = vld [vmem:[%s278 + $0x20] sm:$0xf]
          %v1318 = vld [vmem:[%s278 + $0x24] sm:$0xf]
          %v1319 = vld [vmem:[%s278 + $0x28] sm:$0xf]
          %v1320 = vld [vmem:[%s278 + $0x2c] sm:$0xf]
          %v1321 = vld [vmem:[%s278 + $0x30] sm:$0xf]
          %v1322 = vld [vmem:[%s278 + $0x34] sm:$0xf]
          %v1323 = vld [vmem:[%s278 + $0x38] sm:$0xf]
          %v1324 = vld [vmem:[%s278 + $0x3c] sm:$0xf]
          %v1325 = vld [vmem:[%s287] sm:$0xf]
          %v1326 = vld [vmem:[%s287 + $0x4] sm:$0xf]
          %v1327 = vld [vmem:[%s287 + $0x8] sm:$0xf]
          %v1328 = vld [vmem:[%s287 + $0xc] sm:$0xf]
          %v1329 = vld [vmem:[%s287 + $0x10] sm:$0xf]
          %v1330 = vld [vmem:[%s287 + $0x14] sm:$0xf]
          %v1331 = vld [vmem:[%s287 + $0x18] sm:$0xf]
          %v1332 = vld [vmem:[%s287 + $0x1c] sm:$0xf]
          %v1333 = vld [vmem:[%s287 + $0x20] sm:$0xf]
          %v1334 = vld [vmem:[%s287 + $0x24] sm:$0xf]
          %v1335 = vld [vmem:[%s287 + $0x28] sm:$0xf]
          %v1336 = vld [vmem:[%s287 + $0x2c] sm:$0xf]
          %v1337 = vld [vmem:[%s287 + $0x30] sm:$0xf]
          %v1338 = vld [vmem:[%s287 + $0x34] sm:$0xf]
          %v1339 = vld [vmem:[%s287 + $0x38] sm:$0xf]
          %v1340 = vld [vmem:[%s287 + $0x3c] sm:$0xf]
          %v1357 = vunpack.c.l.b16 %v1293
          %v1358 = vunpack.c.l.b16 %v1294
          %v1359 = vunpack.c.l.b16 %v1295
          %v1360 = vunpack.c.l.b16 %v1296
          %v1361 = vunpack.c.l.b16 %v1297
          %v1362 = vunpack.c.l.b16 %v1298
          %v1363 = vunpack.c.l.b16 %v1299
          %v1364 = vunpack.c.l.b16 %v1300
          %v1365 = vunpack.c.l.b16 %v1301
          %v1366 = vunpack.c.l.b16 %v1302
          %v1367 = vunpack.c.l.b16 %v1303
          %v1368 = vunpack.c.l.b16 %v1304
          %v1369 = vunpack.c.l.b16 %v1305
          %v1370 = vunpack.c.l.b16 %v1306
          %v1371 = vunpack.c.l.b16 %v1307
          %v1372 = vunpack.c.l.b16 %v1308
          %v1373 = vpack.c.b16 %v1358, %v1357
          %v1374 = vpack.c.b16 %v1360, %v1359
          %v1375 = vpack.c.b16 %v1362, %v1361
          %v1376 = vpack.c.b16 %v1364, %v1363
          %v1377 = vpack.c.b16 %v1366, %v1365
          %v1378 = vpack.c.b16 %v1368, %v1367
          %v1379 = vpack.c.b16 %v1370, %v1369
          %v1380 = vpack.c.b16 %v1372, %v1371
          %v1405 = vunpack.c.l.b16 %v1309
          %v1406 = vunpack.c.l.b16 %v1310
          %v1407 = vunpack.c.l.b16 %v1311
          %v1408 = vunpack.c.l.b16 %v1312
          %v1409 = vunpack.c.l.b16 %v1313
          %v1410 = vunpack.c.l.b16 %v1314
          %v1411 = vunpack.c.l.b16 %v1315
          %v1412 = vunpack.c.l.b16 %v1316
          %v1413 = vunpack.c.l.b16 %v1317
          %v1414 = vunpack.c.l.b16 %v1318
          %v1415 = vunpack.c.l.b16 %v1319
          %v1416 = vunpack.c.l.b16 %v1320
          %v1417 = vunpack.c.l.b16 %v1321
          %v1418 = vunpack.c.l.b16 %v1322
          %v1419 = vunpack.c.l.b16 %v1323
          %v1420 = vunpack.c.l.b16 %v1324
          %v1421 = vpack.c.b16 %v1406, %v1405
          %v1422 = vpack.c.b16 %v1408, %v1407
          %v1423 = vpack.c.b16 %v1410, %v1409
          %v1424 = vpack.c.b16 %v1412, %v1411
          %v1425 = vpack.c.b16 %v1414, %v1413
          %v1426 = vpack.c.b16 %v1416, %v1415
          %v1427 = vpack.c.b16 %v1418, %v1417
          %v1428 = vpack.c.b16 %v1420, %v1419
          %1437 = vmatprep.subr.bf16.mxu0 0
          %1438 = vmatpush1.bf16.xpose.msra.mxu0 %v1421
          %1439 = vmatprep.subr.bf16.mxu0 0
          %1440 = vmatpush1.bf16.xpose.msra.mxu0 %v1422
          %1441 = vmatprep.subr.bf16.mxu0 0
          %1442 = vmatpush1.bf16.xpose.msra.mxu0 %v1423
          %1443 = vmatprep.subr.bf16.mxu0 0
          %1444 = vmatpush1.bf16.xpose.msra.mxu0 %v1424
          %1445 = vmatprep.subr.bf16.mxu0 0
          %1446 = vmatpush1.bf16.xpose.msra.mxu0 %v1425
          %1447 = vmatprep.subr.bf16.mxu0 0
          %1448 = vmatpush1.bf16.xpose.msra.mxu0 %v1426
          %1449 = vmatprep.subr.bf16.mxu0 0
          %1450 = vmatpush1.bf16.xpose.msra.mxu0 %v1427
          %1451 = vmatprep.subr.bf16.mxu0 0
          %1452 = vmatpush1.bf16.xpose.msra.mxu0 %v1428
          %1453 = vmatprep.subr.bf16.mxu0 0
          %1454 = vmatpush1.bf16.xpose.msra.mxu0 0
          %1455 = vmatprep.subr.bf16.mxu0 0
          %1456 = vmatpush1.bf16.xpose.msra.mxu0 0
          %1457 = vmatprep.subr.bf16.mxu0 0
          %1458 = vmatpush1.bf16.xpose.msra.mxu0 0
          %1459 = vmatprep.subr.bf16.mxu0 0
          %1460 = vmatpush1.bf16.xpose.msra.mxu0 0
          %1461 = vmatprep.subr.bf16.mxu0 0
          %1462 = vmatpush1.bf16.xpose.msra.mxu0 0
          %1463 = vmatprep.subr.bf16.mxu0 0
          %1464 = vmatpush1.bf16.xpose.msra.mxu0 0
          %1465 = vmatprep.subr.bf16.mxu0 0
          %1466 = vmatpush1.bf16.xpose.msra.mxu0 0
          %1467 = vmatprep.subr.bf16.mxu0 0
          %1468 = vmatpush1.bf16.xpose.msra.mxu0 0
          %1469 = vmatprep.mubr.bf16.mxu0 0
          %1470 = vmatmul.mubr.bf16.gmra.mrb[0].mxu0 %v1373
          %v1471 = vpop.f32.mrb[0].mxu0
          %v1472 = vadd.f32 0.0, %v1471
          %v1473 = vpop.f32.mrb[0].mxu0
          %v1474 = vpop.f32.mrb[0].mxu0
          %v1475 = vadd.f32 0.0, %v1474
          %v1476 = vpop.f32.mrb[0].mxu0
          %1477 = vmatprep.mubr.bf16.mxu0 0
          %1478 = vmatmul.mubr.bf16.gmra.mrb[0].mxu0 %v1374
          %v1479 = vpop.f32.mrb[0].mxu0
          %v1480 = vadd.f32 0.0, %v1479
          %v1481 = vpop.f32.mrb[0].mxu0
          %v1482 = vpop.f32.mrb[0].mxu0
          %v1483 = vadd.f32 0.0, %v1482
          %v1484 = vpop.f32.mrb[0].mxu0
          %1485 = vmatprep.mubr.bf16.mxu0 0
          %1486 = vmatmul.mubr.bf16.gmra.mrb[0].mxu0 %v1375
          %v1487 = vpop.f32.mrb[0].mxu0
          %v1488 = vadd.f32 0.0, %v1487
          %v1489 = vpop.f32.mrb[0].mxu0
          %v1490 = vpop.f32.mrb[0].mxu0
          %v1491 = vadd.f32 0.0, %v1490
          %v1492 = vpop.f32.mrb[0].mxu0
          %1493 = vmatprep.mubr.bf16.mxu0 0
          %1494 = vmatmul.mubr.bf16.gmra.mrb[0].mxu0 %v1376
          %v1495 = vpop.f32.mrb[0].mxu0
          %v1496 = vadd.f32 0.0, %v1495
          %v1497 = vpop.f32.mrb[0].mxu0
          %v1498 = vpop.f32.mrb[0].mxu0
          %v1499 = vadd.f32 0.0, %v1498
          %v1500 = vpop.f32.mrb[0].mxu0
          %1501 = vmatprep.mubr.bf16.mxu0 0
          %1502 = vmatmul.mubr.bf16.gmra.mrb[0].mxu0 %v1377
          %v1503 = vpop.f32.mrb[0].mxu0
          %v1504 = vadd.f32 0.0, %v1503
          %v1505 = vpop.f32.mrb[0].mxu0
          %v1506 = vpop.f32.mrb[0].mxu0
          %v1507 = vadd.f32 0.0, %v1506
          %v1508 = vpop.f32.mrb[0].mxu0
          %1509 = vmatprep.mubr.bf16.mxu0 0
          %1510 = vmatmul.mubr.bf16.gmra.mrb[0].mxu0 %v1378
          %v1511 = vpop.f32.mrb[0].mxu0
          %v1512 = vadd.f32 0.0, %v1511
          %v1513 = vpop.f32.mrb[0].mxu0
          %v1514 = vpop.f32.mrb[0].mxu0
          %v1515 = vadd.f32 0.0, %v1514
          %v1516 = vpop.f32.mrb[0].mxu0
          %1517 = vmatprep.mubr.bf16.mxu0 0
          %1518 = vmatmul.mubr.bf16.gmra.mrb[0].mxu0 %v1379
          %v1519 = vpop.f32.mrb[0].mxu0
          %v1520 = vadd.f32 0.0, %v1519
          %v1521 = vpop.f32.mrb[0].mxu0
          %v1522 = vpop.f32.mrb[0].mxu0
          %v1523 = vadd.f32 0.0, %v1522
          %v1524 = vpop.f32.mrb[0].mxu0
          %1525 = vmatprep.mubr.bf16.mxu0 0
          %1526 = vmatmul.mubr.bf16.gmra.mrb[0].mxu0 %v1380
          %v1527 = vpop.f32.mrb[0].mxu0
          %v1528 = vadd.f32 0.0, %v1527
          %v1529 = vpop.f32.mrb[0].mxu0
          %v1530 = vpop.f32.mrb[0].mxu0
          %v1531 = vadd.f32 0.0, %v1530
          %v1532 = vpop.f32.mrb[0].mxu0
          %1533 = vdwg.mxu0
          %v1534 = vmul.f32 %v1472, 0.088388346
          %v1535 = vmul.f32 %v1475, 0.088388346
          %v1536 = vmul.f32 %v1480, 0.088388346
          %v1537 = vmul.f32 %v1483, 0.088388346
          %v1538 = vmul.f32 %v1488, 0.088388346
          %v1539 = vmul.f32 %v1491, 0.088388346
          %v1540 = vmul.f32 %v1496, 0.088388346
          %v1541 = vmul.f32 %v1499, 0.088388346
          %v1542 = vmul.f32 %v1504, 0.088388346
          %v1543 = vmul.f32 %v1507, 0.088388346
          %v1544 = vmul.f32 %v1512, 0.088388346
          %v1545 = vmul.f32 %v1515, 0.088388346
          %v1546 = vmul.f32 %v1520, 0.088388346
          %v1547 = vmul.f32 %v1523, 0.088388346
          %v1548 = vmul.f32 %v1528, 0.088388346
          %v1549 = vmul.f32 %v1531, 0.088388346
          %v1550 = vlaneseq
          %v1551 = vshrl.u32 %v1550, 7
          %v1552 = vadd.s32 %v1551, 8
          %v1553 = vadd.s32 %v1551, 16
          %v1554 = vadd.s32 %v1551, 24
          %v1555 = vadd.s32 %v1551, 32
          %v1556 = vadd.s32 %v1551, 40
          %v1557 = vadd.s32 %v1551, 48
          %v1558 = vadd.s32 %v1551, 56
          %v1559 = vadd.s32 %v1551, 64
          %v1560 = vadd.s32 %v1551, 72
          %v1561 = vadd.s32 %v1551, 80
          %v1562 = vadd.s32 %v1551, 88
          %v1563 = vadd.s32 %v1551, 96
          %v1564 = vadd.s32 %v1551, 104
          %v1565 = vadd.s32 %v1551, 112
          %v1566 = vadd.s32 %v1551, 120
          %v1567 = vlaneseq
          %v1568 = vand.u32 %v1567, 127
          %vm1569 = vcmp.le.s32.totalorder %v1568, %v1551
          %vm1570 = vcmp.le.s32.totalorder %v1568, %v1552
          %vm1571 = vcmp.le.s32.totalorder %v1568, %v1553
          %vm1572 = vcmp.le.s32.totalorder %v1568, %v1554
          %vm1573 = vcmp.le.s32.totalorder %v1568, %v1555
          %vm1574 = vcmp.le.s32.totalorder %v1568, %v1556
          %vm1575 = vcmp.le.s32.totalorder %v1568, %v1557
          %vm1576 = vcmp.le.s32.totalorder %v1568, %v1558
          %vm1577 = vcmp.le.s32.totalorder %v1568, %v1559
          %vm1578 = vcmp.le.s32.totalorder %v1568, %v1560
          %vm1579 = vcmp.le.s32.totalorder %v1568, %v1561
          %vm1580 = vcmp.le.s32.totalorder %v1568, %v1562
          %vm1581 = vcmp.le.s32.totalorder %v1568, %v1563
          %vm1582 = vcmp.le.s32.totalorder %v1568, %v1564
          %vm1583 = vcmp.le.s32.totalorder %v1568, %v1565
          %vm1584 = vcmp.le.s32.totalorder %v1568, %v1566
          %v1585 = vsel %vm1569, %v1534, -1e+30
          %v1586 = vsel %vm1570, %v1535, -1e+30
          %v1587 = vsel %vm1571, %v1536, -1e+30
          %v1588 = vsel %vm1572, %v1537, -1e+30
          %v1589 = vsel %vm1573, %v1538, -1e+30
          %v1590 = vsel %vm1574, %v1539, -1e+30
          %v1591 = vsel %vm1575, %v1540, -1e+30
          %v1592 = vsel %vm1576, %v1541, -1e+30
          %v1593 = vsel %vm1577, %v1542, -1e+30
          %v1594 = vsel %vm1578, %v1543, -1e+30
          %v1595 = vsel %vm1579, %v1544, -1e+30
          %v1596 = vsel %vm1580, %v1545, -1e+30
          %v1597 = vsel %vm1581, %v1546, -1e+30
          %v1598 = vsel %vm1582, %v1547, -1e+30
          %v1599 = vsel %vm1583, %v1548, -1e+30
          %v1600 = vsel %vm1584, %v1549, -1e+30
          %v1601 = vld [vmem:[#allocation2] sm:$0xff]
          %v1602 = vld [vmem:[#allocation2 + $0x8] sm:$0xff]
          %v1603 = vld [vmem:[#allocation2 + $0x10] sm:$0xff]
          %v1604 = vld [vmem:[#allocation2 + $0x18] sm:$0xff]
          %v1605 = vld [vmem:[#allocation2 + $0x20] sm:$0xff]
          %v1606 = vld [vmem:[#allocation2 + $0x28] sm:$0xff]
          %v1607 = vld [vmem:[#allocation2 + $0x30] sm:$0xff]
          %v1608 = vld [vmem:[#allocation2 + $0x38] sm:$0xff]
          %v1609 = vld [vmem:[#allocation2 + $0x40] sm:$0xff]
          %v1610 = vld [vmem:[#allocation2 + $0x48] sm:$0xff]
          %v1611 = vld [vmem:[#allocation2 + $0x50] sm:$0xff]
          %v1612 = vld [vmem:[#allocation2 + $0x58] sm:$0xff]
          %v1613 = vld [vmem:[#allocation2 + $0x60] sm:$0xff]
          %v1614 = vld [vmem:[#allocation2 + $0x68] sm:$0xff]
          %v1615 = vld [vmem:[#allocation2 + $0x70] sm:$0xff]
          %v1616 = vld [vmem:[#allocation2 + $0x78] sm:$0xff]
          %1617 = vmax.xlane.f32.xlu0 %v1585
          %v1618 = vpop.xlane.xlu0 %1617
          %1619 = vmax.xlane.f32.xlu0 %v1586
          %v1620 = vpop.xlane.xlu0 %1619
          %1621 = vmax.xlane.f32.xlu0 %v1587
          %v1622 = vpop.xlane.xlu0 %1621
          %1623 = vmax.xlane.f32.xlu0 %v1588
          %v1624 = vpop.xlane.xlu0 %1623
          %1625 = vmax.xlane.f32.xlu0 %v1589
          %v1626 = vpop.xlane.xlu0 %1625
          %1627 = vmax.xlane.f32.xlu0 %v1590
          %v1628 = vpop.xlane.xlu0 %1627
          %1629 = vmax.xlane.f32.xlu0 %v1591
          %v1630 = vpop.xlane.xlu0 %1629
          %1631 = vmax.xlane.f32.xlu0 %v1592
          %v1632 = vpop.xlane.xlu0 %1631
          %1633 = vmax.xlane.f32.xlu0 %v1593
          %v1634 = vpop.xlane.xlu0 %1633
          %1635 = vmax.xlane.f32.xlu0 %v1594
          %v1636 = vpop.xlane.xlu0 %1635
          %1637 = vmax.xlane.f32.xlu0 %v1595
          %v1638 = vpop.xlane.xlu0 %1637
          %1639 = vmax.xlane.f32.xlu0 %v1596
          %v1640 = vpop.xlane.xlu0 %1639
          %1641 = vmax.xlane.f32.xlu0 %v1597
          %v1642 = vpop.xlane.xlu0 %1641
          %1643 = vmax.xlane.f32.xlu0 %v1598
          %v1644 = vpop.xlane.xlu0 %1643
          %1645 = vmax.xlane.f32.xlu0 %v1599
          %v1646 = vpop.xlane.xlu0 %1645
          %1647 = vmax.xlane.f32.xlu0 %v1600
          %v1648 = vpop.xlane.xlu0 %1647
          %v1649 = vmax.f32 %v1601, %v1618
          %v1650 = vmax.f32 %v1602, %v1620
          %v1651 = vmax.f32 %v1603, %v1622
          %v1652 = vmax.f32 %v1604, %v1624
          %v1653 = vmax.f32 %v1605, %v1626
          %v1654 = vmax.f32 %v1606, %v1628
          %v1655 = vmax.f32 %v1607, %v1630
          %v1656 = vmax.f32 %v1608, %v1632
          %v1657 = vmax.f32 %v1609, %v1634
          %v1658 = vmax.f32 %v1610, %v1636
          %v1659 = vmax.f32 %v1611, %v1638
          %v1660 = vmax.f32 %v1612, %v1640
          %v1661 = vmax.f32 %v1613, %v1642
          %v1662 = vmax.f32 %v1614, %v1644
          %v1663 = vmax.f32 %v1615, %v1646
          %v1664 = vmax.f32 %v1616, %v1648
          %v1665 = vsub.f32 %v1601, %v1649
          %v1666 = vsub.f32 %v1602, %v1650
          %v1667 = vsub.f32 %v1603, %v1651
          %v1668 = vsub.f32 %v1604, %v1652
          %v1669 = vsub.f32 %v1605, %v1653
          %v1670 = vsub.f32 %v1606, %v1654
          %v1671 = vsub.f32 %v1607, %v1655
          %v1672 = vsub.f32 %v1608, %v1656
          %v1673 = vsub.f32 %v1609, %v1657
          %v1674 = vsub.f32 %v1610, %v1658
          %v1675 = vsub.f32 %v1611, %v1659
          %v1676 = vsub.f32 %v1612, %v1660
          %v1677 = vsub.f32 %v1613, %v1661
          %v1678 = vsub.f32 %v1614, %v1662
          %v1679 = vsub.f32 %v1615, %v1663
          %v1680 = vsub.f32 %v1616, %v1664
          %v1681 = vmul.f32 %v1665, 1.442695
          %v1682 = vpow.pop %v1681
          %v1683 = vmul.f32 %v1666, 1.442695
          %v1684 = vpow.pop %v1683
          %v1685 = vmul.f32 %v1667, 1.442695
          %v1686 = vpow.pop %v1685
          %v1687 = vmul.f32 %v1668, 1.442695
          %v1688 = vpow.pop %v1687
          %v1689 = vmul.f32 %v1669, 1.442695
          %v1690 = vpow.pop %v1689
          %v1691 = vmul.f32 %v1670, 1.442695
          %v1692 = vpow.pop %v1691
          %v1693 = vmul.f32 %v1671, 1.442695
          %v1694 = vpow.pop %v1693
          %v1695 = vmul.f32 %v1672, 1.442695
          %v1696 = vpow.pop %v1695
          %v1697 = vmul.f32 %v1673, 1.442695
          %v1698 = vpow.pop %v1697
          %v1699 = vmul.f32 %v1674, 1.442695
          %v1700 = vpow.pop %v1699
          %v1701 = vmul.f32 %v1675, 1.442695
          %v1702 = vpow.pop %v1701
          %v1703 = vmul.f32 %v1676, 1.442695
          %v1704 = vpow.pop %v1703
          %v1705 = vmul.f32 %v1677, 1.442695
          %v1706 = vpow.pop %v1705
          %v1707 = vmul.f32 %v1678, 1.442695
          %v1708 = vpow.pop %v1707
          %v1709 = vmul.f32 %v1679, 1.442695
          %v1710 = vpow.pop %v1709
          %v1711 = vmul.f32 %v1680, 1.442695
          %v1712 = vpow.pop %v1711
          %1714 = vset.pattern.permute.xlu0 0
          %1715 = vperm.xlu0 %1714, %v1649
          %v1716 = vpop.permute.xlu0 %1715
          %1719 = vset.pattern.permute.xlu0 0
          %1720 = vperm.xlu0 %1719, %v1650
          %v1721 = vpop.permute.xlu0 %1720
          %1724 = vset.pattern.permute.xlu0 0
          %1725 = vperm.xlu0 %1724, %v1651
          %v1726 = vpop.permute.xlu0 %1725
          %1729 = vset.pattern.permute.xlu0 0
          %1730 = vperm.xlu0 %1729, %v1652
          %v1731 = vpop.permute.xlu0 %1730
          %1734 = vset.pattern.permute.xlu0 0
          %1735 = vperm.xlu0 %1734, %v1653
          %v1736 = vpop.permute.xlu0 %1735
          %1739 = vset.pattern.permute.xlu0 0
          %1740 = vperm.xlu0 %1739, %v1654
          %v1741 = vpop.permute.xlu0 %1740
          %1744 = vset.pattern.permute.xlu0 0
          %1745 = vperm.xlu0 %1744, %v1655
          %v1746 = vpop.permute.xlu0 %1745
          %1749 = vset.pattern.permute.xlu0 0
          %1750 = vperm.xlu0 %1749, %v1656
          %v1751 = vpop.permute.xlu0 %1750
          %1754 = vset.pattern.permute.xlu0 0
          %1755 = vperm.xlu0 %1754, %v1657
          %v1756 = vpop.permute.xlu0 %1755
          %1759 = vset.pattern.permute.xlu0 0
          %1760 = vperm.xlu0 %1759, %v1658
          %v1761 = vpop.permute.xlu0 %1760
          %1764 = vset.pattern.permute.xlu0 0
          %1765 = vperm.xlu0 %1764, %v1659
          %v1766 = vpop.permute.xlu0 %1765
          %1769 = vset.pattern.permute.xlu0 0
          %1770 = vperm.xlu0 %1769, %v1660
          %v1771 = vpop.permute.xlu0 %1770
          %1774 = vset.pattern.permute.xlu0 0
          %1775 = vperm.xlu0 %1774, %v1661
          %v1776 = vpop.permute.xlu0 %1775
          %1779 = vset.pattern.permute.xlu0 0
          %1780 = vperm.xlu0 %1779, %v1662
          %v1781 = vpop.permute.xlu0 %1780
          %1784 = vset.pattern.permute.xlu0 0
          %1785 = vperm.xlu0 %1784, %v1663
          %v1786 = vpop.permute.xlu0 %1785
          %1789 = vset.pattern.permute.xlu0 0
          %1790 = vperm.xlu0 %1789, %v1664
          %v1791 = vpop.permute.xlu0 %1790
          %v1793 = vsub.f32 %v1585, %v1716
          %v1794 = vsub.f32 %v1586, %v1721
          %v1795 = vsub.f32 %v1587, %v1726
          %v1796 = vsub.f32 %v1588, %v1731
          %v1797 = vsub.f32 %v1589, %v1736
          %v1798 = vsub.f32 %v1590, %v1741
          %v1799 = vsub.f32 %v1591, %v1746
          %v1800 = vsub.f32 %v1592, %v1751
          %v1801 = vsub.f32 %v1593, %v1756
          %v1802 = vsub.f32 %v1594, %v1761
          %v1803 = vsub.f32 %v1595, %v1766
          %v1804 = vsub.f32 %v1596, %v1771
          %v1805 = vsub.f32 %v1597, %v1776
          %v1806 = vsub.f32 %v1598, %v1781
          %v1807 = vsub.f32 %v1599, %v1786
          %v1808 = vsub.f32 %v1600, %v1791
          %v1809 = vmul.f32 %v1793, 1.442695
          %v1810 = vpow.pop %v1809
          %v1811 = vmul.f32 %v1794, 1.442695
          %v1812 = vpow.pop %v1811
          %v1813 = vmul.f32 %v1795, 1.442695
          %v1814 = vpow.pop %v1813
          %v1815 = vmul.f32 %v1796, 1.442695
          %v1816 = vpow.pop %v1815
          %v1817 = vmul.f32 %v1797, 1.442695
          %v1818 = vpow.pop %v1817
          %v1819 = vmul.f32 %v1798, 1.442695
          %v1820 = vpow.pop %v1819
          %v1821 = vmul.f32 %v1799, 1.442695
          %v1822 = vpow.pop %v1821
          %v1823 = vmul.f32 %v1800, 1.442695
          %v1824 = vpow.pop %v1823
          %v1825 = vmul.f32 %v1801, 1.442695
          %v1826 = vpow.pop %v1825
          %v1827 = vmul.f32 %v1802, 1.442695
          %v1828 = vpow.pop %v1827
          %v1829 = vmul.f32 %v1803, 1.442695
          %v1830 = vpow.pop %v1829
          %v1831 = vmul.f32 %v1804, 1.442695
          %v1832 = vpow.pop %v1831
          %v1833 = vmul.f32 %v1805, 1.442695
          %v1834 = vpow.pop %v1833
          %v1835 = vmul.f32 %v1806, 1.442695
          %v1836 = vpow.pop %v1835
          %v1837 = vmul.f32 %v1807, 1.442695
          %v1838 = vpow.pop %v1837
          %v1839 = vmul.f32 %v1808, 1.442695
          %v1840 = vpow.pop %v1839
          %v1841 = vld [vmem:[#allocation3] sm:$0xff]
          %v1842 = vld [vmem:[#allocation3 + $0x8] sm:$0xff]
          %v1843 = vld [vmem:[#allocation3 + $0x10] sm:$0xff]
          %v1844 = vld [vmem:[#allocation3 + $0x18] sm:$0xff]
          %v1845 = vld [vmem:[#allocation3 + $0x20] sm:$0xff]
          %v1846 = vld [vmem:[#allocation3 + $0x28] sm:$0xff]
          %v1847 = vld [vmem:[#allocation3 + $0x30] sm:$0xff]
          %v1848 = vld [vmem:[#allocation3 + $0x38] sm:$0xff]
          %v1849 = vld [vmem:[#allocation3 + $0x40] sm:$0xff]
          %v1850 = vld [vmem:[#allocation3 + $0x48] sm:$0xff]
          %v1851 = vld [vmem:[#allocation3 + $0x50] sm:$0xff]
          %v1852 = vld [vmem:[#allocation3 + $0x58] sm:$0xff]
          %v1853 = vld [vmem:[#allocation3 + $0x60] sm:$0xff]
          %v1854 = vld [vmem:[#allocation3 + $0x68] sm:$0xff]
          %v1855 = vld [vmem:[#allocation3 + $0x70] sm:$0xff]
          %v1856 = vld [vmem:[#allocation3 + $0x78] sm:$0xff]
          %v1857 = vmul.f32 %v1682, %v1841
          %v1858 = vmul.f32 %v1684, %v1842
          %v1859 = vmul.f32 %v1686, %v1843
          %v1860 = vmul.f32 %v1688, %v1844
          %v1861 = vmul.f32 %v1690, %v1845
          %v1862 = vmul.f32 %v1692, %v1846
          %v1863 = vmul.f32 %v1694, %v1847
          %v1864 = vmul.f32 %v1696, %v1848
          %v1865 = vmul.f32 %v1698, %v1849
          %v1866 = vmul.f32 %v1700, %v1850
          %v1867 = vmul.f32 %v1702, %v1851
          %v1868 = vmul.f32 %v1704, %v1852
          %v1869 = vmul.f32 %v1706, %v1853
          %v1870 = vmul.f32 %v1708, %v1854
          %v1871 = vmul.f32 %v1710, %v1855
          %v1872 = vmul.f32 %v1712, %v1856
          %1873 = vadd.xlane.f32.xlu0 %v1810
          %v1874 = vpop.xlane.xlu0 %1873
          %1875 = vadd.xlane.f32.xlu0 %v1812
          %v1876 = vpop.xlane.xlu0 %1875
          %1877 = vadd.xlane.f32.xlu0 %v1814
          %v1878 = vpop.xlane.xlu0 %1877
          %1879 = vadd.xlane.f32.xlu0 %v1816
          %v1880 = vpop.xlane.xlu0 %1879
          %1881 = vadd.xlane.f32.xlu0 %v1818
          %v1882 = vpop.xlane.xlu0 %1881
          %1883 = vadd.xlane.f32.xlu0 %v1820
          %v1884 = vpop.xlane.xlu0 %1883
          %1885 = vadd.xlane.f32.xlu0 %v1822
          %v1886 = vpop.xlane.xlu0 %1885
          %1887 = vadd.xlane.f32.xlu0 %v1824
          %v1888 = vpop.xlane.xlu0 %1887
          %1889 = vadd.xlane.f32.xlu0 %v1826
          %v1890 = vpop.xlane.xlu0 %1889
          %1891 = vadd.xlane.f32.xlu0 %v1828
          %v1892 = vpop.xlane.xlu0 %1891
          %1893 = vadd.xlane.f32.xlu0 %v1830
          %v1894 = vpop.xlane.xlu0 %1893
          %1895 = vadd.xlane.f32.xlu0 %v1832
          %v1896 = vpop.xlane.xlu0 %1895
          %1897 = vadd.xlane.f32.xlu0 %v1834
          %v1898 = vpop.xlane.xlu0 %1897
          %1899 = vadd.xlane.f32.xlu0 %v1836
          %v1900 = vpop.xlane.xlu0 %1899
          %1901 = vadd.xlane.f32.xlu0 %v1838
          %v1902 = vpop.xlane.xlu0 %1901
          %1903 = vadd.xlane.f32.xlu0 %v1840
          %v1904 = vpop.xlane.xlu0 %1903
          %v1905 = vadd.f32 %v1857, %v1874
          %v1906 = vadd.f32 %v1858, %v1876
          %v1907 = vadd.f32 %v1859, %v1878
          %v1908 = vadd.f32 %v1860, %v1880
          %v1909 = vadd.f32 %v1861, %v1882
          %v1910 = vadd.f32 %v1862, %v1884
          %v1911 = vadd.f32 %v1863, %v1886
          %v1912 = vadd.f32 %v1864, %v1888
          %v1913 = vadd.f32 %v1865, %v1890
          %v1914 = vadd.f32 %v1866, %v1892
          %v1915 = vadd.f32 %v1867, %v1894
          %v1916 = vadd.f32 %v1868, %v1896
          %v1917 = vadd.f32 %v1869, %v1898
          %v1918 = vadd.f32 %v1870, %v1900
          %v1919 = vadd.f32 %v1871, %v1902
          %v1920 = vadd.f32 %v1872, %v1904
          %vm1921 = vcmask 7168
          %1922 = vst.msk [vmem:[#allocation3] sm:$0xff] %vm1921, %v1905
          %1923 = vst.msk [vmem:[#allocation3 + $0x8] sm:$0xff] %vm1921, %v1906
          %1924 = vst.msk [vmem:[#allocation3 + $0x10] sm:$0xff] %vm1921, %v1907
          %1925 = vst.msk [vmem:[#allocation3 + $0x18] sm:$0xff] %vm1921, %v1908
          %1926 = vst.msk [vmem:[#allocation3 + $0x20] sm:$0xff] %vm1921, %v1909
          %1927 = vst.msk [vmem:[#allocation3 + $0x28] sm:$0xff] %vm1921, %v1910
          %1928 = vst.msk [vmem:[#allocation3 + $0x30] sm:$0xff] %vm1921, %v1911
          %1929 = vst.msk [vmem:[#allocation3 + $0x38] sm:$0xff] %vm1921, %v1912
          %1930 = vst.msk [vmem:[#allocation3 + $0x40] sm:$0xff] %vm1921, %v1913
          %1931 = vst.msk [vmem:[#allocation3 + $0x48] sm:$0xff] %vm1921, %v1914
          %1932 = vst.msk [vmem:[#allocation3 + $0x50] sm:$0xff] %vm1921, %v1915
          %1933 = vst.msk [vmem:[#allocation3 + $0x58] sm:$0xff] %vm1921, %v1916
          %1934 = vst.msk [vmem:[#allocation3 + $0x60] sm:$0xff] %vm1921, %v1917
          %1935 = vst.msk [vmem:[#allocation3 + $0x68] sm:$0xff] %vm1921, %v1918
          %1936 = vst.msk [vmem:[#allocation3 + $0x70] sm:$0xff] %vm1921, %v1919
          %1937 = vst.msk [vmem:[#allocation3 + $0x78] sm:$0xff] %vm1921, %v1920
          %v1938 = vld [vmem:[#allocation4] sm:$0xff]
          %v1939 = vld [vmem:[#allocation4 + $0x8] sm:$0xff]
          %v1940 = vld [vmem:[#allocation4 + $0x10] sm:$0xff]
          %v1941 = vld [vmem:[#allocation4 + $0x18] sm:$0xff]
          %v1942 = vld [vmem:[#allocation4 + $0x20] sm:$0xff]
          %v1943 = vld [vmem:[#allocation4 + $0x28] sm:$0xff]
          %v1944 = vld [vmem:[#allocation4 + $0x30] sm:$0xff]
          %v1945 = vld [vmem:[#allocation4 + $0x38] sm:$0xff]
          %v1946 = vld [vmem:[#allocation4 + $0x40] sm:$0xff]
          %v1947 = vld [vmem:[#allocation4 + $0x48] sm:$0xff]
          %v1948 = vld [vmem:[#allocation4 + $0x50] sm:$0xff]
          %v1949 = vld [vmem:[#allocation4 + $0x58] sm:$0xff]
          %v1950 = vld [vmem:[#allocation4 + $0x60] sm:$0xff]
          %v1951 = vld [vmem:[#allocation4 + $0x68] sm:$0xff]
          %v1952 = vld [vmem:[#allocation4 + $0x70] sm:$0xff]
          %v1953 = vld [vmem:[#allocation4 + $0x78] sm:$0xff]
          %1955 = vset.pattern.permute.xlu0 0
          %1956 = vperm.xlu0 %1955, %v1682
          %v1957 = vpop.permute.xlu0 %1956
          %1960 = vset.pattern.permute.xlu0 0
          %1961 = vperm.xlu0 %1960, %v1684
          %v1962 = vpop.permute.xlu0 %1961
          %1965 = vset.pattern.permute.xlu0 0
          %1966 = vperm.xlu0 %1965, %v1686
          %v1967 = vpop.permute.xlu0 %1966
          %1970 = vset.pattern.permute.xlu0 0
          %1971 = vperm.xlu0 %1970, %v1688
          %v1972 = vpop.permute.xlu0 %1971
          %1975 = vset.pattern.permute.xlu0 0
          %1976 = vperm.xlu0 %1975, %v1690
          %v1977 = vpop.permute.xlu0 %1976
          %1980 = vset.pattern.permute.xlu0 0
          %1981 = vperm.xlu0 %1980, %v1692
          %v1982 = vpop.permute.xlu0 %1981
          %1985 = vset.pattern.permute.xlu0 0
          %1986 = vperm.xlu0 %1985, %v1694
          %v1987 = vpop.permute.xlu0 %1986
          %1990 = vset.pattern.permute.xlu0 0
          %1991 = vperm.xlu0 %1990, %v1696
          %v1992 = vpop.permute.xlu0 %1991
          %1995 = vset.pattern.permute.xlu0 0
          %1996 = vperm.xlu0 %1995, %v1698
          %v1997 = vpop.permute.xlu0 %1996
          %2000 = vset.pattern.permute.xlu0 0
          %2001 = vperm.xlu0 %2000, %v1700
          %v2002 = vpop.permute.xlu0 %2001
          %2005 = vset.pattern.permute.xlu0 0
          %2006 = vperm.xlu0 %2005, %v1702
          %v2007 = vpop.permute.xlu0 %2006
          %2010 = vset.pattern.permute.xlu0 0
          %2011 = vperm.xlu0 %2010, %v1704
          %v2012 = vpop.permute.xlu0 %2011
          %2015 = vset.pattern.permute.xlu0 0
          %2016 = vperm.xlu0 %2015, %v1706
          %v2017 = vpop.permute.xlu0 %2016
          %2020 = vset.pattern.permute.xlu0 0
          %2021 = vperm.xlu0 %2020, %v1708
          %v2022 = vpop.permute.xlu0 %2021
          %2025 = vset.pattern.permute.xlu0 0
          %2026 = vperm.xlu0 %2025, %v1710
          %v2027 = vpop.permute.xlu0 %2026
          %2030 = vset.pattern.permute.xlu0 0
          %2031 = vperm.xlu0 %2030, %v1712
          %v2032 = vpop.permute.xlu0 %2031
          %v2034 = vmul.f32 %v1957, %v1938
          %v2035 = vmul.f32 %v1962, %v1939
          %v2036 = vmul.f32 %v1967, %v1940
          %v2037 = vmul.f32 %v1972, %v1941
          %v2038 = vmul.f32 %v1977, %v1942
          %v2039 = vmul.f32 %v1982, %v1943
          %v2040 = vmul.f32 %v1987, %v1944
          %v2041 = vmul.f32 %v1992, %v1945
          %v2042 = vmul.f32 %v1997, %v1946
          %v2043 = vmul.f32 %v2002, %v1947
          %v2044 = vmul.f32 %v2007, %v1948
          %v2045 = vmul.f32 %v2012, %v1949
          %v2046 = vmul.f32 %v2017, %v1950
          %v2047 = vmul.f32 %v2022, %v1951
          %v2048 = vmul.f32 %v2027, %v1952
          %v2049 = vmul.f32 %v2032, %v1953
          %v2050 = vpack.c.bf16 %v1812, %v1810
          %v2051 = vpack.c.bf16 %v1816, %v1814
          %v2052 = vpack.c.bf16 %v1820, %v1818
          %v2053 = vpack.c.bf16 %v1824, %v1822
          %v2054 = vpack.c.bf16 %v1828, %v1826
          %v2055 = vpack.c.bf16 %v1832, %v1830
          %v2056 = vpack.c.bf16 %v1836, %v1834
          %v2057 = vpack.c.bf16 %v1840, %v1838
          %v2074 = vunpack.c.l.b16 %v1325
          %v2075 = vunpack.c.l.b16 %v1326
          %v2076 = vunpack.c.l.b16 %v1327
          %v2077 = vunpack.c.l.b16 %v1328
          %v2078 = vunpack.c.l.b16 %v1329
          %v2079 = vunpack.c.l.b16 %v1330
          %v2080 = vunpack.c.l.b16 %v1331
          %v2081 = vunpack.c.l.b16 %v1332
          %v2082 = vunpack.c.l.b16 %v1333
          %v2083 = vunpack.c.l.b16 %v1334
          %v2084 = vunpack.c.l.b16 %v1335
          %v2085 = vunpack.c.l.b16 %v1336
          %v2086 = vunpack.c.l.b16 %v1337
          %v2087 = vunpack.c.l.b16 %v1338
          %v2088 = vunpack.c.l.b16 %v1339
          %v2089 = vunpack.c.l.b16 %v1340
          %v2090 = vpack.c.b16 %v2075, %v2074
          %v2091 = vpack.c.b16 %v2077, %v2076
          %v2092 = vpack.c.b16 %v2079, %v2078
          %v2093 = vpack.c.b16 %v2081, %v2080
          %v2094 = vpack.c.b16 %v2083, %v2082
          %v2095 = vpack.c.b16 %v2085, %v2084
          %v2096 = vpack.c.b16 %v2087, %v2086
          %v2097 = vpack.c.b16 %v2089, %v2088
          %2106 = vmatprep.subr.bf16.mxu0 0
          %2107 = vmatpush1.bf16.msra.mxu0 %v2090
          %2108 = vmatprep.subr.bf16.mxu0 0
          %2109 = vmatpush1.bf16.msra.mxu0 %v2091
          %2110 = vmatprep.subr.bf16.mxu0 0
          %2111 = vmatpush1.bf16.msra.mxu0 %v2092
          %2112 = vmatprep.subr.bf16.mxu0 0
          %2113 = vmatpush1.bf16.msra.mxu0 %v2093
          %2114 = vmatprep.subr.bf16.mxu0 0
          %2115 = vmatpush1.bf16.msra.mxu0 %v2094
          %2116 = vmatprep.subr.bf16.mxu0 0
          %2117 = vmatpush1.bf16.msra.mxu0 %v2095
          %2118 = vmatprep.subr.bf16.mxu0 0
          %2119 = vmatpush1.bf16.msra.mxu0 %v2096
          %2120 = vmatprep.subr.bf16.mxu0 0
          %2121 = vmatpush1.bf16.msra.mxu0 %v2097
          %2122 = vmatprep.subr.bf16.mxu0 0
          %2123 = vmatpush1.bf16.msra.mxu0 0
          %2124 = vmatprep.subr.bf16.mxu0 0
          %2125 = vmatpush1.bf16.msra.mxu0 0
          %2126 = vmatprep.subr.bf16.mxu0 0
          %2127 = vmatpush1.bf16.msra.mxu0 0
          %2128 = vmatprep.subr.bf16.mxu0 0
          %2129 = vmatpush1.bf16.msra.mxu0 0
          %2130 = vmatprep.subr.bf16.mxu0 0
          %2131 = vmatpush1.bf16.msra.mxu0 0
          %2132 = vmatprep.subr.bf16.mxu0 0
          %2133 = vmatpush1.bf16.msra.mxu0 0
          %2134 = vmatprep.subr.bf16.mxu0 0
          %2135 = vmatpush1.bf16.msra.mxu0 0
          %2136 = vmatprep.subr.bf16.mxu0 0
          %2137 = vmatpush1.bf16.msra.mxu0 0
          %2138 = vmatprep.mubr.bf16.mxu0 0
          %2139 = vmatmul.mubr.bf16.gmra.mrb[0].mxu0 %v2050
          %v2140 = vpop.f32.mrb[0].mxu0
          %v2141 = vadd.f32 0.0, %v2140
          %v2142 = vpop.f32.mrb[0].mxu0
          %v2143 = vpop.f32.mrb[0].mxu0
          %v2144 = vadd.f32 0.0, %v2143
          %v2145 = vpop.f32.mrb[0].mxu0
          %2146 = vmatprep.mubr.bf16.mxu0 0
          %2147 = vmatmul.mubr.bf16.gmra.mrb[0].mxu0 %v2051
          %v2148 = vpop.f32.mrb[0].mxu0
          %v2149 = vadd.f32 0.0, %v2148
          %v2150 = vpop.f32.mrb[0].mxu0
          %v2151 = vpop.f32.mrb[0].mxu0
          %v2152 = vadd.f32 0.0, %v2151
          %v2153 = vpop.f32.mrb[0].mxu0
          %2154 = vmatprep.mubr.bf16.mxu0 0
          %2155 = vmatmul.mubr.bf16.gmra.mrb[0].mxu0 %v2052
          %v2156 = vpop.f32.mrb[0].mxu0
          %v2157 = vadd.f32 0.0, %v2156
          %v2158 = vpop.f32.mrb[0].mxu0
          %v2159 = vpop.f32.mrb[0].mxu0
          %v2160 = vadd.f32 0.0, %v2159
          %v2161 = vpop.f32.mrb[0].mxu0
          %2162 = vmatprep.mubr.bf16.mxu0 0
          %2163 = vmatmul.mubr.bf16.gmra.mrb[0].mxu0 %v2053
          %v2164 = vpop.f32.mrb[0].mxu0
          %v2165 = vadd.f32 0.0, %v2164
          %v2166 = vpop.f32.mrb[0].mxu0
          %v2167 = vpop.f32.mrb[0].mxu0
          %v2168 = vadd.f32 0.0, %v2167
          %v2169 = vpop.f32.mrb[0].mxu0
          %2170 = vmatprep.mubr.bf16.mxu0 0
          %2171 = vmatmul.mubr.bf16.gmra.mrb[0].mxu0 %v2054
          %v2172 = vpop.f32.mrb[0].mxu0
          %v2173 = vadd.f32 0.0, %v2172
          %v2174 = vpop.f32.mrb[0].mxu0
          %v2175 = vpop.f32.mrb[0].mxu0
          %v2176 = vadd.f32 0.0, %v2175
          %v2177 = vpop.f32.mrb[0].mxu0
          %2178 = vmatprep.mubr.bf16.mxu0 0
          %2179 = vmatmul.mubr.bf16.gmra.mrb[0].mxu0 %v2055
          %v2180 = vpop.f32.mrb[0].mxu0
          %v2181 = vadd.f32 0.0, %v2180
          %v2182 = vpop.f32.mrb[0].mxu0
          %v2183 = vpop.f32.mrb[0].mxu0
          %v2184 = vadd.f32 0.0, %v2183
          %v2185 = vpop.f32.mrb[0].mxu0
          %2186 = vmatprep.mubr.bf16.mxu0 0
          %2187 = vmatmul.mubr.bf16.gmra.mrb[0].mxu0 %v2056
          %v2188 = vpop.f32.mrb[0].mxu0
          %v2189 = vadd.f32 0.0, %v2188
          %v2190 = vpop.f32.mrb[0].mxu0
          %v2191 = vpop.f32.mrb[0].mxu0
          %v2192 = vadd.f32 0.0, %v2191
          %v2193 = vpop.f32.mrb[0].mxu0
          %2194 = vmatprep.mubr.bf16.mxu0 0
          %2195 = vmatmul.mubr.bf16.gmra.mrb[0].mxu0 %v2057
          %v2196 = vpop.f32.mrb[0].mxu0
          %v2197 = vadd.f32 0.0, %v2196
          %v2198 = vpop.f32.mrb[0].mxu0
          %v2199 = vpop.f32.mrb[0].mxu0
          %v2200 = vadd.f32 0.0, %v2199
          %v2201 = vpop.f32.mrb[0].mxu0
          %2202 = vdwg.mxu0
          %v2203 = vadd.f32 %v2034, %v2141
          %v2204 = vadd.f32 %v2035, %v2144
          %v2205 = vadd.f32 %v2036, %v2149
          %v2206 = vadd.f32 %v2037, %v2152
          %v2207 = vadd.f32 %v2038, %v2157
          %v2208 = vadd.f32 %v2039, %v2160
          %v2209 = vadd.f32 %v2040, %v2165
          %v2210 = vadd.f32 %v2041, %v2168
          %v2211 = vadd.f32 %v2042, %v2173
          %v2212 = vadd.f32 %v2043, %v2176
          %v2213 = vadd.f32 %v2044, %v2181
          %v2214 = vadd.f32 %v2045, %v2184
          %v2215 = vadd.f32 %v2046, %v2189
          %v2216 = vadd.f32 %v2047, %v2192
          %v2217 = vadd.f32 %v2048, %v2197
          %v2218 = vadd.f32 %v2049, %v2200
          %2219 = vst [vmem:[#allocation4] sm:$0xff] %v2203
          %2220 = vst [vmem:[#allocation4 + $0x8] sm:$0xff] %v2204
          %2221 = vst [vmem:[#allocation4 + $0x10] sm:$0xff] %v2205
          %2222 = vst [vmem:[#allocation4 + $0x18] sm:$0xff] %v2206
          %2223 = vst [vmem:[#allocation4 + $0x20] sm:$0xff] %v2207
          %2224 = vst [vmem:[#allocation4 + $0x28] sm:$0xff] %v2208
          %2225 = vst [vmem:[#allocation4 + $0x30] sm:$0xff] %v2209
          %2226 = vst [vmem:[#allocation4 + $0x38] sm:$0xff] %v2210
          %2227 = vst [vmem:[#allocation4 + $0x40] sm:$0xff] %v2211
          %2228 = vst [vmem:[#allocation4 + $0x48] sm:$0xff] %v2212
          %2229 = vst [vmem:[#allocation4 + $0x50] sm:$0xff] %v2213
          %2230 = vst [vmem:[#allocation4 + $0x58] sm:$0xff] %v2214
          %2231 = vst [vmem:[#allocation4 + $0x60] sm:$0xff] %v2215
          %2232 = vst [vmem:[#allocation4 + $0x68] sm:$0xff] %v2216
          %2233 = vst [vmem:[#allocation4 + $0x70] sm:$0xff] %v2217
          %2234 = vst [vmem:[#allocation4 + $0x78] sm:$0xff] %v2218
          %2235 = vst.msk [vmem:[#allocation2] sm:$0xff] %vm1921, %v1649
          %2236 = vst.msk [vmem:[#allocation2 + $0x8] sm:$0xff] %vm1921, %v1650
          %2237 = vst.msk [vmem:[#allocation2 + $0x10] sm:$0xff] %vm1921, %v1651
          %2238 = vst.msk [vmem:[#allocation2 + $0x18] sm:$0xff] %vm1921, %v1652
          %2239 = vst.msk [vmem:[#allocation2 + $0x20] sm:$0xff] %vm1921, %v1653
          %2240 = vst.msk [vmem:[#allocation2 + $0x28] sm:$0xff] %vm1921, %v1654
          %2241 = vst.msk [vmem:[#allocation2 + $0x30] sm:$0xff] %vm1921, %v1655
          %2242 = vst.msk [vmem:[#allocation2 + $0x38] sm:$0xff] %vm1921, %v1656
          %2243 = vst.msk [vmem:[#allocation2 + $0x40] sm:$0xff] %vm1921, %v1657
          %2244 = vst.msk [vmem:[#allocation2 + $0x48] sm:$0xff] %vm1921, %v1658
          %2245 = vst.msk [vmem:[#allocation2 + $0x50] sm:$0xff] %vm1921, %v1659
          %2246 = vst.msk [vmem:[#allocation2 + $0x58] sm:$0xff] %vm1921, %v1660
          %2247 = vst.msk [vmem:[#allocation2 + $0x60] sm:$0xff] %vm1921, %v1661
          %2248 = vst.msk [vmem:[#allocation2 + $0x68] sm:$0xff] %vm1921, %v1662
          %2249 = vst.msk [vmem:[#allocation2 + $0x70] sm:$0xff] %vm1921, %v1663
          %2250 = vst.msk [vmem:[#allocation2 + $0x78] sm:$0xff] %vm1921, %v1664
        $region56: #{causal_self_attention.4} parent=31 // pred_fallthru
          _
        %p2251 = scmp.eq.s32.totalorder %s32, 1
        // Predicated region
        $region57: #{causal_self_attention.4} parent=31 // pred_check
          %p2252 = pneg %p2251
        $region58: #{causal_self_attention.4} parent=31 // pred_check_branch
          %2254 = sbr.rel (%p2252) target = $region60
        $region59: #{causal_self_attention.4} parent=31 // pred_region
          %v2255 = vld [vmem:[#allocation3] sm:$0xff]
          %v2256 = vld [vmem:[#allocation3 + $0x8] sm:$0xff]
          %v2257 = vld [vmem:[#allocation3 + $0x10] sm:$0xff]
          %v2258 = vld [vmem:[#allocation3 + $0x18] sm:$0xff]
          %v2259 = vld [vmem:[#allocation3 + $0x20] sm:$0xff]
          %v2260 = vld [vmem:[#allocation3 + $0x28] sm:$0xff]
          %v2261 = vld [vmem:[#allocation3 + $0x30] sm:$0xff]
          %v2262 = vld [vmem:[#allocation3 + $0x38] sm:$0xff]
          %v2263 = vld [vmem:[#allocation3 + $0x40] sm:$0xff]
          %v2264 = vld [vmem:[#allocation3 + $0x48] sm:$0xff]
          %v2265 = vld [vmem:[#allocation3 + $0x50] sm:$0xff]
          %v2266 = vld [vmem:[#allocation3 + $0x58] sm:$0xff]
          %v2267 = vld [vmem:[#allocation3 + $0x60] sm:$0xff]
          %v2268 = vld [vmem:[#allocation3 + $0x68] sm:$0xff]
          %v2269 = vld [vmem:[#allocation3 + $0x70] sm:$0xff]
          %v2270 = vld [vmem:[#allocation3 + $0x78] sm:$0xff]
          %v2271 = vrcp.pop %v2255
          %v2272 = vrcp.pop %v2256
          %v2273 = vrcp.pop %v2257
          %v2274 = vrcp.pop %v2258
          %v2275 = vrcp.pop %v2259
          %v2276 = vrcp.pop %v2260
          %v2277 = vrcp.pop %v2261
          %v2278 = vrcp.pop %v2262
          %v2279 = vrcp.pop %v2263
          %v2280 = vrcp.pop %v2264
          %v2281 = vrcp.pop %v2265
          %v2282 = vrcp.pop %v2266
          %v2283 = vrcp.pop %v2267
          %v2284 = vrcp.pop %v2268
          %v2285 = vrcp.pop %v2269
          %v2286 = vrcp.pop %v2270
          %v2287 = vld [vmem:[#allocation4] sm:$0xff]
          %v2288 = vld [vmem:[#allocation4 + $0x8] sm:$0xff]
          %v2289 = vld [vmem:[#allocation4 + $0x10] sm:$0xff]
          %v2290 = vld [vmem:[#allocation4 + $0x18] sm:$0xff]
          %v2291 = vld [vmem:[#allocation4 + $0x20] sm:$0xff]
          %v2292 = vld [vmem:[#allocation4 + $0x28] sm:$0xff]
          %v2293 = vld [vmem:[#allocation4 + $0x30] sm:$0xff]
          %v2294 = vld [vmem:[#allocation4 + $0x38] sm:$0xff]
          %v2295 = vld [vmem:[#allocation4 + $0x40] sm:$0xff]
          %v2296 = vld [vmem:[#allocation4 + $0x48] sm:$0xff]
          %v2297 = vld [vmem:[#allocation4 + $0x50] sm:$0xff]
          %v2298 = vld [vmem:[#allocation4 + $0x58] sm:$0xff]
          %v2299 = vld [vmem:[#allocation4 + $0x60] sm:$0xff]
          %v2300 = vld [vmem:[#allocation4 + $0x68] sm:$0xff]
          %v2301 = vld [vmem:[#allocation4 + $0x70] sm:$0xff]
          %v2302 = vld [vmem:[#allocation4 + $0x78] sm:$0xff]
          %2304 = vset.pattern.permute.xlu0 0
          %2305 = vperm.xlu0 %2304, %v2271
          %v2306 = vpop.permute.xlu0 %2305
          %2309 = vset.pattern.permute.xlu0 0
          %2310 = vperm.xlu0 %2309, %v2272
          %v2311 = vpop.permute.xlu0 %2310
          %2314 = vset.pattern.permute.xlu0 0
          %2315 = vperm.xlu0 %2314, %v2273
          %v2316 = vpop.permute.xlu0 %2315
          %2319 = vset.pattern.permute.xlu0 0
          %2320 = vperm.xlu0 %2319, %v2274
          %v2321 = vpop.permute.xlu0 %2320
          %2324 = vset.pattern.permute.xlu0 0
          %2325 = vperm.xlu0 %2324, %v2275
          %v2326 = vpop.permute.xlu0 %2325
          %2329 = vset.pattern.permute.xlu0 0
          %2330 = vperm.xlu0 %2329, %v2276
          %v2331 = vpop.permute.xlu0 %2330
          %2334 = vset.pattern.permute.xlu0 0
          %2335 = vperm.xlu0 %2334, %v2277
          %v2336 = vpop.permute.xlu0 %2335
          %2339 = vset.pattern.permute.xlu0 0
          %2340 = vperm.xlu0 %2339, %v2278
          %v2341 = vpop.permute.xlu0 %2340
          %2344 = vset.pattern.permute.xlu0 0
          %2345 = vperm.xlu0 %2344, %v2279
          %v2346 = vpop.permute.xlu0 %2345
          %2349 = vset.pattern.permute.xlu0 0
          %2350 = vperm.xlu0 %2349, %v2280
          %v2351 = vpop.permute.xlu0 %2350
          %2354 = vset.pattern.permute.xlu0 0
          %2355 = vperm.xlu0 %2354, %v2281
          %v2356 = vpop.permute.xlu0 %2355
          %2359 = vset.pattern.permute.xlu0 0
          %2360 = vperm.xlu0 %2359, %v2282
          %v2361 = vpop.permute.xlu0 %2360
          %2364 = vset.pattern.permute.xlu0 0
          %2365 = vperm.xlu0 %2364, %v2283
          %v2366 = vpop.permute.xlu0 %2365
          %2369 = vset.pattern.permute.xlu0 0
          %2370 = vperm.xlu0 %2369, %v2284
          %v2371 = vpop.permute.xlu0 %2370
          %2374 = vset.pattern.permute.xlu0 0
          %2375 = vperm.xlu0 %2374, %v2285
          %v2376 = vpop.permute.xlu0 %2375
          %2379 = vset.pattern.permute.xlu0 0
          %2380 = vperm.xlu0 %2379, %v2286
          %v2381 = vpop.permute.xlu0 %2380
          %v2383 = vmul.f32 %v2287, %v2306
          %v2384 = vmul.f32 %v2288, %v2311
          %v2385 = vmul.f32 %v2289, %v2316
          %v2386 = vmul.f32 %v2290, %v2321
          %v2387 = vmul.f32 %v2291, %v2326
          %v2388 = vmul.f32 %v2292, %v2331
          %v2389 = vmul.f32 %v2293, %v2336
          %v2390 = vmul.f32 %v2294, %v2341
          %v2391 = vmul.f32 %v2295, %v2346
          %v2392 = vmul.f32 %v2296, %v2351
          %v2393 = vmul.f32 %v2297, %v2356
          %v2394 = vmul.f32 %v2298, %v2361
          %v2395 = vmul.f32 %v2299, %v2366
          %v2396 = vmul.f32 %v2300, %v2371
          %v2397 = vmul.f32 %v2301, %v2376
          %v2398 = vmul.f32 %v2302, %v2381
          %v2399 = vpack.c.bf16 %v2384, %v2383
          %v2400 = vpack.c.bf16 %v2386, %v2385
          %v2401 = vpack.c.bf16 %v2388, %v2387
          %v2402 = vpack.c.bf16 %v2390, %v2389
          %v2403 = vpack.c.bf16 %v2392, %v2391
          %v2404 = vpack.c.bf16 %v2394, %v2393
          %v2405 = vpack.c.bf16 %v2396, %v2395
          %v2406 = vpack.c.bf16 %v2398, %v2397
          %v2415 = vunpack.c.l.b16 %v2399
          %v2416 = vunpack.c.h.b16 %v2399
          %v2417 = vunpack.c.l.b16 %v2400
          %v2418 = vunpack.c.h.b16 %v2400
          %v2419 = vunpack.c.l.b16 %v2401
          %v2420 = vunpack.c.h.b16 %v2401
          %v2421 = vunpack.c.l.b16 %v2402
          %v2422 = vunpack.c.h.b16 %v2402
          %v2423 = vunpack.c.l.b16 %v2403
          %v2424 = vunpack.c.h.b16 %v2403
          %v2425 = vunpack.c.l.b16 %v2404
          %v2426 = vunpack.c.h.b16 %v2404
          %v2427 = vunpack.c.l.b16 %v2405
          %v2428 = vunpack.c.h.b16 %v2405
          %v2429 = vunpack.c.l.b16 %v2406
          %v2430 = vunpack.c.h.b16 %v2406
          %v2431 = vpack.c.b16 %v2415, %v2415
          %v2432 = vpack.c.b16 %v2416, %v2416
          %v2433 = vpack.c.b16 %v2417, %v2417
          %v2434 = vpack.c.b16 %v2418, %v2418
          %v2435 = vpack.c.b16 %v2419, %v2419
          %v2436 = vpack.c.b16 %v2420, %v2420
          %v2437 = vpack.c.b16 %v2421, %v2421
          %v2438 = vpack.c.b16 %v2422, %v2422
          %v2439 = vpack.c.b16 %v2423, %v2423
          %v2440 = vpack.c.b16 %v2424, %v2424
          %v2441 = vpack.c.b16 %v2425, %v2425
          %v2442 = vpack.c.b16 %v2426, %v2426
          %v2443 = vpack.c.b16 %v2427, %v2427
          %v2444 = vpack.c.b16 %v2428, %v2428
          %v2445 = vpack.c.b16 %v2429, %v2429
          %v2446 = vpack.c.b16 %v2430, %v2430
          %2463 = vst [vmem:[%s319] sm:$0xf] %v2431
          %2464 = vst [vmem:[%s319 + $0x4] sm:$0xf] %v2432
          %2465 = vst [vmem:[%s319 + $0x8] sm:$0xf] %v2433
          %2466 = vst [vmem:[%s319 + $0xc] sm:$0xf] %v2434
          %2467 = vst [vmem:[%s319 + $0x10] sm:$0xf] %v2435
          %2468 = vst [vmem:[%s319 + $0x14] sm:$0xf] %v2436
          %2469 = vst [vmem:[%s319 + $0x18] sm:$0xf] %v2437
          %2470 = vst [vmem:[%s319 + $0x1c] sm:$0xf] %v2438
          %2471 = vst [vmem:[%s319 + $0x20] sm:$0xf] %v2439
          %2472 = vst [vmem:[%s319 + $0x24] sm:$0xf] %v2440
          %2473 = vst [vmem:[%s319 + $0x28] sm:$0xf] %v2441
          %2474 = vst [vmem:[%s319 + $0x2c] sm:$0xf] %v2442
          %2475 = vst [vmem:[%s319 + $0x30] sm:$0xf] %v2443
          %2476 = vst [vmem:[%s319 + $0x34] sm:$0xf] %v2444
          %2477 = vst [vmem:[%s319 + $0x38] sm:$0xf] %v2445
          %2478 = vst [vmem:[%s319 + $0x3c] sm:$0xf] %v2446
        $region60: #{causal_self_attention.4} parent=31 // pred_fallthru
          _
        %s2479 = sand.u32 %s151, 1
        %s2480 = scalar_lea.sflag [#allocation7], %s2479
        %s2481 = sand.u32 %s151, 1
        %s2482 = smul.addr %s2481, 64
        %s2483 = scalar_lea.vmem [#allocation11], %s2482
        // Predicated region
        $region61: #{causal_self_attention.4} parent=31 // pred_check
          %p2484 = pneg %p161
        $region62: #{causal_self_attention.4} parent=31 // pred_check_branch
          %2486 = sbr.rel (%p2484) target = $region64
        $region63: #{causal_self_attention.4} parent=31 // pred_region
          %s2487 = smul.u32 16, %s31
          %s2489 = ssub.s32 1024, 1024
          %2490 = vsyncadd %s2480, %s2489
          %s2491 = smul.addr %s30, 32
          %s2492 = sadd.s32 %s2487, %s2491
          %s2493 = smul.addr %s29, 64
          %s2494 = sadd.s32 %s2492, %s2493
          %s2495 = smul.addr %s2494, 64
          %s2496 = scalar_lea.hbm %s3, %s2495
          %s2497 = sshll.u32 %s2483, 4
          %s2498 = int_to_ptr.vmem [resolvable:$true] %s2497
          %2503 = dma.vmem_to_hbm [thread:$0]  %s2498, 1024, %s2496, %s2480, 64, 64, 4
        $region64: #{causal_self_attention.4} parent=31 // pred_fallthru
          _
      $region32: #{causal_self_attention.4} parent=5 // pred_fallthru
        _
      %p2504 = scmp.le.s32.totalorder 2, %s18
      // Predicated region
      $region65: #{causal_self_attention.4} parent=5 // pred_check
        %p2505 = pneg %p2504
      $region66: #{causal_self_attention.4} parent=5 // pred_check_branch
        %2507 = sbr.rel (%p2505) target = $region68
      $region67: #{causal_self_attention.4} parent=5 // pred_region
        %s2508 = ssub.s32 %s18, 2
        // Predicated region
        $region69: #{causal_self_attention.4} parent=67 // pred_check
          %p2509 = pneg %p167
        $region70: #{causal_self_attention.4} parent=67 // pred_check_branch
          %2511 = sbr.rel (%p2509) target = $region72
        $region71: #{causal_self_attention.4} parent=67 // pred_region
          %s2512 = sand.u32 %s152, 1
          %s2513 = scalar_lea.sflag [#allocation7], %s2512
          %s2514 = sand.u32 %s152, 1
          %s2515 = smul.addr %s2514, 64
          %s2516 = scalar_lea.vmem [#allocation11], %s2515
          %2517 = dma.done %s2513, 1024
        $region72: #{causal_self_attention.4} parent=67 // pred_fallthru
          _
      $region68: #{causal_self_attention.4} parent=5 // pred_fallthru
        _
    $region6: #{causal_self_attention.4} parent=1 // loop_footer
      %s22 = sadd.s32 1, %s18
    $region7: #{causal_self_attention.4} parent=1 // loop_footer_branch
      %17 = sbr.rel target = $region3
    $region8: #{causal_self_attention.4} parent=1 // loop_exit
      _
    %2518 = vsyncpa [#allocation6], 1
    %s2519 = scalar_lea.sflag [#allocation6], 1
    %2520 = vsyncpa %s2519, 1
    %2521 = vsyncpa [#allocation9], 1
    %s2522 = scalar_lea.sflag [#allocation9], 1
    %2523 = vsyncpa %s2522, 1
    %2524 = vsyncpa [#allocation7], 1
    %s2525 = scalar_lea.sflag [#allocation7], 1
    %2526 = vsyncpa %s2525, 1

</llo_original>
